<compile_context>
chip_gen: v7x
topology: tpu7x:2x2x1
jax: 0.10.0
libtpu: 0.0.40
codegen_flags: <defaults>
</compile_context>

<pallas_src>
import jax
import jax.numpy as jnp
from jax import lax
from jax.experimental import pallas as pl
from jax.experimental.pallas import tpu as pltpu

BN_EPS = 1e-5
K = 7            # depthwise kernel size
PAD = K // 2     # = 3

# Depthwise-path dtype. f32 is exact and safe on all chips. On v6e/v7x (bf16 VPU) this
# can be flipped to jnp.bfloat16 to halve vld bytes in the 49-tap loop; keep f32 on v5e.
DW_DTYPE = jnp.float32


def _erf(x):
    # Abramowitz & Stegun 7.1.26, max abs error ~1.5e-7. Uses exp (EUP), an approximate
    # reciprocal (EUP vrcp), and VPU mul/add/select only.
    a1, a2, a3, a4, a5 = 0.254829592, -0.284496736, 1.421413741, -1.453152027, 1.061405429
    p = 0.3275911
    sgn = jnp.where(x >= 0.0, 1.0, -1.0)
    ax = jnp.abs(x)
    t = pl.reciprocal(1.0 + p * ax, approx=True)     # EUP slot, ~free next to the exp
    poly = ((((a5 * t + a4) * t + a3) * t + a2) * t + a1) * t
    return sgn * (1.0 - poly * jnp.exp(-ax * ax))


def _gelu_exact(x):
    # PyTorch nn.GELU default (erf formulation).
    return 0.5 * x * (1.0 + _erf(x * 0.7071067811865476))


def _convffn_kernel(x_ref, xup_ref, xdn_ref, w7_ref, w1_ref, b1_ref, w2_ref, b2_ref,
                    out_ref, xpad_ref):
    """One (batch, H-strip) tile of ConvFFN.

    x_ref   : (1, TH, W, C)  center strip (rows [t*TH, t*TH+TH))
    xup_ref : (1, TH, W, C)  strip above  (block max(t-1, 0))   -- only last 3 rows used
    xdn_ref : (1, TH, W, C)  strip below  (block min(t+1, NH-1)) -- only first 3 rows used
    w7_ref  : (49, C)        depthwise 7x7 taps with the BN scale folded in (f32)
    w1_ref  : (C, Hd)  bf16  fc1 weight (transposed)
    b1_ref  : (1, Hd)  f32   fc1 bias with the BN bias folded through fc1
    w2_ref  : (Hd, C)  bf16  fc2 weight (transposed)
    b2_ref  : (1, C)   f32   fc2 bias
    out_ref : (1, TH, W, C)
    xpad_ref: VMEM scratch (TH+6, W+6, C) -- zero-halo strip buffer
    """
    t = pl.program_id(1)
    nt = pl.num_programs(1)
    TH = out_ref.shape[1]
    W = out_ref.shape[2]
    C = out_ref.shape[3]

    # ---- assemble the (TH+6, W+6, C) zero-halo strip in VMEM ----
    # Only the 3-wide borders are (re)initialized each step (never the full scratch);
    # every element of the scratch is written every step, so no stale-data / megacore
    # per-core-scratch hazard.
    zcol = jnp.zeros((TH + 2 * PAD, PAD, C), xpad_ref.dtype)
    xpad_ref[:, 0:PAD, :] = zcol
    xpad_ref[:, PAD + W:PAD + W + PAD, :] = zcol
    xpad_ref[PAD:PAD + TH, PAD:PAD + W, :] = x_ref[0].astype(xpad_ref.dtype)

    @pl.when(t > 0)
    def _():
        xpad_ref[0:PAD, PAD:PAD + W, :] = xup_ref[0, TH - PAD:TH, :, :].astype(xpad_ref.dtype)

    @pl.when(t == 0)
    def _():
        xpad_ref[0:PAD, PAD:PAD + W, :] = jnp.zeros((PAD, W, C), xpad_ref.dtype)

    @pl.when(t < nt - 1)
    def _():
        xpad_ref[PAD + TH:PAD + TH + PAD, PAD:PAD + W, :] = (
            xdn_ref[0, 0:PAD, :, :].astype(xpad_ref.dtype))

    @pl.when(t == nt - 1)
    def _():
        xpad_ref[PAD + TH:PAD + TH + PAD, PAD:PAD + W, :] = (
            jnp.zeros((PAD, W, C), xpad_ref.dtype))

    # ---- depthwise 7x7 conv (BN scale already folded into the taps) ----
    xp = xpad_ref[...]
    w7 = w7_ref[...].astype(jnp.float32)
    # Hoist the 7 W-axis (sublane) shifts out of the 49-tap loop; the inner loop slices
    # only the leading (row) axis, and the (TH, W, C) strip accumulator stays in vregs.
    wshift = [xp[:, kw:kw + W, :].astype(jnp.float32) for kw in range(K)]
    acc = jnp.zeros((TH, W, C), jnp.float32)
    for kh in range(K):
        for kw in range(K):
            acc = acc + w7[kh * K + kw] * wshift[kw][kh:kh + TH, :, :]

    # ---- pointwise FFN on the MXU: bf16 operands, f32 accumulation ----
    # W is a multiple of 8, so the (TH, W, C) -> (TH*W, C) reshape is layout-free.
    y = acc.reshape(TH * W, C).astype(jnp.bfloat16)
    h = jnp.dot(y, w1_ref[...], preferred_element_type=jnp.float32) + b1_ref[0]
    h = _gelu_exact(h)
    o = jnp.dot(h.astype(jnp.bfloat16), w2_ref[...],
                preferred_element_type=jnp.float32) + b2_ref[0]
    out_ref[0] = o.reshape(TH, W, C).astype(out_ref.dtype)


def convffn_forward(x_nchw, p, *, tile_h=8):
    """ConvFFN forward. x_nchw: (B, C, H, W) float32 (PyTorch convention)."""
    B, C, H, W = x_nchw.shape
    Hd = p["w_fc1"].shape[0]

    # H-strip size: multiple-of-8 strips when H allows it, otherwise whole image.
    TH = tile_h if (H % tile_h == 0 and tile_h >= PAD) else H
    NH = H // TH
    assert TH >= PAD, "strip height must cover the 3-row halo"

    # NCHW -> NHWC (channels on the lane axis inside the kernel).
    x = jnp.transpose(x_nchw, (0, 2, 3, 1)).astype(DW_DTYPE)

    gamma, beta, mean, var = p["bn"]
    s = gamma / jnp.sqrt(var + BN_EPS)        # folded BN scale
    tbias = beta - mean * s                   # folded BN bias

    # Fold BN scale into the 49 depthwise taps -> (49, C), f32 (depthwise path stays exact).
    w7 = (p["w_dw"].reshape(C, K * K) * s[:, None]).T.astype(jnp.float32)
    # fc1/fc2 as matmul weights; BN bias pushed through fc1 into its bias (exact, in f32).
    w1 = p["w_fc1"].reshape(Hd, C).astype(jnp.float32)            # (Hd, C)
    b1 = (p["b_fc1"] + w1 @ tbias).astype(jnp.float32)            # (Hd,)
    w1_t = w1.T.astype(jnp.bfloat16)                              # (C, Hd)  bf16 MXU operand
    w2_t = p["w_fc2"].reshape(C, Hd).T.astype(jnp.bfloat16)       # (Hd, C)  bf16 MXU operand
    b2 = p["b_fc2"].astype(jnp.float32)                           # (C,)

    strip_spec = pl.BlockSpec((1, TH, W, C), lambda b, i: (b, i, 0, 0))
    up_spec = pl.BlockSpec((1, TH, W, C), lambda b, i: (b, jnp.maximum(i - 1, 0), 0, 0))
    dn_spec = pl.BlockSpec((1, TH, W, C), lambda b, i: (b, jnp.minimum(i + 1, NH - 1), 0, 0))

    flops = B * H * W * C * (2 * K * K + 4 * Hd)
    transcendentals = 2 * B * H * W * Hd                      # exp + approx-recip in erf
    bytes_accessed = int(3 * x.size * x.dtype.itemsize        # center + 2 halo reads
                         + B * H * W * C * 4                  # output
                         + w7.size * 4 + w1_t.size * 2 + w2_t.size * 2 + (Hd + C) * 4)

    out_nhwc = pl.pallas_call(
        _convffn_kernel,
        out_shape=jax.ShapeDtypeStruct((B, H, W, C), jnp.float32),
        grid_spec=pltpu.PrefetchScalarGridSpec(
            num_scalar_prefetch=0,
            grid=(B, NH),
            in_specs=[
                strip_spec,                                          # center strip
                up_spec,                                             # strip above (halo)
                dn_spec,                                             # strip below (halo)
                pl.BlockSpec((K * K, C), lambda b, i: (0, 0)),       # dw taps (resident)
                pl.BlockSpec((C, Hd), lambda b, i: (0, 0)),          # fc1 weight
                pl.BlockSpec((1, Hd), lambda b, i: (0, 0)),          # fc1 bias (+BN bias)
                pl.BlockSpec((Hd, C), lambda b, i: (0, 0)),          # fc2 weight
                pl.BlockSpec((1, C), lambda b, i: (0, 0)),           # fc2 bias
            ],
            out_specs=pl.BlockSpec((1, TH, W, C), lambda b, i: (b, i, 0, 0)),
            scratch_shapes=[pltpu.VMEM((TH + 2 * PAD, W + 2 * PAD, C), DW_DTYPE)],
        ),
        compiler_params=pltpu.CompilerParams(
            dimension_semantics=("parallel", "parallel"),
            # Per-step buffers are a few MiB even at production sizes; 32 MiB leaves
            # ample headroom on v5e (128 MiB phys) and on v7x (64 MiB phys).
            vmem_limit_bytes=32 * 1024 * 1024,
        ),
        cost_estimate=pl.CostEstimate(flops=int(flops),
                                      transcendentals=int(transcendentals),
                                      bytes_accessed=bytes_accessed),
    )(x, x, x, w7, w1_t, b1[None, :], w2_t, b2[None, :])

    return jnp.transpose(out_nhwc, (0, 3, 1, 2))              # NHWC -> NCHW


def init_params(key, dim, hidden_dim):
    """Deterministic synthetic parameters matching ConvFFN.__init__ shapes
    (out_channels = in_channels, as the module's fc1 wiring requires)."""
    ks = jax.random.split(key, 9)
    bn = (1.0 + 0.1 * jax.random.normal(ks[0], (dim,)),
          0.1 * jax.random.normal(ks[1], (dim,)),
          0.1 * jax.random.normal(ks[2], (dim,)),
          jnp.abs(jax.random.normal(ks[3], (dim,))) + 0.5)
    p = {
        "w_dw": 0.3 * jax.random.normal(ks[4], (dim, 1, K, K)),      # depthwise 7x7
        "bn": bn,                                                    # (gamma, beta, mean, var)
        "w_fc1": 0.3 * jax.random.normal(ks[5], (hidden_dim, dim, 1, 1)),
        "b_fc1": 0.1 * jax.random.normal(ks[6], (hidden_dim,)),
        "w_fc2": 0.3 * jax.random.normal(ks[7], (dim, hidden_dim, 1, 1)),
        "b_fc2": 0.1 * jax.random.normal(ks[8], (dim,)),
    }
    return jax.tree_util.tree_map(lambda a: jnp.asarray(a, jnp.float32), p)


def convffn_reference(x, p):
    """Pure-JAX reference (NCHW, PyTorch semantics, BN in eval mode, exact GELU, f32)."""
    C = x.shape[1]
    dn = ("NCHW", "OIHW", "NCHW")
    hp = lax.Precision.HIGHEST
    y = lax.conv_general_dilated(x, p["w_dw"], (1, 1), "SAME",
                                 dimension_numbers=dn, feature_group_count=C,
                                 precision=hp)
    gamma, beta, mean, var = (a[None, :, None, None] for a in p["bn"])
    y = (y - mean) / jnp.sqrt(var + BN_EPS) * gamma + beta
    h = lax.conv_general_dilated(y, p["w_fc1"], (1, 1), "SAME",
                                 dimension_numbers=dn, precision=hp)
    h = h + p["b_fc1"][None, :, None, None]
    h = jax.nn.gelu(h, approximate=False)
    o = lax.conv_general_dilated(h, p["w_fc2"], (1, 1), "SAME",
                                 dimension_numbers=dn, precision=hp)
    return o + p["b_fc2"][None, :, None, None]


if __name__ == "__main__":
    B, C, H, W = 2, 4, 16, 16
    HIDDEN = 32
    key = jax.random.PRNGKey(0)
    kx, kp = jax.random.split(key)
    x = jax.random.normal(kx, (B, C, H, W), dtype=jnp.float32)
    params = init_params(kp, C, HIDDEN)

    # TODO(synk): training-mode BatchNorm (batch statistics + running-stat updates) and
    # active Dropout have no clean single-kernel equivalent; BN uses eval-mode running
    # stats (folded) and Dropout(p=0.0) is the identity here.

    out = convffn_forward(x, params)
    out = jax.block_until_ready(out)

    ref = convffn_reference(x, params)
    assert out.shape == (B, C, H, W)
    err = float(jnp.max(jnp.abs(out - ref)))
    # Deliberate accuracy/speed trade: fc1/fc2 use bf16 MXU operands (f32 accumulation),
    # i.e. ~2^-9 relative rounding per operand accumulated across the two matmuls
    # (depthwise path and BN folds stay exact f32; erf approx ~1e-7, approx-recip ~1e-4).
    # A logic bug (halo / tap indexing / transposes) would show up as an O(1) error.
    assert jnp.allclose(out, ref, atol=5e-2, rtol=5e-2), err
    print("KERNEL_OK")
</pallas_src>

<mosaic_0001>
module attributes {stable_mosaic.version = 11 : i64} {
  func.func @_convffn_kernel(%arg0: i32, %arg1: i32, %arg2: memref<1x8x16x4xf32, #tpu.memory_space<vmem>>, %arg3: memref<1x8x16x4xf32, #tpu.memory_space<vmem>>, %arg4: memref<1x8x16x4xf32, #tpu.memory_space<vmem>>, %arg5: memref<49x4xf32, #tpu.memory_space<vmem>>, %arg6: memref<4x32xbf16, #tpu.memory_space<vmem>>, %arg7: memref<1x32xf32, #tpu.memory_space<vmem>>, %arg8: memref<32x4xbf16, #tpu.memory_space<vmem>>, %arg9: memref<1x4xf32, #tpu.memory_space<vmem>>, %arg10: memref<1x8x16x4xf32, #tpu.memory_space<vmem>>, %arg11: memref<14x22x4xf32, #tpu.memory_space<vmem>>) attributes {dimension_semantics = [#tpu.dimension_semantics<parallel>, #tpu.dimension_semantics<parallel>], iteration_bounds = array<i64: 2, 2>, scalar_prefetch = 0 : i64, scratch_operands = 1 : i64, tpu.core_type = #tpu.core_type<tc>, window_params = [{transform_indices = @transform_0, window_bounds = array<i64: 1, 8, 16, 4>}, {transform_indices = @transform_1, window_bounds = array<i64: 1, 8, 16, 4>}, {transform_indices = @transform_2, window_bounds = array<i64: 1, 8, 16, 4>}, {pipeline_mode = #tpu.pipeline_mode<synchronous>, transform_indices = @transform_3, window_bounds = array<i64: 49, 4>}, {pipeline_mode = #tpu.pipeline_mode<synchronous>, transform_indices = @transform_4, window_bounds = array<i64: 4, 32>}, {pipeline_mode = #tpu.pipeline_mode<synchronous>, transform_indices = @transform_5, window_bounds = array<i64: 1, 32>}, {pipeline_mode = #tpu.pipeline_mode<synchronous>, transform_indices = @transform_6, window_bounds = array<i64: 32, 4>}, {pipeline_mode = #tpu.pipeline_mode<synchronous>, transform_indices = @transform_7, window_bounds = array<i64: 1, 4>}, {transform_indices = @transform_8, window_bounds = array<i64: 1, 8, 16, 4>}]} {
    %cst = arith.constant 0.000000e+00 : f32
    %0 = vector.broadcast %cst : f32 to vector<14x3x4xf32>
    %c0 = arith.constant 0 : index
    %c0_0 = arith.constant 0 : index
    %c0_1 = arith.constant 0 : index
    %1 = vector.load %arg11[%c0, %c0_0, %c0_1] : memref<14x22x4xf32, #tpu.memory_space<vmem>>, vector<14x3x4xf32>
    tpu.vector_store %arg11[%c0, %c0_0, %c0_1], %0 {strides = array<i32>} : memref<14x22x4xf32, #tpu.memory_space<vmem>>, vector<14x3x4xf32>,
    %c0_2 = arith.constant 0 : index
    %c19 = arith.constant 19 : index
    %c0_3 = arith.constant 0 : index
    %2 = vector.load %arg11[%c0_2, %c19, %c0_3] : memref<14x22x4xf32, #tpu.memory_space<vmem>>, vector<14x3x4xf32>
    tpu.vector_store %arg11[%c0_2, %c19, %c0_3], %0 {strides = array<i32>} : memref<14x22x4xf32, #tpu.memory_space<vmem>>, vector<14x3x4xf32>,
    %c0_4 = arith.constant 0 : index
    %c0_5 = arith.constant 0 : index
    %c0_6 = arith.constant 0 : index
    %c0_7 = arith.constant 0 : index
    %3 = vector.load %arg2[%c0_4, %c0_5, %c0_6, %c0_7] : memref<1x8x16x4xf32, #tpu.memory_space<vmem>>, vector<1x8x16x4xf32>
    %4 = vector.shape_cast %3 : vector<1x8x16x4xf32> to vector<8x16x4xf32>
    %c3 = arith.constant 3 : index
    %c3_8 = arith.constant 3 : index
    %c0_9 = arith.constant 0 : index
    %5 = vector.load %arg11[%c3, %c3_8, %c0_9] : memref<14x22x4xf32, #tpu.memory_space<vmem>>, vector<8x16x4xf32>
    tpu.vector_store %arg11[%c3, %c3_8, %c0_9], %4 {strides = array<i32>} : memref<14x22x4xf32, #tpu.memory_space<vmem>>, vector<8x16x4xf32>,
    %c0_i32 = arith.constant 0 : i32
    %6 = arith.cmpi sgt, %arg1, %c0_i32 : i32
    %7 = arith.extui %6 : i1 to i32
    %c0_i32_10 = arith.constant 0 : i32
    %8 = arith.cmpi ne, %7, %c0_i32_10 : i32
    scf.if %8 {
      %c0_51 = arith.constant 0 : index
      %c5 = arith.constant 5 : index
      %c0_52 = arith.constant 0 : index
      %c0_53 = arith.constant 0 : index
      %432 = vector.load %arg3[%c0_51, %c5, %c0_52, %c0_53] : memref<1x8x16x4xf32, #tpu.memory_space<vmem>>, vector<1x3x16x4xf32>
      %433 = vector.shape_cast %432 : vector<1x3x16x4xf32> to vector<3x16x4xf32>
      %c0_54 = arith.constant 0 : index
      %c3_55 = arith.constant 3 : index
      %c0_56 = arith.constant 0 : index
      %434 = vector.load %arg11[%c0_54, %c3_55, %c0_56] : memref<14x22x4xf32, #tpu.memory_space<vmem>>, vector<3x16x4xf32>
      tpu.vector_store %arg11[%c0_54, %c3_55, %c0_56], %433 {strides = array<i32>} : memref<14x22x4xf32, #tpu.memory_space<vmem>>, vector<3x16x4xf32>,
    } else {
    }
    %c0_i32_11 = arith.constant 0 : i32
    %9 = arith.cmpi eq, %arg1, %c0_i32_11 : i32
    %10 = arith.extui %9 : i1 to i32
    %c0_i32_12 = arith.constant 0 : i32
    %11 = arith.cmpi ne, %10, %c0_i32_12 : i32
    scf.if %11 {
      %cst_51 = arith.constant 0.000000e+00 : f32
      %432 = vector.broadcast %cst_51 : f32 to vector<3x16x4xf32>
      %c0_52 = arith.constant 0 : index
      %c3_53 = arith.constant 3 : index
      %c0_54 = arith.constant 0 : index
      %433 = vector.load %arg11[%c0_52, %c3_53, %c0_54] : memref<14x22x4xf32, #tpu.memory_space<vmem>>, vector<3x16x4xf32>
      tpu.vector_store %arg11[%c0_52, %c3_53, %c0_54], %432 {strides = array<i32>} : memref<14x22x4xf32, #tpu.memory_space<vmem>>, vector<3x16x4xf32>,
    } else {
    }
    %c1_i32 = arith.constant 1 : i32
    %12 = arith.cmpi slt, %arg1, %c1_i32 : i32
    %13 = arith.extui %12 : i1 to i32
    %c0_i32_13 = arith.constant 0 : i32
    %14 = arith.cmpi ne, %13, %c0_i32_13 : i32
    scf.if %14 {
      %c0_51 = arith.constant 0 : index
      %c0_52 = arith.constant 0 : index
      %c0_53 = arith.constant 0 : index
      %c0_54 = arith.constant 0 : index
      %432 = vector.load %arg4[%c0_51, %c0_52, %c0_53, %c0_54] : memref<1x8x16x4xf32, #tpu.memory_space<vmem>>, vector<1x3x16x4xf32>
      %433 = vector.shape_cast %432 : vector<1x3x16x4xf32> to vector<3x16x4xf32>
      %c11 = arith.constant 11 : index
      %c3_55 = arith.constant 3 : index
      %c0_56 = arith.constant 0 : index
      %434 = vector.load %arg11[%c11, %c3_55, %c0_56] : memref<14x22x4xf32, #tpu.memory_space<vmem>>, vector<3x16x4xf32>
      tpu.vector_store %arg11[%c11, %c3_55, %c0_56], %433 {strides = array<i32>} : memref<14x22x4xf32, #tpu.memory_space<vmem>>, vector<3x16x4xf32>,
    } else {
    }
    %c1_i32_14 = arith.constant 1 : i32
    %15 = arith.cmpi eq, %arg1, %c1_i32_14 : i32
    %16 = arith.extui %15 : i1 to i32
    %c0_i32_15 = arith.constant 0 : i32
    %17 = arith.cmpi ne, %16, %c0_i32_15 : i32
    scf.if %17 {
      %cst_51 = arith.constant 0.000000e+00 : f32
      %432 = vector.broadcast %cst_51 : f32 to vector<3x16x4xf32>
      %c11 = arith.constant 11 : index
      %c3_52 = arith.constant 3 : index
      %c0_53 = arith.constant 0 : index
      %433 = vector.load %arg11[%c11, %c3_52, %c0_53] : memref<14x22x4xf32, #tpu.memory_space<vmem>>, vector<3x16x4xf32>
      tpu.vector_store %arg11[%c11, %c3_52, %c0_53], %432 {strides = array<i32>} : memref<14x22x4xf32, #tpu.memory_space<vmem>>, vector<3x16x4xf32>,
    } else {
    }
    %c0_16 = arith.constant 0 : index
    %c0_17 = arith.constant 0 : index
    %c0_18 = arith.constant 0 : index
    %18 = vector.load %arg11[%c0_16, %c0_17, %c0_18] : memref<14x22x4xf32, #tpu.memory_space<vmem>>, vector<14x22x4xf32>
    %c0_19 = arith.constant 0 : index
    %c0_20 = arith.constant 0 : index
    %19 = vector.load %arg5[%c0_19, %c0_20] : memref<49x4xf32, #tpu.memory_space<vmem>>, vector<49x4xf32>
    %20 = vector.extract_strided_slice %18 {offsets = [0, 0, 0], sizes = [14, 16, 4], strides = [1, 1, 1]} : vector<14x22x4xf32> to vector<14x16x4xf32>
    %21 = vector.extract_strided_slice %18 {offsets = [0, 1, 0], sizes = [14, 16, 4], strides = [1, 1, 1]} : vector<14x22x4xf32> to vector<14x16x4xf32>
    %22 = vector.extract_strided_slice %18 {offsets = [0, 2, 0], sizes = [14, 16, 4], strides = [1, 1, 1]} : vector<14x22x4xf32> to vector<14x16x4xf32>
    %23 = vector.extract_strided_slice %18 {offsets = [0, 3, 0], sizes = [14, 16, 4], strides = [1, 1, 1]} : vector<14x22x4xf32> to vector<14x16x4xf32>
    %24 = vector.extract_strided_slice %18 {offsets = [0, 4, 0], sizes = [14, 16, 4], strides = [1, 1, 1]} : vector<14x22x4xf32> to vector<14x16x4xf32>
    %25 = vector.extract_strided_slice %18 {offsets = [0, 5, 0], sizes = [14, 16, 4], strides = [1, 1, 1]} : vector<14x22x4xf32> to vector<14x16x4xf32>
    %26 = vector.extract_strided_slice %18 {offsets = [0, 6, 0], sizes = [14, 16, 4], strides = [1, 1, 1]} : vector<14x22x4xf32> to vector<14x16x4xf32>
    %cst_21 = arith.constant 0.000000e+00 : f32
    %27 = vector.broadcast %cst_21 : f32 to vector<8x16x4xf32>
    %28 = vector.extract_strided_slice %19 {offsets = [0, 0], sizes = [1, 4], strides = [1, 1]} : vector<49x4xf32> to vector<1x4xf32>
    %29 = vector.shape_cast %28 : vector<1x4xf32> to vector<4xf32>
    %30 = vector.extract_strided_slice %20 {offsets = [0, 0, 0], sizes = [8, 16, 4], strides = [1, 1, 1]} : vector<14x16x4xf32> to vector<8x16x4xf32>
    %31 = vector.shape_cast %29 : vector<4xf32> to vector<1x1x4xf32>
    %32 = vector.broadcast %31 : vector<1x1x4xf32> to vector<8x16x4xf32>
    %33 = arith.mulf %32, %30 : vector<8x16x4xf32>
    %34 = arith.addf %27, %33 : vector<8x16x4xf32>
    %35 = vector.extract_strided_slice %19 {offsets = [1, 0], sizes = [1, 4], strides = [1, 1]} : vector<49x4xf32> to vector<1x4xf32>
    %36 = vector.shape_cast %35 : vector<1x4xf32> to vector<4xf32>
    %37 = vector.extract_strided_slice %21 {offsets = [0, 0, 0], sizes = [8, 16, 4], strides = [1, 1, 1]} : vector<14x16x4xf32> to vector<8x16x4xf32>
    %38 = vector.shape_cast %36 : vector<4xf32> to vector<1x1x4xf32>
    %39 = vector.broadcast %38 : vector<1x1x4xf32> to vector<8x16x4xf32>
    %40 = arith.mulf %39, %37 : vector<8x16x4xf32>
    %41 = arith.addf %34, %40 : vector<8x16x4xf32>
    %42 = vector.extract_strided_slice %19 {offsets = [2, 0], sizes = [1, 4], strides = [1, 1]} : vector<49x4xf32> to vector<1x4xf32>
    %43 = vector.shape_cast %42 : vector<1x4xf32> to vector<4xf32>
    %44 = vector.extract_strided_slice %22 {offsets = [0, 0, 0], sizes = [8, 16, 4], strides = [1, 1, 1]} : vector<14x16x4xf32> to vector<8x16x4xf32>
    %45 = vector.shape_cast %43 : vector<4xf32> to vector<1x1x4xf32>
    %46 = vector.broadcast %45 : vector<1x1x4xf32> to vector<8x16x4xf32>
    %47 = arith.mulf %46, %44 : vector<8x16x4xf32>
    %48 = arith.addf %41, %47 : vector<8x16x4xf32>
    %49 = vector.extract_strided_slice %19 {offsets = [3, 0], sizes = [1, 4], strides = [1, 1]} : vector<49x4xf32> to vector<1x4xf32>
    %50 = vector.shape_cast %49 : vector<1x4xf32> to vector<4xf32>
    %51 = vector.extract_strided_slice %23 {offsets = [0, 0, 0], sizes = [8, 16, 4], strides = [1, 1, 1]} : vector<14x16x4xf32> to vector<8x16x4xf32>
    %52 = vector.shape_cast %50 : vector<4xf32> to vector<1x1x4xf32>
    %53 = vector.broadcast %52 : vector<1x1x4xf32> to vector<8x16x4xf32>
    %54 = arith.mulf %53, %51 : vector<8x16x4xf32>
    %55 = arith.addf %48, %54 : vector<8x16x4xf32>
    %56 = vector.extract_strided_slice %19 {offsets = [4, 0], sizes = [1, 4], strides = [1, 1]} : vector<49x4xf32> to vector<1x4xf32>
    %57 = vector.shape_cast %56 : vector<1x4xf32> to vector<4xf32>
    %58 = vector.extract_strided_slice %24 {offsets = [0, 0, 0], sizes = [8, 16, 4], strides = [1, 1, 1]} : vector<14x16x4xf32> to vector<8x16x4xf32>
    %59 = vector.shape_cast %57 : vector<4xf32> to vector<1x1x4xf32>
    %60 = vector.broadcast %59 : vector<1x1x4xf32> to vector<8x16x4xf32>
    %61 = arith.mulf %60, %58 : vector<8x16x4xf32>
    %62 = arith.addf %55, %61 : vector<8x16x4xf32>
    %63 = vector.extract_strided_slice %19 {offsets = [5, 0], sizes = [1, 4], strides = [1, 1]} : vector<49x4xf32> to vector<1x4xf32>
    %64 = vector.shape_cast %63 : vector<1x4xf32> to vector<4xf32>
    %65 = vector.extract_strided_slice %25 {offsets = [0, 0, 0], sizes = [8, 16, 4], strides = [1, 1, 1]} : vector<14x16x4xf32> to vector<8x16x4xf32>
    %66 = vector.shape_cast %64 : vector<4xf32> to vector<1x1x4xf32>
    %67 = vector.broadcast %66 : vector<1x1x4xf32> to vector<8x16x4xf32>
    %68 = arith.mulf %67, %65 : vector<8x16x4xf32>
    %69 = arith.addf %62, %68 : vector<8x16x4xf32>
    %70 = vector.extract_strided_slice %19 {offsets = [6, 0], sizes = [1, 4], strides = [1, 1]} : vector<49x4xf32> to vector<1x4xf32>
    %71 = vector.shape_cast %70 : vector<1x4xf32> to vector<4xf32>
    %72 = vector.extract_strided_slice %26 {offsets = [0, 0, 0], sizes = [8, 16, 4], strides = [1, 1, 1]} : vector<14x16x4xf32> to vector<8x16x4xf32>
    %73 = vector.shape_cast %71 : vector<4xf32> to vector<1x1x4xf32>
    %74 = vector.broadcast %73 : vector<1x1x4xf32> to vector<8x16x4xf32>
    %75 = arith.mulf %74, %72 : vector<8x16x4xf32>
    %76 = arith.addf %69, %75 : vector<8x16x4xf32>
    %77 = vector.extract_strided_slice %19 {offsets = [7, 0], sizes = [1, 4], strides = [1, 1]} : vector<49x4xf32> to vector<1x4xf32>
    %78 = vector.shape_cast %77 : vector<1x4xf32> to vector<4xf32>
    %79 = vector.extract_strided_slice %20 {offsets = [1, 0, 0], sizes = [8, 16, 4], strides = [1, 1, 1]} : vector<14x16x4xf32> to vector<8x16x4xf32>
    %80 = vector.shape_cast %78 : vector<4xf32> to vector<1x1x4xf32>
    %81 = vector.broadcast %80 : vector<1x1x4xf32> to vector<8x16x4xf32>
    %82 = arith.mulf %81, %79 : vector<8x16x4xf32>
    %83 = arith.addf %76, %82 : vector<8x16x4xf32>
    %84 = vector.extract_strided_slice %19 {offsets = [8, 0], sizes = [1, 4], strides = [1, 1]} : vector<49x4xf32> to vector<1x4xf32>
    %85 = vector.shape_cast %84 : vector<1x4xf32> to vector<4xf32>
    %86 = vector.extract_strided_slice %21 {offsets = [1, 0, 0], sizes = [8, 16, 4], strides = [1, 1, 1]} : vector<14x16x4xf32> to vector<8x16x4xf32>
    %87 = vector.shape_cast %85 : vector<4xf32> to vector<1x1x4xf32>
    %88 = vector.broadcast %87 : vector<1x1x4xf32> to vector<8x16x4xf32>
    %89 = arith.mulf %88, %86 : vector<8x16x4xf32>
    %90 = arith.addf %83, %89 : vector<8x16x4xf32>
    %91 = vector.extract_strided_slice %19 {offsets = [9, 0], sizes = [1, 4], strides = [1, 1]} : vector<49x4xf32> to vector<1x4xf32>
    %92 = vector.shape_cast %91 : vector<1x4xf32> to vector<4xf32>
    %93 = vector.extract_strided_slice %22 {offsets = [1, 0, 0], sizes = [8, 16, 4], strides = [1, 1, 1]} : vector<14x16x4xf32> to vector<8x16x4xf32>
    %94 = vector.shape_cast %92 : vector<4xf32> to vector<1x1x4xf32>
    %95 = vector.broadcast %94 : vector<1x1x4xf32> to vector<8x16x4xf32>
    %96 = arith.mulf %95, %93 : vector<8x16x4xf32>
    %97 = arith.addf %90, %96 : vector<8x16x4xf32>
    %98 = vector.extract_strided_slice %19 {offsets = [10, 0], sizes = [1, 4], strides = [1, 1]} : vector<49x4xf32> to vector<1x4xf32>
    %99 = vector.shape_cast %98 : vector<1x4xf32> to vector<4xf32>
    %100 = vector.extract_strided_slice %23 {offsets = [1, 0, 0], sizes = [8, 16, 4], strides = [1, 1, 1]} : vector<14x16x4xf32> to vector<8x16x4xf32>
    %101 = vector.shape_cast %99 : vector<4xf32> to vector<1x1x4xf32>
    %102 = vector.broadcast %101 : vector<1x1x4xf32> to vector<8x16x4xf32>
    %103 = arith.mulf %102, %100 : vector<8x16x4xf32>
    %104 = arith.addf %97, %103 : vector<8x16x4xf32>
    %105 = vector.extract_strided_slice %19 {offsets = [11, 0], sizes = [1, 4], strides = [1, 1]} : vector<49x4xf32> to vector<1x4xf32>
    %106 = vector.shape_cast %105 : vector<1x4xf32> to vector<4xf32>
    %107 = vector.extract_strided_slice %24 {offsets = [1, 0, 0], sizes = [8, 16, 4], strides = [1, 1, 1]} : vector<14x16x4xf32> to vector<8x16x4xf32>
    %108 = vector.shape_cast %106 : vector<4xf32> to vector<1x1x4xf32>
    %109 = vector.broadcast %108 : vector<1x1x4xf32> to vector<8x16x4xf32>
    %110 = arith.mulf %109, %107 : vector<8x16x4xf32>
    %111 = arith.addf %104, %110 : vector<8x16x4xf32>
    %112 = vector.extract_strided_slice %19 {offsets = [12, 0], sizes = [1, 4], strides = [1, 1]} : vector<49x4xf32> to vector<1x4xf32>
    %113 = vector.shape_cast %112 : vector<1x4xf32> to vector<4xf32>
    %114 = vector.extract_strided_slice %25 {offsets = [1, 0, 0], sizes = [8, 16, 4], strides = [1, 1, 1]} : vector<14x16x4xf32> to vector<8x16x4xf32>
    %115 = vector.shape_cast %113 : vector<4xf32> to vector<1x1x4xf32>
    %116 = vector.broadcast %115 : vector<1x1x4xf32> to vector<8x16x4xf32>
    %117 = arith.mulf %116, %114 : vector<8x16x4xf32>
    %118 = arith.addf %111, %117 : vector<8x16x4xf32>
    %119 = vector.extract_strided_slice %19 {offsets = [13, 0], sizes = [1, 4], strides = [1, 1]} : vector<49x4xf32> to vector<1x4xf32>
    %120 = vector.shape_cast %119 : vector<1x4xf32> to vector<4xf32>
    %121 = vector.extract_strided_slice %26 {offsets = [1, 0, 0], sizes = [8, 16, 4], strides = [1, 1, 1]} : vector<14x16x4xf32> to vector<8x16x4xf32>
    %122 = vector.shape_cast %120 : vector<4xf32> to vector<1x1x4xf32>
    %123 = vector.broadcast %122 : vector<1x1x4xf32> to vector<8x16x4xf32>
    %124 = arith.mulf %123, %121 : vector<8x16x4xf32>
    %125 = arith.addf %118, %124 : vector<8x16x4xf32>
    %126 = vector.extract_strided_slice %19 {offsets = [14, 0], sizes = [1, 4], strides = [1, 1]} : vector<49x4xf32> to vector<1x4xf32>
    %127 = vector.shape_cast %126 : vector<1x4xf32> to vector<4xf32>
    %128 = vector.extract_strided_slice %20 {offsets = [2, 0, 0], sizes = [8, 16, 4], strides = [1, 1, 1]} : vector<14x16x4xf32> to vector<8x16x4xf32>
    %129 = vector.shape_cast %127 : vector<4xf32> to vector<1x1x4xf32>
    %130 = vector.broadcast %129 : vector<1x1x4xf32> to vector<8x16x4xf32>
    %131 = arith.mulf %130, %128 : vector<8x16x4xf32>
    %132 = arith.addf %125, %131 : vector<8x16x4xf32>
    %133 = vector.extract_strided_slice %19 {offsets = [15, 0], sizes = [1, 4], strides = [1, 1]} : vector<49x4xf32> to vector<1x4xf32>
    %134 = vector.shape_cast %133 : vector<1x4xf32> to vector<4xf32>
    %135 = vector.extract_strided_slice %21 {offsets = [2, 0, 0], sizes = [8, 16, 4], strides = [1, 1, 1]} : vector<14x16x4xf32> to vector<8x16x4xf32>
    %136 = vector.shape_cast %134 : vector<4xf32> to vector<1x1x4xf32>
    %137 = vector.broadcast %136 : vector<1x1x4xf32> to vector<8x16x4xf32>
    %138 = arith.mulf %137, %135 : vector<8x16x4xf32>
    %139 = arith.addf %132, %138 : vector<8x16x4xf32>
    %140 = vector.extract_strided_slice %19 {offsets = [16, 0], sizes = [1, 4], strides = [1, 1]} : vector<49x4xf32> to vector<1x4xf32>
    %141 = vector.shape_cast %140 : vector<1x4xf32> to vector<4xf32>
    %142 = vector.extract_strided_slice %22 {offsets = [2, 0, 0], sizes = [8, 16, 4], strides = [1, 1, 1]} : vector<14x16x4xf32> to vector<8x16x4xf32>
    %143 = vector.shape_cast %141 : vector<4xf32> to vector<1x1x4xf32>
    %144 = vector.broadcast %143 : vector<1x1x4xf32> to vector<8x16x4xf32>
    %145 = arith.mulf %144, %142 : vector<8x16x4xf32>
    %146 = arith.addf %139, %145 : vector<8x16x4xf32>
    %147 = vector.extract_strided_slice %19 {offsets = [17, 0], sizes = [1, 4], strides = [1, 1]} : vector<49x4xf32> to vector<1x4xf32>
    %148 = vector.shape_cast %147 : vector<1x4xf32> to vector<4xf32>
    %149 = vector.extract_strided_slice %23 {offsets = [2, 0, 0], sizes = [8, 16, 4], strides = [1, 1, 1]} : vector<14x16x4xf32> to vector<8x16x4xf32>
    %150 = vector.shape_cast %148 : vector<4xf32> to vector<1x1x4xf32>
    %151 = vector.broadcast %150 : vector<1x1x4xf32> to vector<8x16x4xf32>
    %152 = arith.mulf %151, %149 : vector<8x16x4xf32>
    %153 = arith.addf %146, %152 : vector<8x16x4xf32>
    %154 = vector.extract_strided_slice %19 {offsets = [18, 0], sizes = [1, 4], strides = [1, 1]} : vector<49x4xf32> to vector<1x4xf32>
    %155 = vector.shape_cast %154 : vector<1x4xf32> to vector<4xf32>
    %156 = vector.extract_strided_slice %24 {offsets = [2, 0, 0], sizes = [8, 16, 4], strides = [1, 1, 1]} : vector<14x16x4xf32> to vector<8x16x4xf32>
    %157 = vector.shape_cast %155 : vector<4xf32> to vector<1x1x4xf32>
    %158 = vector.broadcast %157 : vector<1x1x4xf32> to vector<8x16x4xf32>
    %159 = arith.mulf %158, %156 : vector<8x16x4xf32>
    %160 = arith.addf %153, %159 : vector<8x16x4xf32>
    %161 = vector.extract_strided_slice %19 {offsets = [19, 0], sizes = [1, 4], strides = [1, 1]} : vector<49x4xf32> to vector<1x4xf32>
    %162 = vector.shape_cast %161 : vector<1x4xf32> to vector<4xf32>
    %163 = vector.extract_strided_slice %25 {offsets = [2, 0, 0], sizes = [8, 16, 4], strides = [1, 1, 1]} : vector<14x16x4xf32> to vector<8x16x4xf32>
    %164 = vector.shape_cast %162 : vector<4xf32> to vector<1x1x4xf32>
    %165 = vector.broadcast %164 : vector<1x1x4xf32> to vector<8x16x4xf32>
    %166 = arith.mulf %165, %163 : vector<8x16x4xf32>
    %167 = arith.addf %160, %166 : vector<8x16x4xf32>
    %168 = vector.extract_strided_slice %19 {offsets = [20, 0], sizes = [1, 4], strides = [1, 1]} : vector<49x4xf32> to vector<1x4xf32>
    %169 = vector.shape_cast %168 : vector<1x4xf32> to vector<4xf32>
    %170 = vector.extract_strided_slice %26 {offsets = [2, 0, 0], sizes = [8, 16, 4], strides = [1, 1, 1]} : vector<14x16x4xf32> to vector<8x16x4xf32>
    %171 = vector.shape_cast %169 : vector<4xf32> to vector<1x1x4xf32>
    %172 = vector.broadcast %171 : vector<1x1x4xf32> to vector<8x16x4xf32>
    %173 = arith.mulf %172, %170 : vector<8x16x4xf32>
    %174 = arith.addf %167, %173 : vector<8x16x4xf32>
    %175 = vector.extract_strided_slice %19 {offsets = [21, 0], sizes = [1, 4], strides = [1, 1]} : vector<49x4xf32> to vector<1x4xf32>
    %176 = vector.shape_cast %175 : vector<1x4xf32> to vector<4xf32>
    %177 = vector.extract_strided_slice %20 {offsets = [3, 0, 0], sizes = [8, 16, 4], strides = [1, 1, 1]} : vector<14x16x4xf32> to vector<8x16x4xf32>
    %178 = vector.shape_cast %176 : vector<4xf32> to vector<1x1x4xf32>
    %179 = vector.broadcast %178 : vector<1x1x4xf32> to vector<8x16x4xf32>
    %180 = arith.mulf %179, %177 : vector<8x16x4xf32>
    %181 = arith.addf %174, %180 : vector<8x16x4xf32>
    %182 = vector.extract_strided_slice %19 {offsets = [22, 0], sizes = [1, 4], strides = [1, 1]} : vector<49x4xf32> to vector<1x4xf32>
    %183 = vector.shape_cast %182 : vector<1x4xf32> to vector<4xf32>
    %184 = vector.extract_strided_slice %21 {offsets = [3, 0, 0], sizes = [8, 16, 4], strides = [1, 1, 1]} : vector<14x16x4xf32> to vector<8x16x4xf32>
    %185 = vector.shape_cast %183 : vector<4xf32> to vector<1x1x4xf32>
    %186 = vector.broadcast %185 : vector<1x1x4xf32> to vector<8x16x4xf32>
    %187 = arith.mulf %186, %184 : vector<8x16x4xf32>
    %188 = arith.addf %181, %187 : vector<8x16x4xf32>
    %189 = vector.extract_strided_slice %19 {offsets = [23, 0], sizes = [1, 4], strides = [1, 1]} : vector<49x4xf32> to vector<1x4xf32>
    %190 = vector.shape_cast %189 : vector<1x4xf32> to vector<4xf32>
    %191 = vector.extract_strided_slice %22 {offsets = [3, 0, 0], sizes = [8, 16, 4], strides = [1, 1, 1]} : vector<14x16x4xf32> to vector<8x16x4xf32>
    %192 = vector.shape_cast %190 : vector<4xf32> to vector<1x1x4xf32>
    %193 = vector.broadcast %192 : vector<1x1x4xf32> to vector<8x16x4xf32>
    %194 = arith.mulf %193, %191 : vector<8x16x4xf32>
    %195 = arith.addf %188, %194 : vector<8x16x4xf32>
    %196 = vector.extract_strided_slice %19 {offsets = [24, 0], sizes = [1, 4], strides = [1, 1]} : vector<49x4xf32> to vector<1x4xf32>
    %197 = vector.shape_cast %196 : vector<1x4xf32> to vector<4xf32>
    %198 = vector.extract_strided_slice %23 {offsets = [3, 0, 0], sizes = [8, 16, 4], strides = [1, 1, 1]} : vector<14x16x4xf32> to vector<8x16x4xf32>
    %199 = vector.shape_cast %197 : vector<4xf32> to vector<1x1x4xf32>
    %200 = vector.broadcast %199 : vector<1x1x4xf32> to vector<8x16x4xf32>
    %201 = arith.mulf %200, %198 : vector<8x16x4xf32>
    %202 = arith.addf %195, %201 : vector<8x16x4xf32>
    %203 = vector.extract_strided_slice %19 {offsets = [25, 0], sizes = [1, 4], strides = [1, 1]} : vector<49x4xf32> to vector<1x4xf32>
    %204 = vector.shape_cast %203 : vector<1x4xf32> to vector<4xf32>
    %205 = vector.extract_strided_slice %24 {offsets = [3, 0, 0], sizes = [8, 16, 4], strides = [1, 1, 1]} : vector<14x16x4xf32> to vector<8x16x4xf32>
    %206 = vector.shape_cast %204 : vector<4xf32> to vector<1x1x4xf32>
    %207 = vector.broadcast %206 : vector<1x1x4xf32> to vector<8x16x4xf32>
    %208 = arith.mulf %207, %205 : vector<8x16x4xf32>
    %209 = arith.addf %202, %208 : vector<8x16x4xf32>
    %210 = vector.extract_strided_slice %19 {offsets = [26, 0], sizes = [1, 4], strides = [1, 1]} : vector<49x4xf32> to vector<1x4xf32>
    %211 = vector.shape_cast %210 : vector<1x4xf32> to vector<4xf32>
    %212 = vector.extract_strided_slice %25 {offsets = [3, 0, 0], sizes = [8, 16, 4], strides = [1, 1, 1]} : vector<14x16x4xf32> to vector<8x16x4xf32>
    %213 = vector.shape_cast %211 : vector<4xf32> to vector<1x1x4xf32>
    %214 = vector.broadcast %213 : vector<1x1x4xf32> to vector<8x16x4xf32>
    %215 = arith.mulf %214, %212 : vector<8x16x4xf32>
    %216 = arith.addf %209, %215 : vector<8x16x4xf32>
    %217 = vector.extract_strided_slice %19 {offsets = [27, 0], sizes = [1, 4], strides = [1, 1]} : vector<49x4xf32> to vector<1x4xf32>
    %218 = vector.shape_cast %217 : vector<1x4xf32> to vector<4xf32>
    %219 = vector.extract_strided_slice %26 {offsets = [3, 0, 0], sizes = [8, 16, 4], strides = [1, 1, 1]} : vector<14x16x4xf32> to vector<8x16x4xf32>
    %220 = vector.shape_cast %218 : vector<4xf32> to vector<1x1x4xf32>
    %221 = vector.broadcast %220 : vector<1x1x4xf32> to vector<8x16x4xf32>
    %222 = arith.mulf %221, %219 : vector<8x16x4xf32>
    %223 = arith.addf %216, %222 : vector<8x16x4xf32>
    %224 = vector.extract_strided_slice %19 {offsets = [28, 0], sizes = [1, 4], strides = [1, 1]} : vector<49x4xf32> to vector<1x4xf32>
    %225 = vector.shape_cast %224 : vector<1x4xf32> to vector<4xf32>
    %226 = vector.extract_strided_slice %20 {offsets = [4, 0, 0], sizes = [8, 16, 4], strides = [1, 1, 1]} : vector<14x16x4xf32> to vector<8x16x4xf32>
    %227 = vector.shape_cast %225 : vector<4xf32> to vector<1x1x4xf32>
    %228 = vector.broadcast %227 : vector<1x1x4xf32> to vector<8x16x4xf32>
    %229 = arith.mulf %228, %226 : vector<8x16x4xf32>
    %230 = arith.addf %223, %229 : vector<8x16x4xf32>
    %231 = vector.extract_strided_slice %19 {offsets = [29, 0], sizes = [1, 4], strides = [1, 1]} : vector<49x4xf32> to vector<1x4xf32>
    %232 = vector.shape_cast %231 : vector<1x4xf32> to vector<4xf32>
    %233 = vector.extract_strided_slice %21 {offsets = [4, 0, 0], sizes = [8, 16, 4], strides = [1, 1, 1]} : vector<14x16x4xf32> to vector<8x16x4xf32>
    %234 = vector.shape_cast %232 : vector<4xf32> to vector<1x1x4xf32>
    %235 = vector.broadcast %234 : vector<1x1x4xf32> to vector<8x16x4xf32>
    %236 = arith.mulf %235, %233 : vector<8x16x4xf32>
    %237 = arith.addf %230, %236 : vector<8x16x4xf32>
    %238 = vector.extract_strided_slice %19 {offsets = [30, 0], sizes = [1, 4], strides = [1, 1]} : vector<49x4xf32> to vector<1x4xf32>
    %239 = vector.shape_cast %238 : vector<1x4xf32> to vector<4xf32>
    %240 = vector.extract_strided_slice %22 {offsets = [4, 0, 0], sizes = [8, 16, 4], strides = [1, 1, 1]} : vector<14x16x4xf32> to vector<8x16x4xf32>
    %241 = vector.shape_cast %239 : vector<4xf32> to vector<1x1x4xf32>
    %242 = vector.broadcast %241 : vector<1x1x4xf32> to vector<8x16x4xf32>
    %243 = arith.mulf %242, %240 : vector<8x16x4xf32>
    %244 = arith.addf %237, %243 : vector<8x16x4xf32>
    %245 = vector.extract_strided_slice %19 {offsets = [31, 0], sizes = [1, 4], strides = [1, 1]} : vector<49x4xf32> to vector<1x4xf32>
    %246 = vector.shape_cast %245 : vector<1x4xf32> to vector<4xf32>
    %247 = vector.extract_strided_slice %23 {offsets = [4, 0, 0], sizes = [8, 16, 4], strides = [1, 1, 1]} : vector<14x16x4xf32> to vector<8x16x4xf32>
    %248 = vector.shape_cast %246 : vector<4xf32> to vector<1x1x4xf32>
    %249 = vector.broadcast %248 : vector<1x1x4xf32> to vector<8x16x4xf32>
    %250 = arith.mulf %249, %247 : vector<8x16x4xf32>
    %251 = arith.addf %244, %250 : vector<8x16x4xf32>
    %252 = vector.extract_strided_slice %19 {offsets = [32, 0], sizes = [1, 4], strides = [1, 1]} : vector<49x4xf32> to vector<1x4xf32>
    %253 = vector.shape_cast %252 : vector<1x4xf32> to vector<4xf32>
    %254 = vector.extract_strided_slice %24 {offsets = [4, 0, 0], sizes = [8, 16, 4], strides = [1, 1, 1]} : vector<14x16x4xf32> to vector<8x16x4xf32>
    %255 = vector.shape_cast %253 : vector<4xf32> to vector<1x1x4xf32>
    %256 = vector.broadcast %255 : vector<1x1x4xf32> to vector<8x16x4xf32>
    %257 = arith.mulf %256, %254 : vector<8x16x4xf32>
    %258 = arith.addf %251, %257 : vector<8x16x4xf32>
    %259 = vector.extract_strided_slice %19 {offsets = [33, 0], sizes = [1, 4], strides = [1, 1]} : vector<49x4xf32> to vector<1x4xf32>
    %260 = vector.shape_cast %259 : vector<1x4xf32> to vector<4xf32>
    %261 = vector.extract_strided_slice %25 {offsets = [4, 0, 0], sizes = [8, 16, 4], strides = [1, 1, 1]} : vector<14x16x4xf32> to vector<8x16x4xf32>
    %262 = vector.shape_cast %260 : vector<4xf32> to vector<1x1x4xf32>
    %263 = vector.broadcast %262 : vector<1x1x4xf32> to vector<8x16x4xf32>
    %264 = arith.mulf %263, %261 : vector<8x16x4xf32>
    %265 = arith.addf %258, %264 : vector<8x16x4xf32>
    %266 = vector.extract_strided_slice %19 {offsets = [34, 0], sizes = [1, 4], strides = [1, 1]} : vector<49x4xf32> to vector<1x4xf32>
    %267 = vector.shape_cast %266 : vector<1x4xf32> to vector<4xf32>
    %268 = vector.extract_strided_slice %26 {offsets = [4, 0, 0], sizes = [8, 16, 4], strides = [1, 1, 1]} : vector<14x16x4xf32> to vector<8x16x4xf32>
    %269 = vector.shape_cast %267 : vector<4xf32> to vector<1x1x4xf32>
    %270 = vector.broadcast %269 : vector<1x1x4xf32> to vector<8x16x4xf32>
    %271 = arith.mulf %270, %268 : vector<8x16x4xf32>
    %272 = arith.addf %265, %271 : vector<8x16x4xf32>
    %273 = vector.extract_strided_slice %19 {offsets = [35, 0], sizes = [1, 4], strides = [1, 1]} : vector<49x4xf32> to vector<1x4xf32>
    %274 = vector.shape_cast %273 : vector<1x4xf32> to vector<4xf32>
    %275 = vector.extract_strided_slice %20 {offsets = [5, 0, 0], sizes = [8, 16, 4], strides = [1, 1, 1]} : vector<14x16x4xf32> to vector<8x16x4xf32>
    %276 = vector.shape_cast %274 : vector<4xf32> to vector<1x1x4xf32>
    %277 = vector.broadcast %276 : vector<1x1x4xf32> to vector<8x16x4xf32>
    %278 = arith.mulf %277, %275 : vector<8x16x4xf32>
    %279 = arith.addf %272, %278 : vector<8x16x4xf32>
    %280 = vector.extract_strided_slice %19 {offsets = [36, 0], sizes = [1, 4], strides = [1, 1]} : vector<49x4xf32> to vector<1x4xf32>
    %281 = vector.shape_cast %280 : vector<1x4xf32> to vector<4xf32>
    %282 = vector.extract_strided_slice %21 {offsets = [5, 0, 0], sizes = [8, 16, 4], strides = [1, 1, 1]} : vector<14x16x4xf32> to vector<8x16x4xf32>
    %283 = vector.shape_cast %281 : vector<4xf32> to vector<1x1x4xf32>
    %284 = vector.broadcast %283 : vector<1x1x4xf32> to vector<8x16x4xf32>
    %285 = arith.mulf %284, %282 : vector<8x16x4xf32>
    %286 = arith.addf %279, %285 : vector<8x16x4xf32>
    %287 = vector.extract_strided_slice %19 {offsets = [37, 0], sizes = [1, 4], strides = [1, 1]} : vector<49x4xf32> to vector<1x4xf32>
    %288 = vector.shape_cast %287 : vector<1x4xf32> to vector<4xf32>
    %289 = vector.extract_strided_slice %22 {offsets = [5, 0, 0], sizes = [8, 16, 4], strides = [1, 1, 1]} : vector<14x16x4xf32> to vector<8x16x4xf32>
    %290 = vector.shape_cast %288 : vector<4xf32> to vector<1x1x4xf32>
    %291 = vector.broadcast %290 : vector<1x1x4xf32> to vector<8x16x4xf32>
    %292 = arith.mulf %291, %289 : vector<8x16x4xf32>
    %293 = arith.addf %286, %292 : vector<8x16x4xf32>
    %294 = vector.extract_strided_slice %19 {offsets = [38, 0], sizes = [1, 4], strides = [1, 1]} : vector<49x4xf32> to vector<1x4xf32>
    %295 = vector.shape_cast %294 : vector<1x4xf32> to vector<4xf32>
    %296 = vector.extract_strided_slice %23 {offsets = [5, 0, 0], sizes = [8, 16, 4], strides = [1, 1, 1]} : vector<14x16x4xf32> to vector<8x16x4xf32>
    %297 = vector.shape_cast %295 : vector<4xf32> to vector<1x1x4xf32>
    %298 = vector.broadcast %297 : vector<1x1x4xf32> to vector<8x16x4xf32>
    %299 = arith.mulf %298, %296 : vector<8x16x4xf32>
    %300 = arith.addf %293, %299 : vector<8x16x4xf32>
    %301 = vector.extract_strided_slice %19 {offsets = [39, 0], sizes = [1, 4], strides = [1, 1]} : vector<49x4xf32> to vector<1x4xf32>
    %302 = vector.shape_cast %301 : vector<1x4xf32> to vector<4xf32>
    %303 = vector.extract_strided_slice %24 {offsets = [5, 0, 0], sizes = [8, 16, 4], strides = [1, 1, 1]} : vector<14x16x4xf32> to vector<8x16x4xf32>
    %304 = vector.shape_cast %302 : vector<4xf32> to vector<1x1x4xf32>
    %305 = vector.broadcast %304 : vector<1x1x4xf32> to vector<8x16x4xf32>
    %306 = arith.mulf %305, %303 : vector<8x16x4xf32>
    %307 = arith.addf %300, %306 : vector<8x16x4xf32>
    %308 = vector.extract_strided_slice %19 {offsets = [40, 0], sizes = [1, 4], strides = [1, 1]} : vector<49x4xf32> to vector<1x4xf32>
    %309 = vector.shape_cast %308 : vector<1x4xf32> to vector<4xf32>
    %310 = vector.extract_strided_slice %25 {offsets = [5, 0, 0], sizes = [8, 16, 4], strides = [1, 1, 1]} : vector<14x16x4xf32> to vector<8x16x4xf32>
    %311 = vector.shape_cast %309 : vector<4xf32> to vector<1x1x4xf32>
    %312 = vector.broadcast %311 : vector<1x1x4xf32> to vector<8x16x4xf32>
    %313 = arith.mulf %312, %310 : vector<8x16x4xf32>
    %314 = arith.addf %307, %313 : vector<8x16x4xf32>
    %315 = vector.extract_strided_slice %19 {offsets = [41, 0], sizes = [1, 4], strides = [1, 1]} : vector<49x4xf32> to vector<1x4xf32>
    %316 = vector.shape_cast %315 : vector<1x4xf32> to vector<4xf32>
    %317 = vector.extract_strided_slice %26 {offsets = [5, 0, 0], sizes = [8, 16, 4], strides = [1, 1, 1]} : vector<14x16x4xf32> to vector<8x16x4xf32>
    %318 = vector.shape_cast %316 : vector<4xf32> to vector<1x1x4xf32>
    %319 = vector.broadcast %318 : vector<1x1x4xf32> to vector<8x16x4xf32>
    %320 = arith.mulf %319, %317 : vector<8x16x4xf32>
    %321 = arith.addf %314, %320 : vector<8x16x4xf32>
    %322 = vector.extract_strided_slice %19 {offsets = [42, 0], sizes = [1, 4], strides = [1, 1]} : vector<49x4xf32> to vector<1x4xf32>
    %323 = vector.shape_cast %322 : vector<1x4xf32> to vector<4xf32>
    %324 = vector.extract_strided_slice %20 {offsets = [6, 0, 0], sizes = [8, 16, 4], strides = [1, 1, 1]} : vector<14x16x4xf32> to vector<8x16x4xf32>
    %325 = vector.shape_cast %323 : vector<4xf32> to vector<1x1x4xf32>
    %326 = vector.broadcast %325 : vector<1x1x4xf32> to vector<8x16x4xf32>
    %327 = arith.mulf %326, %324 : vector<8x16x4xf32>
    %328 = arith.addf %321, %327 : vector<8x16x4xf32>
    %329 = vector.extract_strided_slice %19 {offsets = [43, 0], sizes = [1, 4], strides = [1, 1]} : vector<49x4xf32> to vector<1x4xf32>
    %330 = vector.shape_cast %329 : vector<1x4xf32> to vector<4xf32>
    %331 = vector.extract_strided_slice %21 {offsets = [6, 0, 0], sizes = [8, 16, 4], strides = [1, 1, 1]} : vector<14x16x4xf32> to vector<8x16x4xf32>
    %332 = vector.shape_cast %330 : vector<4xf32> to vector<1x1x4xf32>
    %333 = vector.broadcast %332 : vector<1x1x4xf32> to vector<8x16x4xf32>
    %334 = arith.mulf %333, %331 : vector<8x16x4xf32>
    %335 = arith.addf %328, %334 : vector<8x16x4xf32>
    %336 = vector.extract_strided_slice %19 {offsets = [44, 0], sizes = [1, 4], strides = [1, 1]} : vector<49x4xf32> to vector<1x4xf32>
    %337 = vector.shape_cast %336 : vector<1x4xf32> to vector<4xf32>
    %338 = vector.extract_strided_slice %22 {offsets = [6, 0, 0], sizes = [8, 16, 4], strides = [1, 1, 1]} : vector<14x16x4xf32> to vector<8x16x4xf32>
    %339 = vector.shape_cast %337 : vector<4xf32> to vector<1x1x4xf32>
    %340 = vector.broadcast %339 : vector<1x1x4xf32> to vector<8x16x4xf32>
    %341 = arith.mulf %340, %338 : vector<8x16x4xf32>
    %342 = arith.addf %335, %341 : vector<8x16x4xf32>
    %343 = vector.extract_strided_slice %19 {offsets = [45, 0], sizes = [1, 4], strides = [1, 1]} : vector<49x4xf32> to vector<1x4xf32>
    %344 = vector.shape_cast %343 : vector<1x4xf32> to vector<4xf32>
    %345 = vector.extract_strided_slice %23 {offsets = [6, 0, 0], sizes = [8, 16, 4], strides = [1, 1, 1]} : vector<14x16x4xf32> to vector<8x16x4xf32>
    %346 = vector.shape_cast %344 : vector<4xf32> to vector<1x1x4xf32>
    %347 = vector.broadcast %346 : vector<1x1x4xf32> to vector<8x16x4xf32>
    %348 = arith.mulf %347, %345 : vector<8x16x4xf32>
    %349 = arith.addf %342, %348 : vector<8x16x4xf32>
    %350 = vector.extract_strided_slice %19 {offsets = [46, 0], sizes = [1, 4], strides = [1, 1]} : vector<49x4xf32> to vector<1x4xf32>
    %351 = vector.shape_cast %350 : vector<1x4xf32> to vector<4xf32>
    %352 = vector.extract_strided_slice %24 {offsets = [6, 0, 0], sizes = [8, 16, 4], strides = [1, 1, 1]} : vector<14x16x4xf32> to vector<8x16x4xf32>
    %353 = vector.shape_cast %351 : vector<4xf32> to vector<1x1x4xf32>
    %354 = vector.broadcast %353 : vector<1x1x4xf32> to vector<8x16x4xf32>
    %355 = arith.mulf %354, %352 : vector<8x16x4xf32>
    %356 = arith.addf %349, %355 : vector<8x16x4xf32>
    %357 = vector.extract_strided_slice %19 {offsets = [47, 0], sizes = [1, 4], strides = [1, 1]} : vector<49x4xf32> to vector<1x4xf32>
    %358 = vector.shape_cast %357 : vector<1x4xf32> to vector<4xf32>
    %359 = vector.extract_strided_slice %25 {offsets = [6, 0, 0], sizes = [8, 16, 4], strides = [1, 1, 1]} : vector<14x16x4xf32> to vector<8x16x4xf32>
    %360 = vector.shape_cast %358 : vector<4xf32> to vector<1x1x4xf32>
    %361 = vector.broadcast %360 : vector<1x1x4xf32> to vector<8x16x4xf32>
    %362 = arith.mulf %361, %359 : vector<8x16x4xf32>
    %363 = arith.addf %356, %362 : vector<8x16x4xf32>
    %364 = vector.extract_strided_slice %19 {offsets = [48, 0], sizes = [1, 4], strides = [1, 1]} : vector<49x4xf32> to vector<1x4xf32>
    %365 = vector.shape_cast %364 : vector<1x4xf32> to vector<4xf32>
    %366 = vector.extract_strided_slice %26 {offsets = [6, 0, 0], sizes = [8, 16, 4], strides = [1, 1, 1]} : vector<14x16x4xf32> to vector<8x16x4xf32>
    %367 = vector.shape_cast %365 : vector<4xf32> to vector<1x1x4xf32>
    %368 = vector.broadcast %367 : vector<1x1x4xf32> to vector<8x16x4xf32>
    %369 = arith.mulf %368, %366 : vector<8x16x4xf32>
    %370 = arith.addf %363, %369 : vector<8x16x4xf32>
    %371 = vector.shape_cast %370 : vector<8x16x4xf32> to vector<128x4xf32>
    %372 = arith.truncf %371 : vector<128x4xf32> to vector<128x4xbf16>
    %c0_22 = arith.constant 0 : index
    %c0_23 = arith.constant 0 : index
    %373 = vector.load %arg6[%c0_22, %c0_23] : memref<4x32xbf16, #tpu.memory_space<vmem>>, vector<4x32xbf16>
    %cst_24 = arith.constant dense<0.000000e+00> : vector<128x32xf32>
    %374 = tpu.matmul %372, %373, %cst_24 {dimension_numbers = #tpu.dot_dimension_numbers<[1], [0], [0], [1], [0, 0, 1, 1], [], []>} : vector<128x4xbf16>, vector<4x32xbf16>, vector<128x32xf32> -> vector<128x32xf32>
    %c0_25 = arith.constant 0 : index
    %c0_26 = arith.constant 0 : index
    %375 = vector.load %arg7[%c0_25, %c0_26] : memref<1x32xf32, #tpu.memory_space<vmem>>, vector<1x32xf32>
    %376 = vector.shape_cast %375 : vector<1x32xf32> to vector<32xf32>
    %377 = vector.shape_cast %376 : vector<32xf32> to vector<1x32xf32>
    %378 = vector.broadcast %377 : vector<1x32xf32> to vector<128x32xf32>
    %379 = arith.addf %374, %378 : vector<128x32xf32>
    %cst_27 = arith.constant 5.000000e-01 : f32
    %380 = vector.broadcast %cst_27 : f32 to vector<128x32xf32>
    %381 = arith.mulf %380, %379 : vector<128x32xf32>
    %cst_28 = arith.constant 0.707106769 : f32
    %382 = vector.broadcast %cst_28 : f32 to vector<128x32xf32>
    %383 = arith.mulf %379, %382 : vector<128x32xf32>
    %cst_29 = arith.constant 0.000000e+00 : f32
    %384 = vector.broadcast %cst_29 : f32 to vector<128x32xf32>
    %385 = arith.cmpf oge, %383, %384 : vector<128x32xf32>
    %cst_30 = arith.constant 1.000000e+00 : f32
    %cst_31 = arith.constant -1.000000e+00 : f32
    %386 = vector.broadcast %cst_30 : f32 to vector<128x32xf32>
    %387 = vector.broadcast %cst_31 : f32 to vector<128x32xf32>
    %388 = arith.select %385, %386, %387 : vector<128x32xi1>, vector<128x32xf32>
    %389 = math.absf %383 : vector<128x32xf32>
    %cst_32 = arith.constant 0.327591091 : f32
    %390 = vector.broadcast %cst_32 : f32 to vector<128x32xf32>
    %391 = arith.mulf %390, %389 : vector<128x32xf32>
    %cst_33 = arith.constant 1.000000e+00 : f32
    %392 = vector.broadcast %cst_33 : f32 to vector<128x32xf32>
    %393 = arith.addf %392, %391 : vector<128x32xf32>
    %394 = tpu.reciprocal %393 {approx = true} : vector<128x32xf32> -> vector<128x32xf32>
    %cst_34 = arith.constant 1.06140542 : f32
    %395 = vector.broadcast %cst_34 : f32 to vector<128x32xf32>
    %396 = arith.mulf %395, %394 : vector<128x32xf32>
    %cst_35 = arith.constant -1.45315206 : f32
    %397 = vector.broadcast %cst_35 : f32 to vector<128x32xf32>
    %398 = arith.addf %396, %397 : vector<128x32xf32>
    %399 = arith.mulf %398, %394 : vector<128x32xf32>
    %cst_36 = arith.constant 1.42141378 : f32
    %400 = vector.broadcast %cst_36 : f32 to vector<128x32xf32>
    %401 = arith.addf %399, %400 : vector<128x32xf32>
    %402 = arith.mulf %401, %394 : vector<128x32xf32>
    %cst_37 = arith.constant -0.284496725 : f32
    %403 = vector.broadcast %cst_37 : f32 to vector<128x32xf32>
    %404 = arith.addf %402, %403 : vector<128x32xf32>
    %405 = arith.mulf %404, %394 : vector<128x32xf32>
    %cst_38 = arith.constant 0.254829586 : f32
    %406 = vector.broadcast %cst_38 : f32 to vector<128x32xf32>
    %407 = arith.addf %405, %406 : vector<128x32xf32>
    %408 = arith.mulf %407, %394 : vector<128x32xf32>
    %cst_39 = arith.constant 0.000000e+00 : f32
    %409 = vector.broadcast %cst_39 : f32 to vector<128x32xf32>
    %410 = arith.subf %409, %389 : vector<128x32xf32>
    %411 = arith.mulf %410, %389 : vector<128x32xf32>
    %412 = math.exp %411 : vector<128x32xf32>
    %413 = arith.mulf %408, %412 : vector<128x32xf32>
    %cst_40 = arith.constant 1.000000e+00 : f32
    %414 = vector.broadcast %cst_40 : f32 to vector<128x32xf32>
    %415 = arith.subf %414, %413 : vector<128x32xf32>
    %416 = arith.mulf %388, %415 : vector<128x32xf32>
    %cst_41 = arith.constant 1.000000e+00 : f32
    %417 = vector.broadcast %cst_41 : f32 to vector<128x32xf32>
    %418 = arith.addf %417, %416 : vector<128x32xf32>
    %419 = arith.mulf %381, %418 : vector<128x32xf32>
    %420 = arith.truncf %419 : vector<128x32xf32> to vector<128x32xbf16>
    %c0_42 = arith.constant 0 : index
    %c0_43 = arith.constant 0 : index
    %421 = vector.load %arg8[%c0_42, %c0_43] : memref<32x4xbf16, #tpu.memory_space<vmem>>, vector<32x4xbf16>
    %cst_44 = arith.constant dense<0.000000e+00> : vector<128x4xf32>
    %422 = tpu.matmul %420, %421, %cst_44 {dimension_numbers = #tpu.dot_dimension_numbers<[1], [0], [0], [1], [0, 0, 1, 1], [], []>} : vector<128x32xbf16>, vector<32x4xbf16>, vector<128x4xf32> -> vector<128x4xf32>
    %c0_45 = arith.constant 0 : index
    %c0_46 = arith.constant 0 : index
    %423 = vector.load %arg9[%c0_45, %c0_46] : memref<1x4xf32, #tpu.memory_space<vmem>>, vector<1x4xf32>
    %424 = vector.shape_cast %423 : vector<1x4xf32> to vector<4xf32>
    %425 = vector.shape_cast %424 : vector<4xf32> to vector<1x4xf32>
    %426 = vector.broadcast %425 : vector<1x4xf32> to vector<128x4xf32>
    %427 = arith.addf %422, %426 : vector<128x4xf32>
    %428 = vector.shape_cast %427 : vector<128x4xf32> to vector<8x16x4xf32>
    %c0_47 = arith.constant 0 : index
    %c0_48 = arith.constant 0 : index
    %c0_49 = arith.constant 0 : index
    %c0_50 = arith.constant 0 : index
    %429 = vector.load %arg10[%c0_47, %c0_48, %c0_49, %c0_50] : memref<1x8x16x4xf32, #tpu.memory_space<vmem>>, vector<1x8x16x4xf32>
    %430 = vector.shape_cast %429 : vector<1x8x16x4xf32> to vector<8x16x4xf32>
    %431 = vector.shape_cast %428 : vector<8x16x4xf32> to vector<1x8x16x4xf32>
    tpu.vector_store %arg10[%c0_47, %c0_48, %c0_49, %c0_50], %431 {strides = array<i32>} : memref<1x8x16x4xf32, #tpu.memory_space<vmem>>, vector<1x8x16x4xf32>,
    return
  }
  func.func @transform_0(%arg0: i32, %arg1: i32) -> (i32, i32, i32, i32) {
    %c0_i32 = arith.constant 0 : i32
    %c0_i32_0 = arith.constant 0 : i32
    %c0_i32_1 = arith.constant 0 : i32
    return %arg0, %arg1, %c0_i32, %c0_i32_0 : i32, i32, i32, i32
  }
  func.func @transform_1(%arg0: i32, %arg1: i32) -> (i32, i32, i32, i32) {
    %c1_i32 = arith.constant 1 : i32
    %0 = arith.subi %arg1, %c1_i32 : i32
    %c0_i32 = arith.constant 0 : i32
    %1 = arith.maxsi %0, %c0_i32 : i32
    %c0_i32_0 = arith.constant 0 : i32
    %c0_i32_1 = arith.constant 0 : i32
    %c0_i32_2 = arith.constant 0 : i32
    return %arg0, %1, %c0_i32_0, %c0_i32_1 : i32, i32, i32, i32
  }
  func.func @transform_2(%arg0: i32, %arg1: i32) -> (i32, i32, i32, i32) {
    %c1_i32 = arith.constant 1 : i32
    %0 = arith.addi %arg1, %c1_i32 : i32
    %c1_i32_0 = arith.constant 1 : i32
    %1 = arith.minsi %0, %c1_i32_0 : i32
    %c0_i32 = arith.constant 0 : i32
    %c0_i32_1 = arith.constant 0 : i32
    %c0_i32_2 = arith.constant 0 : i32
    return %arg0, %1, %c0_i32, %c0_i32_1 : i32, i32, i32, i32
  }
  func.func @transform_3(%arg0: i32, %arg1: i32) -> (i32, i32) {
    %c0_i32 = arith.constant 0 : i32
    %c0_i32_0 = arith.constant 0 : i32
    %c0_i32_1 = arith.constant 0 : i32
    return %c0_i32, %c0_i32_0 : i32, i32
  }
  func.func @transform_4(%arg0: i32, %arg1: i32) -> (i32, i32) {
    %c0_i32 = arith.constant 0 : i32
    %c0_i32_0 = arith.constant 0 : i32
    %c0_i32_1 = arith.constant 0 : i32
    return %c0_i32, %c0_i32_0 : i32, i32
  }
  func.func @transform_5(%arg0: i32, %arg1: i32) -> (i32, i32) {
    %c0_i32 = arith.constant 0 : i32
    %c0_i32_0 = arith.constant 0 : i32
    %c0_i32_1 = arith.constant 0 : i32
    return %c0_i32, %c0_i32_0 : i32, i32
  }
  func.func @transform_6(%arg0: i32, %arg1: i32) -> (i32, i32) {
    %c0_i32 = arith.constant 0 : i32
    %c0_i32_0 = arith.constant 0 : i32
    %c0_i32_1 = arith.constant 0 : i32
    return %c0_i32, %c0_i32_0 : i32, i32
  }
  func.func @transform_7(%arg0: i32, %arg1: i32) -> (i32, i32) {
    %c0_i32 = arith.constant 0 : i32
    %c0_i32_0 = arith.constant 0 : i32
    %c0_i32_1 = arith.constant 0 : i32
    return %c0_i32, %c0_i32_0 : i32, i32
  }
  func.func @transform_8(%arg0: i32, %arg1: i32) -> (i32, i32, i32, i32) {
    %c0_i32 = arith.constant 0 : i32
    %c0_i32_0 = arith.constant 0 : i32
    %c0_i32_1 = arith.constant 0 : i32
    return %arg0, %arg1, %c0_i32, %c0_i32_0 : i32, i32, i32, i32
  }
}

</mosaic_0001>

<llo_original>
// kernel: tpu_custom_call.1
$region0: #{tpu_custom_call.1}
  #allocation0 [shape = 'u32[]', space=smem, size = 0x4, offset = 0x4, fixed_abs, tag = 'smem constant byte address 0x4 - core index']
  #allocation1 [shape = 'u32[144,128]{1,0:T(1,128)}', space=vmem, size = 0x12000, scoped, tag = 'internal scratch']
  #allocation2 [shape = 'f32[14,22,4]{2,1,0:T(8,128)}', space=vmem, size = 0x2a000, scoped, tag = 'scratch operand']
  %s0 = inlined_call_operand.vmem [shape: f32[2,16,16,4], index: 0, kind: input, shape index: {}]
  %s1 = inlined_call_operand.vmem [shape: f32[2,16,16,4], index: 1, kind: input, shape index: {}]
  %s2 = inlined_call_operand.vmem [shape: f32[2,16,16,4], index: 2, kind: input, shape index: {}]
  %s3 = inlined_call_operand.vmem [shape: f32[49,4], index: 3, kind: input, shape index: {}]
  %s4 = inlined_call_operand.vmem [shape: bf16[4,32], index: 4, kind: input, shape index: {}]
  %s5 = inlined_call_operand.vmem [shape: f32[1,32], index: 5, kind: input, shape index: {}]
  %s6 = inlined_call_operand.vmem [shape: bf16[32,4], index: 6, kind: input, shape index: {}]
  %s7 = inlined_call_operand.vmem [shape: f32[1,4], index: 7, kind: input, shape index: {}]
  %s8 = inlined_call_operand.vmem [shape: f32[2,16,16,4], index: 8, kind: output, shape index: {}]
  %s9 = sld [smem:[#allocation0]]
  $region81: #{tpu_custom_call.1} parent=0
    _
  %s11 = ssub.s32 1, %s9
  %s12 = scalar_select 0, %s11, %s9
  loop: start=0, step=1, limit=6
  $region2: #{tpu_custom_call.1} parent=0 // loop_pre_header
    _
  $region3: #{tpu_custom_call.1} parent=0 // loop_header
    %s14 = sphi 0, %s18
    %p15 = scmp.ge.s32.totalorder %s14, 6
    %s21 = sphi 0, %s33
    %s22 = sphi 0, %s29
    %s23 = sphi 0, %s21
    %s24 = sphi 0, %s22
    %s25 = sphi 0, %s23
    %s26 = sphi 0, %s24
    %s38 = sphi 0, %s40
    %s41 = sphi 0, %s38
    %s42 = sphi 0, %s41
    %s58 = sphi 0, %s42
    %s72 = sphi 0, %s74
    %s75 = sphi 0, %s72
    %s76 = sphi 0, %s75
    %s92 = sphi 0, %s76
    %s106 = sphi 0, %s108
    %s109 = sphi 0, %s106
    %s110 = sphi 0, %s109
    %s126 = sphi 0, %s110
    %s130 = sphi 0, %s130
    %s132 = sphi 0, %s130
    %s133 = sphi 0, %s132
    %s147 = sphi 0, %s133
    %s151 = sphi 0, %s151
    %s153 = sphi 0, %s151
    %s154 = sphi 0, %s153
    %s168 = sphi 0, %s154
    %s172 = sphi 0, %s172
    %s174 = sphi 0, %s172
    %s175 = sphi 0, %s174
    %s189 = sphi 0, %s175
    %s193 = sphi 0, %s193
    %s195 = sphi 0, %s193
    %s196 = sphi 0, %s195
    %s210 = sphi 0, %s196
    %s214 = sphi 0, %s214
    %s216 = sphi 0, %s214
    %s217 = sphi 0, %s216
    %s231 = sphi 0, %s217
    %s239 = sphi 0, %s241
    %s242 = sphi 0, %s239
    %s243 = sphi 0, %s242
    %s259 = sphi 0, %s243
  $region4: #{tpu_custom_call.1} parent=0 // loop_header_branch
    %17 = sbr.rel (%p15) target = $region8
  $region5: #{tpu_custom_call.1} parent=0 // loop_body
    %s19 = ssub.s32 %s14, 1
    %s20 = ssub.s32 %s14, 2
    %s27 = sadd.s32 1, %s22
    %p28 = scmp.ge.s32.totalorder %s27, 2
    %s29 = scalar_select %p28, 0, %s27
    %s30 = sadd.s32 1, %s21
    %s31 = scalar_select %p28, %s30, %s21
    %p32 = scmp.ge.s32.totalorder %s31, 2
    %s33 = scalar_select %p32, 0, %s31
    %s34 = ssub.s32 %s21, %s33
    %s35 = ssub.s32 %s22, %s29
    %s36 = sor.u32 %s34, %s35
    %p37 = scmp.eq.s32.totalorder %s36, 0
    %s39 = sadd.s32 %s38, 1
    %s40 = scalar_select %p37, %s38, %s39
    %p43 = pneg %p37
    %p44 = scmp.eq.s32.totalorder %s14, 3
    %p45 = por %p43, %p44
    %p46 = scmp.ne.s32.totalorder %s38, %s41
    %p47 = scmp.eq.s32.totalorder %s14, 0
    %p48 = por %p46, %p47
    %p49 = scmp.ne.s32.totalorder %s38, %s41
    %p50 = scmp.eq.s32.totalorder %s19, 3
    %p51 = por %p49, %p50
    %p52 = scmp.ne.s32.totalorder %s41, %s42
    %p53 = scmp.eq.s32.totalorder %s19, 0
    %p54 = por %p52, %p53
    %p55 = scmp.ne.s32.totalorder %s41, %s42
    %p56 = scmp.eq.s32.totalorder %s20, 3
    %p57 = por %p55, %p56
    %p59 = scmp.ne.s32.totalorder %s42, %s58
    %p60 = scmp.eq.s32.totalorder %s20, 0
    %p61 = por %p59, %p60
    %s62 = ssub.s32 %s22, 1
    %p63 = scmp.gt.s32.totalorder %s62, 0
    %s64 = scalar_select %p63, %s62, 0
    %s65 = ssub.s32 %s29, 1
    %p66 = scmp.gt.s32.totalorder %s65, 0
    %s67 = scalar_select %p66, %s65, 0
    %s68 = ssub.s32 %s21, %s33
    %s69 = ssub.s32 %s64, %s67
    %s70 = sor.u32 %s68, %s69
    %p71 = scmp.eq.s32.totalorder %s70, 0
    %s73 = sadd.s32 %s72, 1
    %s74 = scalar_select %p71, %s72, %s73
    %p77 = pneg %p71
    %p78 = scmp.eq.s32.totalorder %s14, 3
    %p79 = por %p77, %p78
    %p80 = scmp.ne.s32.totalorder %s72, %s75
    %p81 = scmp.eq.s32.totalorder %s14, 0
    %p82 = por %p80, %p81
    %p83 = scmp.ne.s32.totalorder %s72, %s75
    %p84 = scmp.eq.s32.totalorder %s19, 3
    %p85 = por %p83, %p84
    %p86 = scmp.ne.s32.totalorder %s75, %s76
    %p87 = scmp.eq.s32.totalorder %s19, 0
    %p88 = por %p86, %p87
    %p89 = scmp.ne.s32.totalorder %s75, %s76
    %p90 = scmp.eq.s32.totalorder %s20, 3
    %p91 = por %p89, %p90
    %p93 = scmp.ne.s32.totalorder %s76, %s92
    %p94 = scmp.eq.s32.totalorder %s20, 0
    %p95 = por %p93, %p94
    %s96 = sadd.s32 %s22, 1
    %p97 = scmp.lt.s32.totalorder %s96, 1
    %s98 = scalar_select %p97, %s96, 1
    %s99 = sadd.s32 %s29, 1
    %p100 = scmp.lt.s32.totalorder %s99, 1
    %s101 = scalar_select %p100, %s99, 1
    %s102 = ssub.s32 %s21, %s33
    %s103 = ssub.s32 %s98, %s101
    %s104 = sor.u32 %s102, %s103
    %p105 = scmp.eq.s32.totalorder %s104, 0
    %s107 = sadd.s32 %s106, 1
    %s108 = scalar_select %p105, %s106, %s107
    %p111 = pneg %p105
    %p112 = scmp.eq.s32.totalorder %s14, 3
    %p113 = por %p111, %p112
    %p114 = scmp.ne.s32.totalorder %s106, %s109
    %p115 = scmp.eq.s32.totalorder %s14, 0
    %p116 = por %p114, %p115
    %p117 = scmp.ne.s32.totalorder %s106, %s109
    %p118 = scmp.eq.s32.totalorder %s19, 3
    %p119 = por %p117, %p118
    %p120 = scmp.ne.s32.totalorder %s109, %s110
    %p121 = scmp.eq.s32.totalorder %s19, 0
    %p122 = por %p120, %p121
    %p123 = scmp.ne.s32.totalorder %s109, %s110
    %p124 = scmp.eq.s32.totalorder %s20, 3
    %p125 = por %p123, %p124
    %p127 = scmp.ne.s32.totalorder %s110, %s126
    %p128 = scmp.eq.s32.totalorder %s20, 0
    %p129 = por %p127, %p128
    %s131 = sadd.s32 %s130, 1
    %p134 = scmp.eq.s32.totalorder %s14, 3
    %p135 = scmp.ne.s32.totalorder %s130, %s132
    %p136 = scmp.eq.s32.totalorder %s14, 0
    %p137 = por %p135, %p136
    %p138 = scmp.ne.s32.totalorder %s130, %s132
    %p139 = scmp.eq.s32.totalorder %s19, 3
    %p140 = por %p138, %p139
    %p141 = scmp.ne.s32.totalorder %s132, %s133
    %p142 = scmp.eq.s32.totalorder %s19, 0
    %p143 = por %p141, %p142
    %p144 = scmp.ne.s32.totalorder %s132, %s133
    %p145 = scmp.eq.s32.totalorder %s20, 3
    %p146 = por %p144, %p145
    %p148 = scmp.ne.s32.totalorder %s133, %s147
    %p149 = scmp.eq.s32.totalorder %s20, 0
    %p150 = por %p148, %p149
    %s152 = sadd.s32 %s151, 1
    %p155 = scmp.eq.s32.totalorder %s14, 3
    %p156 = scmp.ne.s32.totalorder %s151, %s153
    %p157 = scmp.eq.s32.totalorder %s14, 0
    %p158 = por %p156, %p157
    %p159 = scmp.ne.s32.totalorder %s151, %s153
    %p160 = scmp.eq.s32.totalorder %s19, 3
    %p161 = por %p159, %p160
    %p162 = scmp.ne.s32.totalorder %s153, %s154
    %p163 = scmp.eq.s32.totalorder %s19, 0
    %p164 = por %p162, %p163
    %p165 = scmp.ne.s32.totalorder %s153, %s154
    %p166 = scmp.eq.s32.totalorder %s20, 3
    %p167 = por %p165, %p166
    %p169 = scmp.ne.s32.totalorder %s154, %s168
    %p170 = scmp.eq.s32.totalorder %s20, 0
    %p171 = por %p169, %p170
    %s173 = sadd.s32 %s172, 1
    %p176 = scmp.eq.s32.totalorder %s14, 3
    %p177 = scmp.ne.s32.totalorder %s172, %s174
    %p178 = scmp.eq.s32.totalorder %s14, 0
    %p179 = por %p177, %p178
    %p180 = scmp.ne.s32.totalorder %s172, %s174
    %p181 = scmp.eq.s32.totalorder %s19, 3
    %p182 = por %p180, %p181
    %p183 = scmp.ne.s32.totalorder %s174, %s175
    %p184 = scmp.eq.s32.totalorder %s19, 0
    %p185 = por %p183, %p184
    %p186 = scmp.ne.s32.totalorder %s174, %s175
    %p187 = scmp.eq.s32.totalorder %s20, 3
    %p188 = por %p186, %p187
    %p190 = scmp.ne.s32.totalorder %s175, %s189
    %p191 = scmp.eq.s32.totalorder %s20, 0
    %p192 = por %p190, %p191
    %s194 = sadd.s32 %s193, 1
    %p197 = scmp.eq.s32.totalorder %s14, 3
    %p198 = scmp.ne.s32.totalorder %s193, %s195
    %p199 = scmp.eq.s32.totalorder %s14, 0
    %p200 = por %p198, %p199
    %p201 = scmp.ne.s32.totalorder %s193, %s195
    %p202 = scmp.eq.s32.totalorder %s19, 3
    %p203 = por %p201, %p202
    %p204 = scmp.ne.s32.totalorder %s195, %s196
    %p205 = scmp.eq.s32.totalorder %s19, 0
    %p206 = por %p204, %p205
    %p207 = scmp.ne.s32.totalorder %s195, %s196
    %p208 = scmp.eq.s32.totalorder %s20, 3
    %p209 = por %p207, %p208
    %p211 = scmp.ne.s32.totalorder %s196, %s210
    %p212 = scmp.eq.s32.totalorder %s20, 0
    %p213 = por %p211, %p212
    %s215 = sadd.s32 %s214, 1
    %p218 = scmp.eq.s32.totalorder %s14, 3
    %p219 = scmp.ne.s32.totalorder %s214, %s216
    %p220 = scmp.eq.s32.totalorder %s14, 0
    %p221 = por %p219, %p220
    %p222 = scmp.ne.s32.totalorder %s214, %s216
    %p223 = scmp.eq.s32.totalorder %s19, 3
    %p224 = por %p222, %p223
    %p225 = scmp.ne.s32.totalorder %s216, %s217
    %p226 = scmp.eq.s32.totalorder %s19, 0
    %p227 = por %p225, %p226
    %p228 = scmp.ne.s32.totalorder %s216, %s217
    %p229 = scmp.eq.s32.totalorder %s20, 3
    %p230 = por %p228, %p229
    %p232 = scmp.ne.s32.totalorder %s217, %s231
    %p233 = scmp.eq.s32.totalorder %s20, 0
    %p234 = por %p232, %p233
    %s235 = ssub.s32 %s21, %s33
    %s236 = ssub.s32 %s22, %s29
    %s237 = sor.u32 %s235, %s236
    %p238 = scmp.eq.s32.totalorder %s237, 0
    %s240 = sadd.s32 %s239, 1
    %s241 = scalar_select %p238, %s239, %s240
    %p244 = pneg %p238
    %p245 = scmp.eq.s32.totalorder %s14, 3
    %p246 = por %p244, %p245
    %p247 = scmp.ne.s32.totalorder %s239, %s242
    %p248 = scmp.eq.s32.totalorder %s14, 0
    %p249 = por %p247, %p248
    %p250 = scmp.ne.s32.totalorder %s239, %s242
    %p251 = scmp.eq.s32.totalorder %s19, 3
    %p252 = por %p250, %p251
    %p253 = scmp.ne.s32.totalorder %s242, %s243
    %p254 = scmp.eq.s32.totalorder %s19, 0
    %p255 = por %p253, %p254
    %p256 = scmp.ne.s32.totalorder %s242, %s243
    %p257 = scmp.eq.s32.totalorder %s20, 3
    %p258 = por %p256, %p257
    %p260 = scmp.ne.s32.totalorder %s243, %s259
    %p261 = scmp.eq.s32.totalorder %s20, 0
    %p262 = por %p260, %p261
    %p263 = scmp.le.s32.totalorder 1, %s14
    %p264 = scmp.lt.s32.totalorder %s14, 5
    %p265 = pnand %p263, %p264
    %p266 = pneg %p265
    // Predicated region
    $region9: #{tpu_custom_call.1} parent=5 // pred_check
      _
    $region10: #{tpu_custom_call.1} parent=5 // pred_check_branch
      %268 = sbr.rel (%p265) target = $region12
    $region11: #{tpu_custom_call.1} parent=5 // pred_region
      %s269 = ssub.s32 %s14, 1
      // Predicated region
      $region13: #{tpu_custom_call.1} parent=11 // pred_check
        %p270 = pneg %p143
      $region14: #{tpu_custom_call.1} parent=11 // pred_check_branch
        %272 = sbr.rel (%p270) target = $region16
      $region15: #{tpu_custom_call.1} parent=11 // pred_region
        _
      $region16: #{tpu_custom_call.1} parent=11 // pred_fallthru
        _
      // Predicated region
      $region17: #{tpu_custom_call.1} parent=11 // pred_check
        %p273 = pneg %p164
      $region18: #{tpu_custom_call.1} parent=11 // pred_check_branch
        %275 = sbr.rel (%p273) target = $region20
      $region19: #{tpu_custom_call.1} parent=11 // pred_region
        _
      $region20: #{tpu_custom_call.1} parent=11 // pred_fallthru
        _
      // Predicated region
      $region21: #{tpu_custom_call.1} parent=11 // pred_check
        %p276 = pneg %p185
      $region22: #{tpu_custom_call.1} parent=11 // pred_check_branch
        %278 = sbr.rel (%p276) target = $region24
      $region23: #{tpu_custom_call.1} parent=11 // pred_region
        _
      $region24: #{tpu_custom_call.1} parent=11 // pred_fallthru
        _
      // Predicated region
      $region25: #{tpu_custom_call.1} parent=11 // pred_check
        %p279 = pneg %p206
      $region26: #{tpu_custom_call.1} parent=11 // pred_check_branch
        %281 = sbr.rel (%p279) target = $region28
      $region27: #{tpu_custom_call.1} parent=11 // pred_region
        _
      $region28: #{tpu_custom_call.1} parent=11 // pred_fallthru
        _
      // Predicated region
      $region29: #{tpu_custom_call.1} parent=11 // pred_check
        %p282 = pneg %p227
      $region30: #{tpu_custom_call.1} parent=11 // pred_check_branch
        %284 = sbr.rel (%p282) target = $region32
      $region31: #{tpu_custom_call.1} parent=11 // pred_region
        _
      $region32: #{tpu_custom_call.1} parent=11 // pred_fallthru
        _
    $region12: #{tpu_custom_call.1} parent=5 // pred_fallthru
      _
    %p285 = scmp.lt.s32.totalorder %s14, 4
    // Predicated region
    $region33: #{tpu_custom_call.1} parent=5 // pred_check
      %p286 = pneg %p285
    $region34: #{tpu_custom_call.1} parent=5 // pred_check_branch
      %288 = sbr.rel (%p286) target = $region36
    $region35: #{tpu_custom_call.1} parent=5 // pred_region
      // Predicated region
      $region37: #{tpu_custom_call.1} parent=35 // pred_check
        %p289 = pneg %p48
      $region38: #{tpu_custom_call.1} parent=35 // pred_check_branch
        %291 = sbr.rel (%p289) target = $region40
      $region39: #{tpu_custom_call.1} parent=35 // pred_region
        %s292 = smul.u32 8, %s22
        %p293 = scmp.lt.s32.totalorder %s21, 1
        %s294 = scalar_select %p293, %s21, 1
        %p295 = scmp.lt.s32.totalorder %s292, 15
        %s296 = scalar_select %p295, %s292, 15
        %s297 = smul.addr %s296, 2
        %s298 = smul.addr %s294, 32
        %s299 = sadd.s32 %s297, %s298
        %s300 = smul.addr %s299, 8
        %s301 = scalar_lea.vmem %s0, %s300
        %s302 = smul.u32 8, %s22
      $region40: #{tpu_custom_call.1} parent=35 // pred_fallthru
        _
      // Predicated region
      $region41: #{tpu_custom_call.1} parent=35 // pred_check
        %p303 = pneg %p82
      $region42: #{tpu_custom_call.1} parent=35 // pred_check_branch
        %305 = sbr.rel (%p303) target = $region44
      $region43: #{tpu_custom_call.1} parent=35 // pred_region
        %s306 = ssub.s32 %s22, 1
        %p307 = scmp.gt.s32.totalorder %s306, 0
        %s308 = scalar_select %p307, %s306, 0
        %s309 = smul.u32 8, %s308
        %p310 = scmp.lt.s32.totalorder %s21, 1
        %s311 = scalar_select %p310, %s21, 1
        %p312 = scmp.lt.s32.totalorder %s309, 15
        %s313 = scalar_select %p312, %s309, 15
        %s314 = smul.addr %s313, 2
        %s315 = smul.addr %s311, 32
        %s316 = sadd.s32 %s314, %s315
        %s317 = smul.addr %s316, 8
        %s318 = scalar_lea.vmem %s1, %s317
        %s319 = ssub.s32 %s22, 1
        %p320 = scmp.gt.s32.totalorder %s319, 0
        %s321 = scalar_select %p320, %s319, 0
        %s322 = smul.u32 8, %s321
      $region44: #{tpu_custom_call.1} parent=35 // pred_fallthru
        _
      // Predicated region
      $region45: #{tpu_custom_call.1} parent=35 // pred_check
        %p323 = pneg %p116
      $region46: #{tpu_custom_call.1} parent=35 // pred_check_branch
        %325 = sbr.rel (%p323) target = $region48
      $region47: #{tpu_custom_call.1} parent=35 // pred_region
        %s326 = sadd.s32 %s22, 1
        %p327 = scmp.lt.s32.totalorder %s326, 1
        %s328 = scalar_select %p327, %s326, 1
        %s329 = smul.u32 8, %s328
        %p330 = scmp.lt.s32.totalorder %s21, 1
        %s331 = scalar_select %p330, %s21, 1
        %p332 = scmp.lt.s32.totalorder %s329, 15
        %s333 = scalar_select %p332, %s329, 15
        %s334 = smul.addr %s333, 2
        %s335 = smul.addr %s331, 32
        %s336 = sadd.s32 %s334, %s335
        %s337 = smul.addr %s336, 8
        %s338 = scalar_lea.vmem %s2, %s337
        %s339 = sadd.s32 %s22, 1
        %p340 = scmp.lt.s32.totalorder %s339, 1
        %s341 = scalar_select %p340, %s339, 1
        %s342 = smul.u32 8, %s341
      $region48: #{tpu_custom_call.1} parent=35 // pred_fallthru
        _
    $region36: #{tpu_custom_call.1} parent=5 // pred_fallthru
      _
    %p343 = scmp.le.s32.totalorder 1, %s14
    %p344 = scmp.lt.s32.totalorder %s14, 5
    %p345 = pnand %p343, %p344
    %p346 = pneg %p345
    // Predicated region
    $region49: #{tpu_custom_call.1} parent=5 // pred_check
      _
    $region50: #{tpu_custom_call.1} parent=5 // pred_check_branch
      %348 = sbr.rel (%p345) target = $region52
    $region51: #{tpu_custom_call.1} parent=5 // pred_region
      %s349 = ssub.s32 %s14, 1
      %s350 = smul.u32 8, %s24
      %p351 = scmp.lt.s32.totalorder %s23, 1
      %s352 = scalar_select %p351, %s23, 1
      %p353 = scmp.lt.s32.totalorder %s350, 15
      %s354 = scalar_select %p353, %s350, 15
      %s355 = smul.addr %s354, 2
      %s356 = smul.addr %s352, 32
      %s357 = sadd.s32 %s355, %s356
      %s358 = smul.addr %s357, 8
      %s359 = scalar_lea.vmem %s0, %s358
      %p360 = pneg %p54
      %p361 = pneg %p51
      %s362 = ssub.s32 %s24, 1
      %p363 = scmp.gt.s32.totalorder %s362, 0
      %s364 = scalar_select %p363, %s362, 0
      %s365 = smul.u32 8, %s364
      %p366 = scmp.lt.s32.totalorder %s23, 1
      %s367 = scalar_select %p366, %s23, 1
      %p368 = scmp.lt.s32.totalorder %s365, 15
      %s369 = scalar_select %p368, %s365, 15
      %s370 = smul.addr %s369, 2
      %s371 = smul.addr %s367, 32
      %s372 = sadd.s32 %s370, %s371
      %s373 = smul.addr %s372, 8
      %s374 = scalar_lea.vmem %s1, %s373
      %p375 = pneg %p88
      %p376 = pneg %p85
      %s377 = sadd.s32 %s24, 1
      %p378 = scmp.lt.s32.totalorder %s377, 1
      %s379 = scalar_select %p378, %s377, 1
      %s380 = smul.u32 8, %s379
      %p381 = scmp.lt.s32.totalorder %s23, 1
      %s382 = scalar_select %p381, %s23, 1
      %p383 = scmp.lt.s32.totalorder %s380, 15
      %s384 = scalar_select %p383, %s380, 15
      %s385 = smul.addr %s384, 2
      %s386 = smul.addr %s382, 32
      %s387 = sadd.s32 %s385, %s386
      %s388 = smul.addr %s387, 8
      %s389 = scalar_lea.vmem %s2, %s388
      %p390 = pneg %p122
      %p391 = pneg %p119
      %p392 = pneg %p143
      %p393 = pneg %p140
      %p394 = pneg %p164
      %p395 = pneg %p161
      %p396 = pneg %p185
      %p397 = pneg %p182
      %p398 = pneg %p206
      %p399 = pneg %p203
      %p400 = pneg %p227
      %p401 = pneg %p224
      %p402 = pneg %p255
      %p403 = pneg %p252
      %s404 = smul.u32 8, %s24
      %p405 = scmp.lt.s32.totalorder %s23, 1
      %s406 = scalar_select %p405, %s23, 1
      %p407 = scmp.lt.s32.totalorder %s404, 15
      %s408 = scalar_select %p407, %s404, 15
      %s409 = smul.addr %s408, 2
      %s410 = smul.addr %s406, 32
      %s411 = sadd.s32 %s409, %s410
      %s412 = smul.addr %s411, 8
      %s413 = scalar_lea.vmem %s8, %s412
      %s414 = smul.u32 8, %s24
      %p415 = scmp.lt.s32.totalorder %s23, 1
      %s416 = scalar_select %p415, %s23, 1
      %p417 = scmp.lt.s32.totalorder %s414, 15
      %s418 = scalar_select %p417, %s414, 15
      %s419 = smul.addr %s418, 2
      %s420 = smul.addr %s416, 32
      %s421 = sadd.s32 %s419, %s420
      %s422 = smul.addr %s421, 8
      %s423 = scalar_lea.vmem %s0, %s422
      %s424 = smul.u32 8, %s24
      %s425 = ssub.s32 %s24, 1
      %p426 = scmp.gt.s32.totalorder %s425, 0
      %s427 = scalar_select %p426, %s425, 0
      %s428 = smul.u32 8, %s427
      %p429 = scmp.lt.s32.totalorder %s23, 1
      %s430 = scalar_select %p429, %s23, 1
      %p431 = scmp.lt.s32.totalorder %s428, 15
      %s432 = scalar_select %p431, %s428, 15
      %s433 = smul.addr %s432, 2
      %s434 = smul.addr %s430, 32
      %s435 = sadd.s32 %s433, %s434
      %s436 = smul.addr %s435, 8
      %s437 = scalar_lea.vmem %s1, %s436
      %s438 = ssub.s32 %s24, 1
      %p439 = scmp.gt.s32.totalorder %s438, 0
      %s440 = scalar_select %p439, %s438, 0
      %s441 = smul.u32 8, %s440
      %s442 = sadd.s32 %s24, 1
      %p443 = scmp.lt.s32.totalorder %s442, 1
      %s444 = scalar_select %p443, %s442, 1
      %s445 = smul.u32 8, %s444
      %p446 = scmp.lt.s32.totalorder %s23, 1
      %s447 = scalar_select %p446, %s23, 1
      %p448 = scmp.lt.s32.totalorder %s445, 15
      %s449 = scalar_select %p448, %s445, 15
      %s450 = smul.addr %s449, 2
      %s451 = smul.addr %s447, 32
      %s452 = sadd.s32 %s450, %s451
      %s453 = smul.addr %s452, 8
      %s454 = scalar_lea.vmem %s2, %s453
      %s455 = sadd.s32 %s24, 1
      %p456 = scmp.lt.s32.totalorder %s455, 1
      %s457 = scalar_select %p456, %s455, 1
      %s458 = smul.u32 8, %s457
      %s459 = smul.u32 8, %s24
      %p460 = scmp.lt.s32.totalorder %s23, 1
      %s461 = scalar_select %p460, %s23, 1
      %p462 = scmp.lt.s32.totalorder %s459, 15
      %s463 = scalar_select %p462, %s459, 15
      %s464 = smul.addr %s463, 2
      %s465 = smul.addr %s461, 32
      %s466 = sadd.s32 %s464, %s465
      %s467 = smul.addr %s466, 8
      %s468 = scalar_lea.vmem %s8, %s467
      %s469 = smul.u32 8, %s24
      %vm471 = vcmask 26624
      %472 = vst.msk [vmem:[#allocation2] sm:$0x7] %vm471, 0.0
      %473 = vst.msk [vmem:[#allocation2 + $0x18] sm:$0x7] %vm471, 0.0
      %474 = vst.msk [vmem:[#allocation2 + $0x30] sm:$0x7] %vm471, 0.0
      %475 = vst.msk [vmem:[#allocation2 + $0x48] sm:$0x7] %vm471, 0.0
      %476 = vst.msk [vmem:[#allocation2 + $0x60] sm:$0x7] %vm471, 0.0
      %477 = vst.msk [vmem:[#allocation2 + $0x78] sm:$0x7] %vm471, 0.0
      %478 = vst.msk [vmem:[#allocation2 + $0x90] sm:$0x7] %vm471, 0.0
      %479 = vst.msk [vmem:[#allocation2 + $0xa8] sm:$0x7] %vm471, 0.0
      %480 = vst.msk [vmem:[#allocation2 + $0xc0] sm:$0x7] %vm471, 0.0
      %481 = vst.msk [vmem:[#allocation2 + $0xd8] sm:$0x7] %vm471, 0.0
      %482 = vst.msk [vmem:[#allocation2 + $0xf0] sm:$0x7] %vm471, 0.0
      %483 = vst.msk [vmem:[#allocation2 + $0x108] sm:$0x7] %vm471, 0.0
      %484 = vst.msk [vmem:[#allocation2 + $0x120] sm:$0x7] %vm471, 0.0
      %485 = vst.msk [vmem:[#allocation2 + $0x138] sm:$0x7] %vm471, 0.0
      %486 = vst.msk [vmem:[#allocation2 + $0x13] sm:$0x7] %vm471, 0.0
      %487 = vst.msk [vmem:[#allocation2 + $0x2b] sm:$0x7] %vm471, 0.0
      %488 = vst.msk [vmem:[#allocation2 + $0x43] sm:$0x7] %vm471, 0.0
      %489 = vst.msk [vmem:[#allocation2 + $0x5b] sm:$0x7] %vm471, 0.0
      %490 = vst.msk [vmem:[#allocation2 + $0x73] sm:$0x7] %vm471, 0.0
      %491 = vst.msk [vmem:[#allocation2 + $0x8b] sm:$0x7] %vm471, 0.0
      %492 = vst.msk [vmem:[#allocation2 + $0xa3] sm:$0x7] %vm471, 0.0
      %493 = vst.msk [vmem:[#allocation2 + $0xbb] sm:$0x7] %vm471, 0.0
      %494 = vst.msk [vmem:[#allocation2 + $0xd3] sm:$0x7] %vm471, 0.0
      %495 = vst.msk [vmem:[#allocation2 + $0xeb] sm:$0x7] %vm471, 0.0
      %496 = vst.msk [vmem:[#allocation2 + $0x103] sm:$0x7] %vm471, 0.0
      %497 = vst.msk [vmem:[#allocation2 + $0x11b] sm:$0x7] %vm471, 0.0
      %498 = vst.msk [vmem:[#allocation2 + $0x133] sm:$0x7] %vm471, 0.0
      %499 = vst.msk [vmem:[#allocation2 + $0x14b] sm:$0x7] %vm471, 0.0
      %v500 = vld [vmem:[%s423] sm:$0xff]
      %v501 = vld [vmem:[%s423 + $0x8] sm:$0xff]
      %v502 = vld [vmem:[%s423 + $0x10] sm:$0xff]
      %v503 = vld [vmem:[%s423 + $0x18] sm:$0xff]
      %v504 = vld [vmem:[%s423 + $0x20] sm:$0xff]
      %v505 = vld [vmem:[%s423 + $0x28] sm:$0xff]
      %v506 = vld [vmem:[%s423 + $0x30] sm:$0xff]
      %v507 = vld [vmem:[%s423 + $0x38] sm:$0xff]
      %v508 = vld [vmem:[%s423 + $0x40] sm:$0xff]
      %v509 = vld [vmem:[%s423 + $0x48] sm:$0xff]
      %v510 = vld [vmem:[%s423 + $0x50] sm:$0xff]
      %v511 = vld [vmem:[%s423 + $0x58] sm:$0xff]
      %v512 = vld [vmem:[%s423 + $0x60] sm:$0xff]
      %v513 = vld [vmem:[%s423 + $0x68] sm:$0xff]
      %v514 = vld [vmem:[%s423 + $0x70] sm:$0xff]
      %v515 = vld [vmem:[%s423 + $0x78] sm:$0xff]
      %s516 = scalar_lea.vmem [#allocation2], 72
      %vm517 = vcmask 31744
      %518 = vst.msk [vmem:[%s516 + $0x3] sm:$0xff] %vm517, %v500
      %519 = vst.msk [vmem:[%s516 + $0xb] sm:$0xff] %vm517, %v501
      %520 = vst.msk [vmem:[%s516 + $0x1b] sm:$0xff] %vm517, %v502
      %521 = vst.msk [vmem:[%s516 + $0x23] sm:$0xff] %vm517, %v503
      %522 = vst.msk [vmem:[%s516 + $0x33] sm:$0xff] %vm517, %v504
      %523 = vst.msk [vmem:[%s516 + $0x3b] sm:$0xff] %vm517, %v505
      %524 = vst.msk [vmem:[%s516 + $0x4b] sm:$0xff] %vm517, %v506
      %525 = vst.msk [vmem:[%s516 + $0x53] sm:$0xff] %vm517, %v507
      %526 = vst.msk [vmem:[%s516 + $0x63] sm:$0xff] %vm517, %v508
      %527 = vst.msk [vmem:[%s516 + $0x6b] sm:$0xff] %vm517, %v509
      %528 = vst.msk [vmem:[%s516 + $0x7b] sm:$0xff] %vm517, %v510
      %529 = vst.msk [vmem:[%s516 + $0x83] sm:$0xff] %vm517, %v511
      %530 = vst.msk [vmem:[%s516 + $0x93] sm:$0xff] %vm517, %v512
      %531 = vst.msk [vmem:[%s516 + $0x9b] sm:$0xff] %vm517, %v513
      %532 = vst.msk [vmem:[%s516 + $0xab] sm:$0xff] %vm517, %v514
      %533 = vst.msk [vmem:[%s516 + $0xb3] sm:$0xff] %vm517, %v515
      %p534 = scmp.gt.s32.totalorder %s24, 0
      // Predicated region
      $region53: #{tpu_custom_call.1} parent=51 // pred_check
        %p535 = pneg %p534
      $region54: #{tpu_custom_call.1} parent=51 // pred_check_branch
        %537 = sbr.rel (%p535) target = $region56
      $region55: #{tpu_custom_call.1} parent=51 // pred_region
        %s538 = scalar_lea.vmem %s437, 80
        %v539 = vld [vmem:[%s538] sm:$0xff]
        %v540 = vld [vmem:[%s538 + $0x8] sm:$0xff]
        %v541 = vld [vmem:[%s538 + $0x10] sm:$0xff]
        %v542 = vld [vmem:[%s538 + $0x18] sm:$0xff]
        %v543 = vld [vmem:[%s538 + $0x20] sm:$0xff]
        %v544 = vld [vmem:[%s538 + $0x28] sm:$0xff]
        %545 = vst.msk [vmem:[#allocation2 + $0x3] sm:$0xff] %vm517, %v539
        %546 = vst.msk [vmem:[#allocation2 + $0xb] sm:$0xff] %vm517, %v540
        %547 = vst.msk [vmem:[#allocation2 + $0x1b] sm:$0xff] %vm517, %v541
        %548 = vst.msk [vmem:[#allocation2 + $0x23] sm:$0xff] %vm517, %v542
        %549 = vst.msk [vmem:[#allocation2 + $0x33] sm:$0xff] %vm517, %v543
        %550 = vst.msk [vmem:[#allocation2 + $0x3b] sm:$0xff] %vm517, %v544
      $region56: #{tpu_custom_call.1} parent=51 // pred_fallthru
        _
      %p551 = scmp.eq.s32.totalorder %s24, 0
      // Predicated region
      $region57: #{tpu_custom_call.1} parent=51 // pred_check
        %p552 = pneg %p551
      $region58: #{tpu_custom_call.1} parent=51 // pred_check_branch
        %554 = sbr.rel (%p552) target = $region60
      $region59: #{tpu_custom_call.1} parent=51 // pred_region
        %555 = vst.msk [vmem:[#allocation2 + $0x3] sm:$0xff] %vm517, 0.0
        %556 = vst.msk [vmem:[#allocation2 + $0xb] sm:$0xff] %vm517, 0.0
        %557 = vst.msk [vmem:[#allocation2 + $0x1b] sm:$0xff] %vm517, 0.0
        %558 = vst.msk [vmem:[#allocation2 + $0x23] sm:$0xff] %vm517, 0.0
        %559 = vst.msk [vmem:[#allocation2 + $0x33] sm:$0xff] %vm517, 0.0
        %560 = vst.msk [vmem:[#allocation2 + $0x3b] sm:$0xff] %vm517, 0.0
      $region60: #{tpu_custom_call.1} parent=51 // pred_fallthru
        _
      %p561 = scmp.lt.s32.totalorder %s24, 1
      // Predicated region
      $region61: #{tpu_custom_call.1} parent=51 // pred_check
        %p562 = pneg %p561
      $region62: #{tpu_custom_call.1} parent=51 // pred_check_branch
        %564 = sbr.rel (%p562) target = $region64
      $region63: #{tpu_custom_call.1} parent=51 // pred_region
        %v565 = vld [vmem:[%s454] sm:$0xff]
        %v566 = vld [vmem:[%s454 + $0x8] sm:$0xff]
        %v567 = vld [vmem:[%s454 + $0x10] sm:$0xff]
        %v568 = vld [vmem:[%s454 + $0x18] sm:$0xff]
        %v569 = vld [vmem:[%s454 + $0x20] sm:$0xff]
        %v570 = vld [vmem:[%s454 + $0x28] sm:$0xff]
        %s571 = scalar_lea.vmem [#allocation2], 264
        %572 = vst.msk [vmem:[%s571 + $0x3] sm:$0xff] %vm517, %v565
        %573 = vst.msk [vmem:[%s571 + $0xb] sm:$0xff] %vm517, %v566
        %574 = vst.msk [vmem:[%s571 + $0x1b] sm:$0xff] %vm517, %v567
        %575 = vst.msk [vmem:[%s571 + $0x23] sm:$0xff] %vm517, %v568
        %576 = vst.msk [vmem:[%s571 + $0x33] sm:$0xff] %vm517, %v569
        %577 = vst.msk [vmem:[%s571 + $0x3b] sm:$0xff] %vm517, %v570
      $region64: #{tpu_custom_call.1} parent=51 // pred_fallthru
        _
      %p578 = scmp.eq.s32.totalorder %s24, 1
      // Predicated region
      $region65: #{tpu_custom_call.1} parent=51 // pred_check
        %p579 = pneg %p578
      $region66: #{tpu_custom_call.1} parent=51 // pred_check_branch
        %581 = sbr.rel (%p579) target = $region68
      $region67: #{tpu_custom_call.1} parent=51 // pred_region
        %s582 = scalar_lea.vmem [#allocation2], 264
        %583 = vst.msk [vmem:[%s582 + $0x3] sm:$0xff] %vm517, 0.0
        %584 = vst.msk [vmem:[%s582 + $0xb] sm:$0xff] %vm517, 0.0
        %585 = vst.msk [vmem:[%s582 + $0x1b] sm:$0xff] %vm517, 0.0
        %586 = vst.msk [vmem:[%s582 + $0x23] sm:$0xff] %vm517, 0.0
        %587 = vst.msk [vmem:[%s582 + $0x33] sm:$0xff] %vm517, 0.0
        %588 = vst.msk [vmem:[%s582 + $0x3b] sm:$0xff] %vm517, 0.0
      $region68: #{tpu_custom_call.1} parent=51 // pred_fallthru
        _
      %v589 = vld [vmem:[#allocation2] sm:$0xff]
      %v590 = vld [vmem:[#allocation2 + $0x8] sm:$0xff]
      %v591 = vld [vmem:[#allocation2 + $0x10] sm:$0x3f]
      %v592 = vld [vmem:[#allocation2 + $0x18] sm:$0xff]
      %v593 = vld [vmem:[#allocation2 + $0x20] sm:$0xff]
      %v594 = vld [vmem:[#allocation2 + $0x28] sm:$0x3f]
      %v595 = vld [vmem:[#allocation2 + $0x30] sm:$0xff]
      %v596 = vld [vmem:[#allocation2 + $0x38] sm:$0xff]
      %v597 = vld [vmem:[#allocation2 + $0x40] sm:$0x3f]
      %v598 = vld [vmem:[#allocation2 + $0x48] sm:$0xff]
      %v599 = vld [vmem:[#allocation2 + $0x50] sm:$0xff]
      %v600 = vld [vmem:[#allocation2 + $0x58] sm:$0x3f]
      %v601 = vld [vmem:[#allocation2 + $0x60] sm:$0xff]
      %v602 = vld [vmem:[#allocation2 + $0x68] sm:$0xff]
      %v603 = vld [vmem:[#allocation2 + $0x70] sm:$0x3f]
      %v604 = vld [vmem:[#allocation2 + $0x78] sm:$0xff]
      %v605 = vld [vmem:[#allocation2 + $0x80] sm:$0xff]
      %v606 = vld [vmem:[#allocation2 + $0x88] sm:$0x3f]
      %v607 = vld [vmem:[#allocation2 + $0x90] sm:$0xff]
      %v608 = vld [vmem:[#allocation2 + $0x98] sm:$0xff]
      %v609 = vld [vmem:[#allocation2 + $0xa0] sm:$0x3f]
      %v610 = vld [vmem:[#allocation2 + $0xa8] sm:$0xff]
      %v611 = vld [vmem:[#allocation2 + $0xb0] sm:$0xff]
      %v612 = vld [vmem:[#allocation2 + $0xb8] sm:$0x3f]
      %v613 = vld [vmem:[#allocation2 + $0xc0] sm:$0xff]
      %v614 = vld [vmem:[#allocation2 + $0xc8] sm:$0xff]
      %v615 = vld [vmem:[#allocation2 + $0xd0] sm:$0x3f]
      %v616 = vld [vmem:[#allocation2 + $0xd8] sm:$0xff]
      %v617 = vld [vmem:[#allocation2 + $0xe0] sm:$0xff]
      %v618 = vld [vmem:[#allocation2 + $0xe8] sm:$0x3f]
      %v619 = vld [vmem:[#allocation2 + $0xf0] sm:$0xff]
      %v620 = vld [vmem:[#allocation2 + $0xf8] sm:$0xff]
      %v621 = vld [vmem:[#allocation2 + $0x100] sm:$0x3f]
      %v622 = vld [vmem:[#allocation2 + $0x108] sm:$0xff]
      %v623 = vld [vmem:[#allocation2 + $0x110] sm:$0xff]
      %v624 = vld [vmem:[#allocation2 + $0x118] sm:$0x3f]
      %v625 = vld [vmem:[#allocation2 + $0x120] sm:$0xff]
      %v626 = vld [vmem:[#allocation2 + $0x128] sm:$0xff]
      %v627 = vld [vmem:[#allocation2 + $0x130] sm:$0x3f]
      %v628 = vld [vmem:[#allocation2 + $0x138] sm:$0xff]
      %v629 = vld [vmem:[#allocation2 + $0x140] sm:$0xff]
      %v630 = vld [vmem:[#allocation2 + $0x148] sm:$0x3f]
      %v631 = vld [vmem:[%s3] sm:$0xff]
      %v632 = vld [vmem:[%s3 + $0x8] sm:$0xff]
      %v633 = vld [vmem:[%s3 + $0x10] sm:$0xff]
      %v634 = vld [vmem:[%s3 + $0x18] sm:$0xff]
      %v635 = vld [vmem:[%s3 + $0x20] sm:$0xff]
      %v636 = vld [vmem:[%s3 + $0x28] sm:$0xff]
      %v637 = vld [vmem:[%s3 + $0x30] sm:$0x1]
      %v638 = vlaneseq
      %v639 = vshrl.u32 %v638, 7
      %v640 = vsub.s32 0, %v639
      %v641 = vrot.slane %v631, %v640
      %v642 = vmul.f32 %v641, %v589
      %v643 = vmul.f32 %v641, %v590
      %v644 = vmul.f32 %v641, %v592
      %v645 = vmul.f32 %v641, %v593
      %v646 = vmul.f32 %v641, %v595
      %v647 = vmul.f32 %v641, %v596
      %v648 = vmul.f32 %v641, %v598
      %v649 = vmul.f32 %v641, %v599
      %v650 = vmul.f32 %v641, %v601
      %v651 = vmul.f32 %v641, %v602
      %v652 = vmul.f32 %v641, %v604
      %v653 = vmul.f32 %v641, %v605
      %v654 = vmul.f32 %v641, %v607
      %v655 = vmul.f32 %v641, %v608
      %v656 = vmul.f32 %v641, %v610
      %v657 = vmul.f32 %v641, %v611
      %v658 = vadd.f32 %v642, 0.0
      %v659 = vadd.f32 %v643, 0.0
      %v660 = vadd.f32 %v644, 0.0
      %v661 = vadd.f32 %v645, 0.0
      %v662 = vadd.f32 %v646, 0.0
      %v663 = vadd.f32 %v647, 0.0
      %v664 = vadd.f32 %v648, 0.0
      %v665 = vadd.f32 %v649, 0.0
      %v666 = vadd.f32 %v650, 0.0
      %v667 = vadd.f32 %v651, 0.0
      %v668 = vadd.f32 %v652, 0.0
      %v669 = vadd.f32 %v653, 0.0
      %v670 = vadd.f32 %v654, 0.0
      %v671 = vadd.f32 %v655, 0.0
      %v672 = vadd.f32 %v656, 0.0
      %v673 = vadd.f32 %v657, 0.0
      %v674 = vlaneseq
      %v675 = vshrl.u32 %v674, 7
      %v676 = vsub.s32 1, %v675
      %v677 = vrot.slane %v631, %v676
      %v678 = vmul.f32 %v677, %v589
      %v679 = vmul.f32 %v677, %v590
      %v680 = vmul.f32 %v677, %v591
      %v681 = vmul.f32 %v677, %v592
      %v682 = vmul.f32 %v677, %v593
      %v683 = vmul.f32 %v677, %v594
      %v684 = vmul.f32 %v677, %v595
      %v685 = vmul.f32 %v677, %v596
      %v686 = vmul.f32 %v677, %v597
      %v687 = vmul.f32 %v677, %v598
      %v688 = vmul.f32 %v677, %v599
      %v689 = vmul.f32 %v677, %v600
      %v690 = vmul.f32 %v677, %v601
      %v691 = vmul.f32 %v677, %v602
      %v692 = vmul.f32 %v677, %v603
      %v693 = vmul.f32 %v677, %v604
      %v694 = vmul.f32 %v677, %v605
      %v695 = vmul.f32 %v677, %v606
      %v696 = vmul.f32 %v677, %v607
      %v697 = vmul.f32 %v677, %v608
      %v698 = vmul.f32 %v677, %v609
      %v699 = vmul.f32 %v677, %v610
      %v700 = vmul.f32 %v677, %v611
      %v701 = vmul.f32 %v677, %v612
      %vm726 = vcmask 1046528
      %v727 = vrot.slane %v678, 1
      %v728 = vrot.slane %v679, 1
      %v729 = vsel %vm726, %v727, %v728
      %v730 = vrot.slane %v680, 1
      %v731 = vsel %vm726, %v728, %v730
      %v732 = vrot.slane %v681, 1
      %v733 = vrot.slane %v682, 1
      %v734 = vsel %vm726, %v732, %v733
      %v735 = vrot.slane %v683, 1
      %v736 = vsel %vm726, %v733, %v735
      %v737 = vrot.slane %v684, 1
      %v738 = vrot.slane %v685, 1
      %v739 = vsel %vm726, %v737, %v738
      %v740 = vrot.slane %v686, 1
      %v741 = vsel %vm726, %v738, %v740
      %v742 = vrot.slane %v687, 1
      %v743 = vrot.slane %v688, 1
      %v744 = vsel %vm726, %v742, %v743
      %v745 = vrot.slane %v689, 1
      %v746 = vsel %vm726, %v743, %v745
      %v747 = vrot.slane %v690, 1
      %v748 = vrot.slane %v691, 1
      %v749 = vsel %vm726, %v747, %v748
      %v750 = vrot.slane %v692, 1
      %v751 = vsel %vm726, %v748, %v750
      %v752 = vrot.slane %v693, 1
      %v753 = vrot.slane %v694, 1
      %v754 = vsel %vm726, %v752, %v753
      %v755 = vrot.slane %v695, 1
      %v756 = vsel %vm726, %v753, %v755
      %v757 = vrot.slane %v696, 1
      %v758 = vrot.slane %v697, 1
      %v759 = vsel %vm726, %v757, %v758
      %v760 = vrot.slane %v698, 1
      %v761 = vsel %vm726, %v758, %v760
      %v762 = vrot.slane %v699, 1
      %v763 = vrot.slane %v700, 1
      %v764 = vsel %vm726, %v762, %v763
      %v765 = vrot.slane %v701, 1
      %v766 = vsel %vm726, %v763, %v765
      %v783 = vadd.f32 %v658, %v729
      %v784 = vadd.f32 %v659, %v731
      %v785 = vadd.f32 %v660, %v734
      %v786 = vadd.f32 %v661, %v736
      %v787 = vadd.f32 %v662, %v739
      %v788 = vadd.f32 %v663, %v741
      %v789 = vadd.f32 %v664, %v744
      %v790 = vadd.f32 %v665, %v746
      %v791 = vadd.f32 %v666, %v749
      %v792 = vadd.f32 %v667, %v751
      %v793 = vadd.f32 %v668, %v754
      %v794 = vadd.f32 %v669, %v756
      %v795 = vadd.f32 %v670, %v759
      %v796 = vadd.f32 %v671, %v761
      %v797 = vadd.f32 %v672, %v764
      %v798 = vadd.f32 %v673, %v766
      %v799 = vlaneseq
      %v800 = vshrl.u32 %v799, 7
      %v801 = vsub.s32 2, %v800
      %v802 = vrot.slane %v631, %v801
      %v803 = vmul.f32 %v802, %v589
      %v804 = vmul.f32 %v802, %v590
      %v805 = vmul.f32 %v802, %v591
      %v806 = vmul.f32 %v802, %v592
      %v807 = vmul.f32 %v802, %v593
      %v808 = vmul.f32 %v802, %v594
      %v809 = vmul.f32 %v802, %v595
      %v810 = vmul.f32 %v802, %v596
      %v811 = vmul.f32 %v802, %v597
      %v812 = vmul.f32 %v802, %v598
      %v813 = vmul.f32 %v802, %v599
      %v814 = vmul.f32 %v802, %v600
      %v815 = vmul.f32 %v802, %v601
      %v816 = vmul.f32 %v802, %v602
      %v817 = vmul.f32 %v802, %v603
      %v818 = vmul.f32 %v802, %v604
      %v819 = vmul.f32 %v802, %v605
      %v820 = vmul.f32 %v802, %v606
      %v821 = vmul.f32 %v802, %v607
      %v822 = vmul.f32 %v802, %v608
      %v823 = vmul.f32 %v802, %v609
      %v824 = vmul.f32 %v802, %v610
      %v825 = vmul.f32 %v802, %v611
      %v826 = vmul.f32 %v802, %v612
      %vm851 = vcmask 1045504
      %v852 = vrot.slane %v803, 2
      %v853 = vrot.slane %v804, 2
      %v854 = vsel %vm851, %v852, %v853
      %v855 = vrot.slane %v805, 2
      %v856 = vsel %vm851, %v853, %v855
      %v857 = vrot.slane %v806, 2
      %v858 = vrot.slane %v807, 2
      %v859 = vsel %vm851, %v857, %v858
      %v860 = vrot.slane %v808, 2
      %v861 = vsel %vm851, %v858, %v860
      %v862 = vrot.slane %v809, 2
      %v863 = vrot.slane %v810, 2
      %v864 = vsel %vm851, %v862, %v863
      %v865 = vrot.slane %v811, 2
      %v866 = vsel %vm851, %v863, %v865
      %v867 = vrot.slane %v812, 2
      %v868 = vrot.slane %v813, 2
      %v869 = vsel %vm851, %v867, %v868
      %v870 = vrot.slane %v814, 2
      %v871 = vsel %vm851, %v868, %v870
      %v872 = vrot.slane %v815, 2
      %v873 = vrot.slane %v816, 2
      %v874 = vsel %vm851, %v872, %v873
      %v875 = vrot.slane %v817, 2
      %v876 = vsel %vm851, %v873, %v875
      %v877 = vrot.slane %v818, 2
      %v878 = vrot.slane %v819, 2
      %v879 = vsel %vm851, %v877, %v878
      %v880 = vrot.slane %v820, 2
      %v881 = vsel %vm851, %v878, %v880
      %v882 = vrot.slane %v821, 2
      %v883 = vrot.slane %v822, 2
      %v884 = vsel %vm851, %v882, %v883
      %v885 = vrot.slane %v823, 2
      %v886 = vsel %vm851, %v883, %v885
      %v887 = vrot.slane %v824, 2
      %v888 = vrot.slane %v825, 2
      %v889 = vsel %vm851, %v887, %v888
      %v890 = vrot.slane %v826, 2
      %v891 = vsel %vm851, %v888, %v890
      %v908 = vadd.f32 %v783, %v854
      %v909 = vadd.f32 %v784, %v856
      %v910 = vadd.f32 %v785, %v859
      %v911 = vadd.f32 %v786, %v861
      %v912 = vadd.f32 %v787, %v864
      %v913 = vadd.f32 %v788, %v866
      %v914 = vadd.f32 %v789, %v869
      %v915 = vadd.f32 %v790, %v871
      %v916 = vadd.f32 %v791, %v874
      %v917 = vadd.f32 %v792, %v876
      %v918 = vadd.f32 %v793, %v879
      %v919 = vadd.f32 %v794, %v881
      %v920 = vadd.f32 %v795, %v884
      %v921 = vadd.f32 %v796, %v886
      %v922 = vadd.f32 %v797, %v889
      %v923 = vadd.f32 %v798, %v891
      %v924 = vlaneseq
      %v925 = vshrl.u32 %v924, 7
      %v926 = vsub.s32 3, %v925
      %v927 = vrot.slane %v631, %v926
      %v928 = vmul.f32 %v927, %v589
      %v929 = vmul.f32 %v927, %v590
      %v930 = vmul.f32 %v927, %v591
      %v931 = vmul.f32 %v927, %v592
      %v932 = vmul.f32 %v927, %v593
      %v933 = vmul.f32 %v927, %v594
      %v934 = vmul.f32 %v927, %v595
      %v935 = vmul.f32 %v927, %v596
      %v936 = vmul.f32 %v927, %v597
      %v937 = vmul.f32 %v927, %v598
      %v938 = vmul.f32 %v927, %v599
      %v939 = vmul.f32 %v927, %v600
      %v940 = vmul.f32 %v927, %v601
      %v941 = vmul.f32 %v927, %v602
      %v942 = vmul.f32 %v927, %v603
      %v943 = vmul.f32 %v927, %v604
      %v944 = vmul.f32 %v927, %v605
      %v945 = vmul.f32 %v927, %v606
      %v946 = vmul.f32 %v927, %v607
      %v947 = vmul.f32 %v927, %v608
      %v948 = vmul.f32 %v927, %v609
      %v949 = vmul.f32 %v927, %v610
      %v950 = vmul.f32 %v927, %v611
      %v951 = vmul.f32 %v927, %v612
      %vm976 = vcmask 1044480
      %v977 = vrot.slane %v928, 3
      %v978 = vrot.slane %v929, 3
      %v979 = vsel %vm976, %v977, %v978
      %v980 = vrot.slane %v930, 3
      %v981 = vsel %vm976, %v978, %v980
      %v982 = vrot.slane %v931, 3
      %v983 = vrot.slane %v932, 3
      %v984 = vsel %vm976, %v982, %v983
      %v985 = vrot.slane %v933, 3
      %v986 = vsel %vm976, %v983, %v985
      %v987 = vrot.slane %v934, 3
      %v988 = vrot.slane %v935, 3
      %v989 = vsel %vm976, %v987, %v988
      %v990 = vrot.slane %v936, 3
      %v991 = vsel %vm976, %v988, %v990
      %v992 = vrot.slane %v937, 3
      %v993 = vrot.slane %v938, 3
      %v994 = vsel %vm976, %v992, %v993
      %v995 = vrot.slane %v939, 3
      %v996 = vsel %vm976, %v993, %v995
      %v997 = vrot.slane %v940, 3
      %v998 = vrot.slane %v941, 3
      %v999 = vsel %vm976, %v997, %v998
      %v1000 = vrot.slane %v942, 3
      %v1001 = vsel %vm976, %v998, %v1000
      %v1002 = vrot.slane %v943, 3
      %v1003 = vrot.slane %v944, 3
      %v1004 = vsel %vm976, %v1002, %v1003
      %v1005 = vrot.slane %v945, 3
      %v1006 = vsel %vm976, %v1003, %v1005
      %v1007 = vrot.slane %v946, 3
      %v1008 = vrot.slane %v947, 3
      %v1009 = vsel %vm976, %v1007, %v1008
      %v1010 = vrot.slane %v948, 3
      %v1011 = vsel %vm976, %v1008, %v1010
      %v1012 = vrot.slane %v949, 3
      %v1013 = vrot.slane %v950, 3
      %v1014 = vsel %vm976, %v1012, %v1013
      %v1015 = vrot.slane %v951, 3
      %v1016 = vsel %vm976, %v1013, %v1015
      %v1033 = vadd.f32 %v908, %v979
      %v1034 = vadd.f32 %v909, %v981
      %v1035 = vadd.f32 %v910, %v984
      %v1036 = vadd.f32 %v911, %v986
      %v1037 = vadd.f32 %v912, %v989
      %v1038 = vadd.f32 %v913, %v991
      %v1039 = vadd.f32 %v914, %v994
      %v1040 = vadd.f32 %v915, %v996
      %v1041 = vadd.f32 %v916, %v999
      %v1042 = vadd.f32 %v917, %v1001
      %v1043 = vadd.f32 %v918, %v1004
      %v1044 = vadd.f32 %v919, %v1006
      %v1045 = vadd.f32 %v920, %v1009
      %v1046 = vadd.f32 %v921, %v1011
      %v1047 = vadd.f32 %v922, %v1014
      %v1048 = vadd.f32 %v923, %v1016
      %v1049 = vlaneseq
      %v1050 = vshrl.u32 %v1049, 7
      %v1051 = vsub.s32 4, %v1050
      %v1052 = vrot.slane %v631, %v1051
      %v1053 = vmul.f32 %v1052, %v589
      %v1054 = vmul.f32 %v1052, %v590
      %v1055 = vmul.f32 %v1052, %v591
      %v1056 = vmul.f32 %v1052, %v592
      %v1057 = vmul.f32 %v1052, %v593
      %v1058 = vmul.f32 %v1052, %v594
      %v1059 = vmul.f32 %v1052, %v595
      %v1060 = vmul.f32 %v1052, %v596
      %v1061 = vmul.f32 %v1052, %v597
      %v1062 = vmul.f32 %v1052, %v598
      %v1063 = vmul.f32 %v1052, %v599
      %v1064 = vmul.f32 %v1052, %v600
      %v1065 = vmul.f32 %v1052, %v601
      %v1066 = vmul.f32 %v1052, %v602
      %v1067 = vmul.f32 %v1052, %v603
      %v1068 = vmul.f32 %v1052, %v604
      %v1069 = vmul.f32 %v1052, %v605
      %v1070 = vmul.f32 %v1052, %v606
      %v1071 = vmul.f32 %v1052, %v607
      %v1072 = vmul.f32 %v1052, %v608
      %v1073 = vmul.f32 %v1052, %v609
      %v1074 = vmul.f32 %v1052, %v610
      %v1075 = vmul.f32 %v1052, %v611
      %v1076 = vmul.f32 %v1052, %v612
      %vm1101 = vcmask 1043456
      %v1102 = vrot.slane %v1053, 4
      %v1103 = vrot.slane %v1054, 4
      %v1104 = vsel %vm1101, %v1102, %v1103
      %v1105 = vrot.slane %v1055, 4
      %v1106 = vsel %vm1101, %v1103, %v1105
      %v1107 = vrot.slane %v1056, 4
      %v1108 = vrot.slane %v1057, 4
      %v1109 = vsel %vm1101, %v1107, %v1108
      %v1110 = vrot.slane %v1058, 4
      %v1111 = vsel %vm1101, %v1108, %v1110
      %v1112 = vrot.slane %v1059, 4
      %v1113 = vrot.slane %v1060, 4
      %v1114 = vsel %vm1101, %v1112, %v1113
      %v1115 = vrot.slane %v1061, 4
      %v1116 = vsel %vm1101, %v1113, %v1115
      %v1117 = vrot.slane %v1062, 4
      %v1118 = vrot.slane %v1063, 4
      %v1119 = vsel %vm1101, %v1117, %v1118
      %v1120 = vrot.slane %v1064, 4
      %v1121 = vsel %vm1101, %v1118, %v1120
      %v1122 = vrot.slane %v1065, 4
      %v1123 = vrot.slane %v1066, 4
      %v1124 = vsel %vm1101, %v1122, %v1123
      %v1125 = vrot.slane %v1067, 4
      %v1126 = vsel %vm1101, %v1123, %v1125
      %v1127 = vrot.slane %v1068, 4
      %v1128 = vrot.slane %v1069, 4
      %v1129 = vsel %vm1101, %v1127, %v1128
      %v1130 = vrot.slane %v1070, 4
      %v1131 = vsel %vm1101, %v1128, %v1130
      %v1132 = vrot.slane %v1071, 4
      %v1133 = vrot.slane %v1072, 4
      %v1134 = vsel %vm1101, %v1132, %v1133
      %v1135 = vrot.slane %v1073, 4
      %v1136 = vsel %vm1101, %v1133, %v1135
      %v1137 = vrot.slane %v1074, 4
      %v1138 = vrot.slane %v1075, 4
      %v1139 = vsel %vm1101, %v1137, %v1138
      %v1140 = vrot.slane %v1076, 4
      %v1141 = vsel %vm1101, %v1138, %v1140
      %v1158 = vadd.f32 %v1033, %v1104
      %v1159 = vadd.f32 %v1034, %v1106
      %v1160 = vadd.f32 %v1035, %v1109
      %v1161 = vadd.f32 %v1036, %v1111
      %v1162 = vadd.f32 %v1037, %v1114
      %v1163 = vadd.f32 %v1038, %v1116
      %v1164 = vadd.f32 %v1039, %v1119
      %v1165 = vadd.f32 %v1040, %v1121
      %v1166 = vadd.f32 %v1041, %v1124
      %v1167 = vadd.f32 %v1042, %v1126
      %v1168 = vadd.f32 %v1043, %v1129
      %v1169 = vadd.f32 %v1044, %v1131
      %v1170 = vadd.f32 %v1045, %v1134
      %v1171 = vadd.f32 %v1046, %v1136
      %v1172 = vadd.f32 %v1047, %v1139
      %v1173 = vadd.f32 %v1048, %v1141
      %v1174 = vlaneseq
      %v1175 = vshrl.u32 %v1174, 7
      %v1176 = vsub.s32 5, %v1175
      %v1177 = vrot.slane %v631, %v1176
      %v1178 = vmul.f32 %v1177, %v589
      %v1179 = vmul.f32 %v1177, %v590
      %v1180 = vmul.f32 %v1177, %v591
      %v1181 = vmul.f32 %v1177, %v592
      %v1182 = vmul.f32 %v1177, %v593
      %v1183 = vmul.f32 %v1177, %v594
      %v1184 = vmul.f32 %v1177, %v595
      %v1185 = vmul.f32 %v1177, %v596
      %v1186 = vmul.f32 %v1177, %v597
      %v1187 = vmul.f32 %v1177, %v598
      %v1188 = vmul.f32 %v1177, %v599
      %v1189 = vmul.f32 %v1177, %v600
      %v1190 = vmul.f32 %v1177, %v601
      %v1191 = vmul.f32 %v1177, %v602
      %v1192 = vmul.f32 %v1177, %v603
      %v1193 = vmul.f32 %v1177, %v604
      %v1194 = vmul.f32 %v1177, %v605
      %v1195 = vmul.f32 %v1177, %v606
      %v1196 = vmul.f32 %v1177, %v607
      %v1197 = vmul.f32 %v1177, %v608
      %v1198 = vmul.f32 %v1177, %v609
      %v1199 = vmul.f32 %v1177, %v610
      %v1200 = vmul.f32 %v1177, %v611
      %v1201 = vmul.f32 %v1177, %v612
      %vm1226 = vcmask 1042432
      %v1227 = vrot.slane %v1178, 5
      %v1228 = vrot.slane %v1179, 5
      %v1229 = vsel %vm1226, %v1227, %v1228
      %v1230 = vrot.slane %v1180, 5
      %v1231 = vsel %vm1226, %v1228, %v1230
      %v1232 = vrot.slane %v1181, 5
      %v1233 = vrot.slane %v1182, 5
      %v1234 = vsel %vm1226, %v1232, %v1233
      %v1235 = vrot.slane %v1183, 5
      %v1236 = vsel %vm1226, %v1233, %v1235
      %v1237 = vrot.slane %v1184, 5
      %v1238 = vrot.slane %v1185, 5
      %v1239 = vsel %vm1226, %v1237, %v1238
      %v1240 = vrot.slane %v1186, 5
      %v1241 = vsel %vm1226, %v1238, %v1240
      %v1242 = vrot.slane %v1187, 5
      %v1243 = vrot.slane %v1188, 5
      %v1244 = vsel %vm1226, %v1242, %v1243
      %v1245 = vrot.slane %v1189, 5
      %v1246 = vsel %vm1226, %v1243, %v1245
      %v1247 = vrot.slane %v1190, 5
      %v1248 = vrot.slane %v1191, 5
      %v1249 = vsel %vm1226, %v1247, %v1248
      %v1250 = vrot.slane %v1192, 5
      %v1251 = vsel %vm1226, %v1248, %v1250
      %v1252 = vrot.slane %v1193, 5
      %v1253 = vrot.slane %v1194, 5
      %v1254 = vsel %vm1226, %v1252, %v1253
      %v1255 = vrot.slane %v1195, 5
      %v1256 = vsel %vm1226, %v1253, %v1255
      %v1257 = vrot.slane %v1196, 5
      %v1258 = vrot.slane %v1197, 5
      %v1259 = vsel %vm1226, %v1257, %v1258
      %v1260 = vrot.slane %v1198, 5
      %v1261 = vsel %vm1226, %v1258, %v1260
      %v1262 = vrot.slane %v1199, 5
      %v1263 = vrot.slane %v1200, 5
      %v1264 = vsel %vm1226, %v1262, %v1263
      %v1265 = vrot.slane %v1201, 5
      %v1266 = vsel %vm1226, %v1263, %v1265
      %v1283 = vadd.f32 %v1158, %v1229
      %v1284 = vadd.f32 %v1159, %v1231
      %v1285 = vadd.f32 %v1160, %v1234
      %v1286 = vadd.f32 %v1161, %v1236
      %v1287 = vadd.f32 %v1162, %v1239
      %v1288 = vadd.f32 %v1163, %v1241
      %v1289 = vadd.f32 %v1164, %v1244
      %v1290 = vadd.f32 %v1165, %v1246
      %v1291 = vadd.f32 %v1166, %v1249
      %v1292 = vadd.f32 %v1167, %v1251
      %v1293 = vadd.f32 %v1168, %v1254
      %v1294 = vadd.f32 %v1169, %v1256
      %v1295 = vadd.f32 %v1170, %v1259
      %v1296 = vadd.f32 %v1171, %v1261
      %v1297 = vadd.f32 %v1172, %v1264
      %v1298 = vadd.f32 %v1173, %v1266
      %v1299 = vlaneseq
      %v1300 = vshrl.u32 %v1299, 7
      %v1301 = vsub.s32 6, %v1300
      %v1302 = vrot.slane %v631, %v1301
      %v1303 = vmul.f32 %v1302, %v589
      %v1304 = vmul.f32 %v1302, %v590
      %v1305 = vmul.f32 %v1302, %v591
      %v1306 = vmul.f32 %v1302, %v592
      %v1307 = vmul.f32 %v1302, %v593
      %v1308 = vmul.f32 %v1302, %v594
      %v1309 = vmul.f32 %v1302, %v595
      %v1310 = vmul.f32 %v1302, %v596
      %v1311 = vmul.f32 %v1302, %v597
      %v1312 = vmul.f32 %v1302, %v598
      %v1313 = vmul.f32 %v1302, %v599
      %v1314 = vmul.f32 %v1302, %v600
      %v1315 = vmul.f32 %v1302, %v601
      %v1316 = vmul.f32 %v1302, %v602
      %v1317 = vmul.f32 %v1302, %v603
      %v1318 = vmul.f32 %v1302, %v604
      %v1319 = vmul.f32 %v1302, %v605
      %v1320 = vmul.f32 %v1302, %v606
      %v1321 = vmul.f32 %v1302, %v607
      %v1322 = vmul.f32 %v1302, %v608
      %v1323 = vmul.f32 %v1302, %v609
      %v1324 = vmul.f32 %v1302, %v610
      %v1325 = vmul.f32 %v1302, %v611
      %v1326 = vmul.f32 %v1302, %v612
      %vm1351 = vcmask 1041408
      %v1352 = vrot.slane %v1303, 6
      %v1353 = vrot.slane %v1304, 6
      %v1354 = vsel %vm1351, %v1352, %v1353
      %v1355 = vrot.slane %v1305, 6
      %v1356 = vsel %vm1351, %v1353, %v1355
      %v1357 = vrot.slane %v1306, 6
      %v1358 = vrot.slane %v1307, 6
      %v1359 = vsel %vm1351, %v1357, %v1358
      %v1360 = vrot.slane %v1308, 6
      %v1361 = vsel %vm1351, %v1358, %v1360
      %v1362 = vrot.slane %v1309, 6
      %v1363 = vrot.slane %v1310, 6
      %v1364 = vsel %vm1351, %v1362, %v1363
      %v1365 = vrot.slane %v1311, 6
      %v1366 = vsel %vm1351, %v1363, %v1365
      %v1367 = vrot.slane %v1312, 6
      %v1368 = vrot.slane %v1313, 6
      %v1369 = vsel %vm1351, %v1367, %v1368
      %v1370 = vrot.slane %v1314, 6
      %v1371 = vsel %vm1351, %v1368, %v1370
      %v1372 = vrot.slane %v1315, 6
      %v1373 = vrot.slane %v1316, 6
      %v1374 = vsel %vm1351, %v1372, %v1373
      %v1375 = vrot.slane %v1317, 6
      %v1376 = vsel %vm1351, %v1373, %v1375
      %v1377 = vrot.slane %v1318, 6
      %v1378 = vrot.slane %v1319, 6
      %v1379 = vsel %vm1351, %v1377, %v1378
      %v1380 = vrot.slane %v1320, 6
      %v1381 = vsel %vm1351, %v1378, %v1380
      %v1382 = vrot.slane %v1321, 6
      %v1383 = vrot.slane %v1322, 6
      %v1384 = vsel %vm1351, %v1382, %v1383
      %v1385 = vrot.slane %v1323, 6
      %v1386 = vsel %vm1351, %v1383, %v1385
      %v1387 = vrot.slane %v1324, 6
      %v1388 = vrot.slane %v1325, 6
      %v1389 = vsel %vm1351, %v1387, %v1388
      %v1390 = vrot.slane %v1326, 6
      %v1391 = vsel %vm1351, %v1388, %v1390
      %v1408 = vadd.f32 %v1283, %v1354
      %v1409 = vadd.f32 %v1284, %v1356
      %v1410 = vadd.f32 %v1285, %v1359
      %v1411 = vadd.f32 %v1286, %v1361
      %v1412 = vadd.f32 %v1287, %v1364
      %v1413 = vadd.f32 %v1288, %v1366
      %v1414 = vadd.f32 %v1289, %v1369
      %v1415 = vadd.f32 %v1290, %v1371
      %v1416 = vadd.f32 %v1291, %v1374
      %v1417 = vadd.f32 %v1292, %v1376
      %v1418 = vadd.f32 %v1293, %v1379
      %v1419 = vadd.f32 %v1294, %v1381
      %v1420 = vadd.f32 %v1295, %v1384
      %v1421 = vadd.f32 %v1296, %v1386
      %v1422 = vadd.f32 %v1297, %v1389
      %v1423 = vadd.f32 %v1298, %v1391
      %v1424 = vlaneseq
      %v1425 = vshrl.u32 %v1424, 7
      %v1426 = vsub.s32 7, %v1425
      %v1427 = vrot.slane %v631, %v1426
      %v1428 = vmul.f32 %v1427, %v592
      %v1429 = vmul.f32 %v1427, %v593
      %v1430 = vmul.f32 %v1427, %v595
      %v1431 = vmul.f32 %v1427, %v596
      %v1432 = vmul.f32 %v1427, %v598
      %v1433 = vmul.f32 %v1427, %v599
      %v1434 = vmul.f32 %v1427, %v601
      %v1435 = vmul.f32 %v1427, %v602
      %v1436 = vmul.f32 %v1427, %v604
      %v1437 = vmul.f32 %v1427, %v605
      %v1438 = vmul.f32 %v1427, %v607
      %v1439 = vmul.f32 %v1427, %v608
      %v1440 = vmul.f32 %v1427, %v610
      %v1441 = vmul.f32 %v1427, %v611
      %v1442 = vmul.f32 %v1427, %v613
      %v1443 = vmul.f32 %v1427, %v614
      %v1444 = vadd.f32 %v1408, %v1428
      %v1445 = vadd.f32 %v1409, %v1429
      %v1446 = vadd.f32 %v1410, %v1430
      %v1447 = vadd.f32 %v1411, %v1431
      %v1448 = vadd.f32 %v1412, %v1432
      %v1449 = vadd.f32 %v1413, %v1433
      %v1450 = vadd.f32 %v1414, %v1434
      %v1451 = vadd.f32 %v1415, %v1435
      %v1452 = vadd.f32 %v1416, %v1436
      %v1453 = vadd.f32 %v1417, %v1437
      %v1454 = vadd.f32 %v1418, %v1438
      %v1455 = vadd.f32 %v1419, %v1439
      %v1456 = vadd.f32 %v1420, %v1440
      %v1457 = vadd.f32 %v1421, %v1441
      %v1458 = vadd.f32 %v1422, %v1442
      %v1459 = vadd.f32 %v1423, %v1443
      %v1460 = vlaneseq
      %v1461 = vshrl.u32 %v1460, 7
      %v1462 = vsub.s32 0, %v1461
      %v1463 = vrot.slane %v632, %v1462
      %v1464 = vmul.f32 %v1463, %v592
      %v1465 = vmul.f32 %v1463, %v593
      %v1466 = vmul.f32 %v1463, %v594
      %v1467 = vmul.f32 %v1463, %v595
      %v1468 = vmul.f32 %v1463, %v596
      %v1469 = vmul.f32 %v1463, %v597
      %v1470 = vmul.f32 %v1463, %v598
      %v1471 = vmul.f32 %v1463, %v599
      %v1472 = vmul.f32 %v1463, %v600
      %v1473 = vmul.f32 %v1463, %v601
      %v1474 = vmul.f32 %v1463, %v602
      %v1475 = vmul.f32 %v1463, %v603
      %v1476 = vmul.f32 %v1463, %v604
      %v1477 = vmul.f32 %v1463, %v605
      %v1478 = vmul.f32 %v1463, %v606
      %v1479 = vmul.f32 %v1463, %v607
      %v1480 = vmul.f32 %v1463, %v608
      %v1481 = vmul.f32 %v1463, %v609
      %v1482 = vmul.f32 %v1463, %v610
      %v1483 = vmul.f32 %v1463, %v611
      %v1484 = vmul.f32 %v1463, %v612
      %v1485 = vmul.f32 %v1463, %v613
      %v1486 = vmul.f32 %v1463, %v614
      %v1487 = vmul.f32 %v1463, %v615
      %v1512 = vrot.slane %v1464, 1
      %v1513 = vrot.slane %v1465, 1
      %v1514 = vsel %vm726, %v1512, %v1513
      %v1515 = vrot.slane %v1466, 1
      %v1516 = vsel %vm726, %v1513, %v1515
      %v1517 = vrot.slane %v1467, 1
      %v1518 = vrot.slane %v1468, 1
      %v1519 = vsel %vm726, %v1517, %v1518
      %v1520 = vrot.slane %v1469, 1
      %v1521 = vsel %vm726, %v1518, %v1520
      %v1522 = vrot.slane %v1470, 1
      %v1523 = vrot.slane %v1471, 1
      %v1524 = vsel %vm726, %v1522, %v1523
      %v1525 = vrot.slane %v1472, 1
      %v1526 = vsel %vm726, %v1523, %v1525
      %v1527 = vrot.slane %v1473, 1
      %v1528 = vrot.slane %v1474, 1
      %v1529 = vsel %vm726, %v1527, %v1528
      %v1530 = vrot.slane %v1475, 1
      %v1531 = vsel %vm726, %v1528, %v1530
      %v1532 = vrot.slane %v1476, 1
      %v1533 = vrot.slane %v1477, 1
      %v1534 = vsel %vm726, %v1532, %v1533
      %v1535 = vrot.slane %v1478, 1
      %v1536 = vsel %vm726, %v1533, %v1535
      %v1537 = vrot.slane %v1479, 1
      %v1538 = vrot.slane %v1480, 1
      %v1539 = vsel %vm726, %v1537, %v1538
      %v1540 = vrot.slane %v1481, 1
      %v1541 = vsel %vm726, %v1538, %v1540
      %v1542 = vrot.slane %v1482, 1
      %v1543 = vrot.slane %v1483, 1
      %v1544 = vsel %vm726, %v1542, %v1543
      %v1545 = vrot.slane %v1484, 1
      %v1546 = vsel %vm726, %v1543, %v1545
      %v1547 = vrot.slane %v1485, 1
      %v1548 = vrot.slane %v1486, 1
      %v1549 = vsel %vm726, %v1547, %v1548
      %v1550 = vrot.slane %v1487, 1
      %v1551 = vsel %vm726, %v1548, %v1550
      %v1568 = vadd.f32 %v1444, %v1514
      %v1569 = vadd.f32 %v1445, %v1516
      %v1570 = vadd.f32 %v1446, %v1519
      %v1571 = vadd.f32 %v1447, %v1521
      %v1572 = vadd.f32 %v1448, %v1524
      %v1573 = vadd.f32 %v1449, %v1526
      %v1574 = vadd.f32 %v1450, %v1529
      %v1575 = vadd.f32 %v1451, %v1531
      %v1576 = vadd.f32 %v1452, %v1534
      %v1577 = vadd.f32 %v1453, %v1536
      %v1578 = vadd.f32 %v1454, %v1539
      %v1579 = vadd.f32 %v1455, %v1541
      %v1580 = vadd.f32 %v1456, %v1544
      %v1581 = vadd.f32 %v1457, %v1546
      %v1582 = vadd.f32 %v1458, %v1549
      %v1583 = vadd.f32 %v1459, %v1551
      %v1584 = vlaneseq
      %v1585 = vshrl.u32 %v1584, 7
      %v1586 = vsub.s32 1, %v1585
      %v1587 = vrot.slane %v632, %v1586
      %v1588 = vmul.f32 %v1587, %v592
      %v1589 = vmul.f32 %v1587, %v593
      %v1590 = vmul.f32 %v1587, %v594
      %v1591 = vmul.f32 %v1587, %v595
      %v1592 = vmul.f32 %v1587, %v596
      %v1593 = vmul.f32 %v1587, %v597
      %v1594 = vmul.f32 %v1587, %v598
      %v1595 = vmul.f32 %v1587, %v599
      %v1596 = vmul.f32 %v1587, %v600
      %v1597 = vmul.f32 %v1587, %v601
      %v1598 = vmul.f32 %v1587, %v602
      %v1599 = vmul.f32 %v1587, %v603
      %v1600 = vmul.f32 %v1587, %v604
      %v1601 = vmul.f32 %v1587, %v605
      %v1602 = vmul.f32 %v1587, %v606
      %v1603 = vmul.f32 %v1587, %v607
      %v1604 = vmul.f32 %v1587, %v608
      %v1605 = vmul.f32 %v1587, %v609
      %v1606 = vmul.f32 %v1587, %v610
      %v1607 = vmul.f32 %v1587, %v611
      %v1608 = vmul.f32 %v1587, %v612
      %v1609 = vmul.f32 %v1587, %v613
      %v1610 = vmul.f32 %v1587, %v614
      %v1611 = vmul.f32 %v1587, %v615
      %v1636 = vrot.slane %v1588, 2
      %v1637 = vrot.slane %v1589, 2
      %v1638 = vsel %vm851, %v1636, %v1637
      %v1639 = vrot.slane %v1590, 2
      %v1640 = vsel %vm851, %v1637, %v1639
      %v1641 = vrot.slane %v1591, 2
      %v1642 = vrot.slane %v1592, 2
      %v1643 = vsel %vm851, %v1641, %v1642
      %v1644 = vrot.slane %v1593, 2
      %v1645 = vsel %vm851, %v1642, %v1644
      %v1646 = vrot.slane %v1594, 2
      %v1647 = vrot.slane %v1595, 2
      %v1648 = vsel %vm851, %v1646, %v1647
      %v1649 = vrot.slane %v1596, 2
      %v1650 = vsel %vm851, %v1647, %v1649
      %v1651 = vrot.slane %v1597, 2
      %v1652 = vrot.slane %v1598, 2
      %v1653 = vsel %vm851, %v1651, %v1652
      %v1654 = vrot.slane %v1599, 2
      %v1655 = vsel %vm851, %v1652, %v1654
      %v1656 = vrot.slane %v1600, 2
      %v1657 = vrot.slane %v1601, 2
      %v1658 = vsel %vm851, %v1656, %v1657
      %v1659 = vrot.slane %v1602, 2
      %v1660 = vsel %vm851, %v1657, %v1659
      %v1661 = vrot.slane %v1603, 2
      %v1662 = vrot.slane %v1604, 2
      %v1663 = vsel %vm851, %v1661, %v1662
      %v1664 = vrot.slane %v1605, 2
      %v1665 = vsel %vm851, %v1662, %v1664
      %v1666 = vrot.slane %v1606, 2
      %v1667 = vrot.slane %v1607, 2
      %v1668 = vsel %vm851, %v1666, %v1667
      %v1669 = vrot.slane %v1608, 2
      %v1670 = vsel %vm851, %v1667, %v1669
      %v1671 = vrot.slane %v1609, 2
      %v1672 = vrot.slane %v1610, 2
      %v1673 = vsel %vm851, %v1671, %v1672
      %v1674 = vrot.slane %v1611, 2
      %v1675 = vsel %vm851, %v1672, %v1674
      %v1692 = vadd.f32 %v1568, %v1638
      %v1693 = vadd.f32 %v1569, %v1640
      %v1694 = vadd.f32 %v1570, %v1643
      %v1695 = vadd.f32 %v1571, %v1645
      %v1696 = vadd.f32 %v1572, %v1648
      %v1697 = vadd.f32 %v1573, %v1650
      %v1698 = vadd.f32 %v1574, %v1653
      %v1699 = vadd.f32 %v1575, %v1655
      %v1700 = vadd.f32 %v1576, %v1658
      %v1701 = vadd.f32 %v1577, %v1660
      %v1702 = vadd.f32 %v1578, %v1663
      %v1703 = vadd.f32 %v1579, %v1665
      %v1704 = vadd.f32 %v1580, %v1668
      %v1705 = vadd.f32 %v1581, %v1670
      %v1706 = vadd.f32 %v1582, %v1673
      %v1707 = vadd.f32 %v1583, %v1675
      %v1708 = vlaneseq
      %v1709 = vshrl.u32 %v1708, 7
      %v1710 = vsub.s32 2, %v1709
      %v1711 = vrot.slane %v632, %v1710
      %v1712 = vmul.f32 %v1711, %v592
      %v1713 = vmul.f32 %v1711, %v593
      %v1714 = vmul.f32 %v1711, %v594
      %v1715 = vmul.f32 %v1711, %v595
      %v1716 = vmul.f32 %v1711, %v596
      %v1717 = vmul.f32 %v1711, %v597
      %v1718 = vmul.f32 %v1711, %v598
      %v1719 = vmul.f32 %v1711, %v599
      %v1720 = vmul.f32 %v1711, %v600
      %v1721 = vmul.f32 %v1711, %v601
      %v1722 = vmul.f32 %v1711, %v602
      %v1723 = vmul.f32 %v1711, %v603
      %v1724 = vmul.f32 %v1711, %v604
      %v1725 = vmul.f32 %v1711, %v605
      %v1726 = vmul.f32 %v1711, %v606
      %v1727 = vmul.f32 %v1711, %v607
      %v1728 = vmul.f32 %v1711, %v608
      %v1729 = vmul.f32 %v1711, %v609
      %v1730 = vmul.f32 %v1711, %v610
      %v1731 = vmul.f32 %v1711, %v611
      %v1732 = vmul.f32 %v1711, %v612
      %v1733 = vmul.f32 %v1711, %v613
      %v1734 = vmul.f32 %v1711, %v614
      %v1735 = vmul.f32 %v1711, %v615
      %v1760 = vrot.slane %v1712, 3
      %v1761 = vrot.slane %v1713, 3
      %v1762 = vsel %vm976, %v1760, %v1761
      %v1763 = vrot.slane %v1714, 3
      %v1764 = vsel %vm976, %v1761, %v1763
      %v1765 = vrot.slane %v1715, 3
      %v1766 = vrot.slane %v1716, 3
      %v1767 = vsel %vm976, %v1765, %v1766
      %v1768 = vrot.slane %v1717, 3
      %v1769 = vsel %vm976, %v1766, %v1768
      %v1770 = vrot.slane %v1718, 3
      %v1771 = vrot.slane %v1719, 3
      %v1772 = vsel %vm976, %v1770, %v1771
      %v1773 = vrot.slane %v1720, 3
      %v1774 = vsel %vm976, %v1771, %v1773
      %v1775 = vrot.slane %v1721, 3
      %v1776 = vrot.slane %v1722, 3
      %v1777 = vsel %vm976, %v1775, %v1776
      %v1778 = vrot.slane %v1723, 3
      %v1779 = vsel %vm976, %v1776, %v1778
      %v1780 = vrot.slane %v1724, 3
      %v1781 = vrot.slane %v1725, 3
      %v1782 = vsel %vm976, %v1780, %v1781
      %v1783 = vrot.slane %v1726, 3
      %v1784 = vsel %vm976, %v1781, %v1783
      %v1785 = vrot.slane %v1727, 3
      %v1786 = vrot.slane %v1728, 3
      %v1787 = vsel %vm976, %v1785, %v1786
      %v1788 = vrot.slane %v1729, 3
      %v1789 = vsel %vm976, %v1786, %v1788
      %v1790 = vrot.slane %v1730, 3
      %v1791 = vrot.slane %v1731, 3
      %v1792 = vsel %vm976, %v1790, %v1791
      %v1793 = vrot.slane %v1732, 3
      %v1794 = vsel %vm976, %v1791, %v1793
      %v1795 = vrot.slane %v1733, 3
      %v1796 = vrot.slane %v1734, 3
      %v1797 = vsel %vm976, %v1795, %v1796
      %v1798 = vrot.slane %v1735, 3
      %v1799 = vsel %vm976, %v1796, %v1798
      %v1816 = vadd.f32 %v1692, %v1762
      %v1817 = vadd.f32 %v1693, %v1764
      %v1818 = vadd.f32 %v1694, %v1767
      %v1819 = vadd.f32 %v1695, %v1769
      %v1820 = vadd.f32 %v1696, %v1772
      %v1821 = vadd.f32 %v1697, %v1774
      %v1822 = vadd.f32 %v1698, %v1777
      %v1823 = vadd.f32 %v1699, %v1779
      %v1824 = vadd.f32 %v1700, %v1782
      %v1825 = vadd.f32 %v1701, %v1784
      %v1826 = vadd.f32 %v1702, %v1787
      %v1827 = vadd.f32 %v1703, %v1789
      %v1828 = vadd.f32 %v1704, %v1792
      %v1829 = vadd.f32 %v1705, %v1794
      %v1830 = vadd.f32 %v1706, %v1797
      %v1831 = vadd.f32 %v1707, %v1799
      %v1832 = vlaneseq
      %v1833 = vshrl.u32 %v1832, 7
      %v1834 = vsub.s32 3, %v1833
      %v1835 = vrot.slane %v632, %v1834
      %v1836 = vmul.f32 %v1835, %v592
      %v1837 = vmul.f32 %v1835, %v593
      %v1838 = vmul.f32 %v1835, %v594
      %v1839 = vmul.f32 %v1835, %v595
      %v1840 = vmul.f32 %v1835, %v596
      %v1841 = vmul.f32 %v1835, %v597
      %v1842 = vmul.f32 %v1835, %v598
      %v1843 = vmul.f32 %v1835, %v599
      %v1844 = vmul.f32 %v1835, %v600
      %v1845 = vmul.f32 %v1835, %v601
      %v1846 = vmul.f32 %v1835, %v602
      %v1847 = vmul.f32 %v1835, %v603
      %v1848 = vmul.f32 %v1835, %v604
      %v1849 = vmul.f32 %v1835, %v605
      %v1850 = vmul.f32 %v1835, %v606
      %v1851 = vmul.f32 %v1835, %v607
      %v1852 = vmul.f32 %v1835, %v608
      %v1853 = vmul.f32 %v1835, %v609
      %v1854 = vmul.f32 %v1835, %v610
      %v1855 = vmul.f32 %v1835, %v611
      %v1856 = vmul.f32 %v1835, %v612
      %v1857 = vmul.f32 %v1835, %v613
      %v1858 = vmul.f32 %v1835, %v614
      %v1859 = vmul.f32 %v1835, %v615
      %v1884 = vrot.slane %v1836, 4
      %v1885 = vrot.slane %v1837, 4
      %v1886 = vsel %vm1101, %v1884, %v1885
      %v1887 = vrot.slane %v1838, 4
      %v1888 = vsel %vm1101, %v1885, %v1887
      %v1889 = vrot.slane %v1839, 4
      %v1890 = vrot.slane %v1840, 4
      %v1891 = vsel %vm1101, %v1889, %v1890
      %v1892 = vrot.slane %v1841, 4
      %v1893 = vsel %vm1101, %v1890, %v1892
      %v1894 = vrot.slane %v1842, 4
      %v1895 = vrot.slane %v1843, 4
      %v1896 = vsel %vm1101, %v1894, %v1895
      %v1897 = vrot.slane %v1844, 4
      %v1898 = vsel %vm1101, %v1895, %v1897
      %v1899 = vrot.slane %v1845, 4
      %v1900 = vrot.slane %v1846, 4
      %v1901 = vsel %vm1101, %v1899, %v1900
      %v1902 = vrot.slane %v1847, 4
      %v1903 = vsel %vm1101, %v1900, %v1902
      %v1904 = vrot.slane %v1848, 4
      %v1905 = vrot.slane %v1849, 4
      %v1906 = vsel %vm1101, %v1904, %v1905
      %v1907 = vrot.slane %v1850, 4
      %v1908 = vsel %vm1101, %v1905, %v1907
      %v1909 = vrot.slane %v1851, 4
      %v1910 = vrot.slane %v1852, 4
      %v1911 = vsel %vm1101, %v1909, %v1910
      %v1912 = vrot.slane %v1853, 4
      %v1913 = vsel %vm1101, %v1910, %v1912
      %v1914 = vrot.slane %v1854, 4
      %v1915 = vrot.slane %v1855, 4
      %v1916 = vsel %vm1101, %v1914, %v1915
      %v1917 = vrot.slane %v1856, 4
      %v1918 = vsel %vm1101, %v1915, %v1917
      %v1919 = vrot.slane %v1857, 4
      %v1920 = vrot.slane %v1858, 4
      %v1921 = vsel %vm1101, %v1919, %v1920
      %v1922 = vrot.slane %v1859, 4
      %v1923 = vsel %vm1101, %v1920, %v1922
      %v1940 = vadd.f32 %v1816, %v1886
      %v1941 = vadd.f32 %v1817, %v1888
      %v1942 = vadd.f32 %v1818, %v1891
      %v1943 = vadd.f32 %v1819, %v1893
      %v1944 = vadd.f32 %v1820, %v1896
      %v1945 = vadd.f32 %v1821, %v1898
      %v1946 = vadd.f32 %v1822, %v1901
      %v1947 = vadd.f32 %v1823, %v1903
      %v1948 = vadd.f32 %v1824, %v1906
      %v1949 = vadd.f32 %v1825, %v1908
      %v1950 = vadd.f32 %v1826, %v1911
      %v1951 = vadd.f32 %v1827, %v1913
      %v1952 = vadd.f32 %v1828, %v1916
      %v1953 = vadd.f32 %v1829, %v1918
      %v1954 = vadd.f32 %v1830, %v1921
      %v1955 = vadd.f32 %v1831, %v1923
      %v1956 = vlaneseq
      %v1957 = vshrl.u32 %v1956, 7
      %v1958 = vsub.s32 4, %v1957
      %v1959 = vrot.slane %v632, %v1958
      %v1960 = vmul.f32 %v1959, %v592
      %v1961 = vmul.f32 %v1959, %v593
      %v1962 = vmul.f32 %v1959, %v594
      %v1963 = vmul.f32 %v1959, %v595
      %v1964 = vmul.f32 %v1959, %v596
      %v1965 = vmul.f32 %v1959, %v597
      %v1966 = vmul.f32 %v1959, %v598
      %v1967 = vmul.f32 %v1959, %v599
      %v1968 = vmul.f32 %v1959, %v600
      %v1969 = vmul.f32 %v1959, %v601
      %v1970 = vmul.f32 %v1959, %v602
      %v1971 = vmul.f32 %v1959, %v603
      %v1972 = vmul.f32 %v1959, %v604
      %v1973 = vmul.f32 %v1959, %v605
      %v1974 = vmul.f32 %v1959, %v606
      %v1975 = vmul.f32 %v1959, %v607
      %v1976 = vmul.f32 %v1959, %v608
      %v1977 = vmul.f32 %v1959, %v609
      %v1978 = vmul.f32 %v1959, %v610
      %v1979 = vmul.f32 %v1959, %v611
      %v1980 = vmul.f32 %v1959, %v612
      %v1981 = vmul.f32 %v1959, %v613
      %v1982 = vmul.f32 %v1959, %v614
      %v1983 = vmul.f32 %v1959, %v615
      %v2008 = vrot.slane %v1960, 5
      %v2009 = vrot.slane %v1961, 5
      %v2010 = vsel %vm1226, %v2008, %v2009
      %v2011 = vrot.slane %v1962, 5
      %v2012 = vsel %vm1226, %v2009, %v2011
      %v2013 = vrot.slane %v1963, 5
      %v2014 = vrot.slane %v1964, 5
      %v2015 = vsel %vm1226, %v2013, %v2014
      %v2016 = vrot.slane %v1965, 5
      %v2017 = vsel %vm1226, %v2014, %v2016
      %v2018 = vrot.slane %v1966, 5
      %v2019 = vrot.slane %v1967, 5
      %v2020 = vsel %vm1226, %v2018, %v2019
      %v2021 = vrot.slane %v1968, 5
      %v2022 = vsel %vm1226, %v2019, %v2021
      %v2023 = vrot.slane %v1969, 5
      %v2024 = vrot.slane %v1970, 5
      %v2025 = vsel %vm1226, %v2023, %v2024
      %v2026 = vrot.slane %v1971, 5
      %v2027 = vsel %vm1226, %v2024, %v2026
      %v2028 = vrot.slane %v1972, 5
      %v2029 = vrot.slane %v1973, 5
      %v2030 = vsel %vm1226, %v2028, %v2029
      %v2031 = vrot.slane %v1974, 5
      %v2032 = vsel %vm1226, %v2029, %v2031
      %v2033 = vrot.slane %v1975, 5
      %v2034 = vrot.slane %v1976, 5
      %v2035 = vsel %vm1226, %v2033, %v2034
      %v2036 = vrot.slane %v1977, 5
      %v2037 = vsel %vm1226, %v2034, %v2036
      %v2038 = vrot.slane %v1978, 5
      %v2039 = vrot.slane %v1979, 5
      %v2040 = vsel %vm1226, %v2038, %v2039
      %v2041 = vrot.slane %v1980, 5
      %v2042 = vsel %vm1226, %v2039, %v2041
      %v2043 = vrot.slane %v1981, 5
      %v2044 = vrot.slane %v1982, 5
      %v2045 = vsel %vm1226, %v2043, %v2044
      %v2046 = vrot.slane %v1983, 5
      %v2047 = vsel %vm1226, %v2044, %v2046
      %v2064 = vadd.f32 %v1940, %v2010
      %v2065 = vadd.f32 %v1941, %v2012
      %v2066 = vadd.f32 %v1942, %v2015
      %v2067 = vadd.f32 %v1943, %v2017
      %v2068 = vadd.f32 %v1944, %v2020
      %v2069 = vadd.f32 %v1945, %v2022
      %v2070 = vadd.f32 %v1946, %v2025
      %v2071 = vadd.f32 %v1947, %v2027
      %v2072 = vadd.f32 %v1948, %v2030
      %v2073 = vadd.f32 %v1949, %v2032
      %v2074 = vadd.f32 %v1950, %v2035
      %v2075 = vadd.f32 %v1951, %v2037
      %v2076 = vadd.f32 %v1952, %v2040
      %v2077 = vadd.f32 %v1953, %v2042
      %v2078 = vadd.f32 %v1954, %v2045
      %v2079 = vadd.f32 %v1955, %v2047
      %v2080 = vlaneseq
      %v2081 = vshrl.u32 %v2080, 7
      %v2082 = vsub.s32 5, %v2081
      %v2083 = vrot.slane %v632, %v2082
      %v2084 = vmul.f32 %v2083, %v592
      %v2085 = vmul.f32 %v2083, %v593
      %v2086 = vmul.f32 %v2083, %v594
      %v2087 = vmul.f32 %v2083, %v595
      %v2088 = vmul.f32 %v2083, %v596
      %v2089 = vmul.f32 %v2083, %v597
      %v2090 = vmul.f32 %v2083, %v598
      %v2091 = vmul.f32 %v2083, %v599
      %v2092 = vmul.f32 %v2083, %v600
      %v2093 = vmul.f32 %v2083, %v601
      %v2094 = vmul.f32 %v2083, %v602
      %v2095 = vmul.f32 %v2083, %v603
      %v2096 = vmul.f32 %v2083, %v604
      %v2097 = vmul.f32 %v2083, %v605
      %v2098 = vmul.f32 %v2083, %v606
      %v2099 = vmul.f32 %v2083, %v607
      %v2100 = vmul.f32 %v2083, %v608
      %v2101 = vmul.f32 %v2083, %v609
      %v2102 = vmul.f32 %v2083, %v610
      %v2103 = vmul.f32 %v2083, %v611
      %v2104 = vmul.f32 %v2083, %v612
      %v2105 = vmul.f32 %v2083, %v613
      %v2106 = vmul.f32 %v2083, %v614
      %v2107 = vmul.f32 %v2083, %v615
      %v2132 = vrot.slane %v2084, 6
      %v2133 = vrot.slane %v2085, 6
      %v2134 = vsel %vm1351, %v2132, %v2133
      %v2135 = vrot.slane %v2086, 6
      %v2136 = vsel %vm1351, %v2133, %v2135
      %v2137 = vrot.slane %v2087, 6
      %v2138 = vrot.slane %v2088, 6
      %v2139 = vsel %vm1351, %v2137, %v2138
      %v2140 = vrot.slane %v2089, 6
      %v2141 = vsel %vm1351, %v2138, %v2140
      %v2142 = vrot.slane %v2090, 6
      %v2143 = vrot.slane %v2091, 6
      %v2144 = vsel %vm1351, %v2142, %v2143
      %v2145 = vrot.slane %v2092, 6
      %v2146 = vsel %vm1351, %v2143, %v2145
      %v2147 = vrot.slane %v2093, 6
      %v2148 = vrot.slane %v2094, 6
      %v2149 = vsel %vm1351, %v2147, %v2148
      %v2150 = vrot.slane %v2095, 6
      %v2151 = vsel %vm1351, %v2148, %v2150
      %v2152 = vrot.slane %v2096, 6
      %v2153 = vrot.slane %v2097, 6
      %v2154 = vsel %vm1351, %v2152, %v2153
      %v2155 = vrot.slane %v2098, 6
      %v2156 = vsel %vm1351, %v2153, %v2155
      %v2157 = vrot.slane %v2099, 6
      %v2158 = vrot.slane %v2100, 6
      %v2159 = vsel %vm1351, %v2157, %v2158
      %v2160 = vrot.slane %v2101, 6
      %v2161 = vsel %vm1351, %v2158, %v2160
      %v2162 = vrot.slane %v2102, 6
      %v2163 = vrot.slane %v2103, 6
      %v2164 = vsel %vm1351, %v2162, %v2163
      %v2165 = vrot.slane %v2104, 6
      %v2166 = vsel %vm1351, %v2163, %v2165
      %v2167 = vrot.slane %v2105, 6
      %v2168 = vrot.slane %v2106, 6
      %v2169 = vsel %vm1351, %v2167, %v2168
      %v2170 = vrot.slane %v2107, 6
      %v2171 = vsel %vm1351, %v2168, %v2170
      %v2188 = vadd.f32 %v2064, %v2134
      %v2189 = vadd.f32 %v2065, %v2136
      %v2190 = vadd.f32 %v2066, %v2139
      %v2191 = vadd.f32 %v2067, %v2141
      %v2192 = vadd.f32 %v2068, %v2144
      %v2193 = vadd.f32 %v2069, %v2146
      %v2194 = vadd.f32 %v2070, %v2149
      %v2195 = vadd.f32 %v2071, %v2151
      %v2196 = vadd.f32 %v2072, %v2154
      %v2197 = vadd.f32 %v2073, %v2156
      %v2198 = vadd.f32 %v2074, %v2159
      %v2199 = vadd.f32 %v2075, %v2161
      %v2200 = vadd.f32 %v2076, %v2164
      %v2201 = vadd.f32 %v2077, %v2166
      %v2202 = vadd.f32 %v2078, %v2169
      %v2203 = vadd.f32 %v2079, %v2171
      %v2204 = vlaneseq
      %v2205 = vshrl.u32 %v2204, 7
      %v2206 = vsub.s32 6, %v2205
      %v2207 = vrot.slane %v632, %v2206
      %v2208 = vmul.f32 %v2207, %v595
      %v2209 = vmul.f32 %v2207, %v596
      %v2210 = vmul.f32 %v2207, %v598
      %v2211 = vmul.f32 %v2207, %v599
      %v2212 = vmul.f32 %v2207, %v601
      %v2213 = vmul.f32 %v2207, %v602
      %v2214 = vmul.f32 %v2207, %v604
      %v2215 = vmul.f32 %v2207, %v605
      %v2216 = vmul.f32 %v2207, %v607
      %v2217 = vmul.f32 %v2207, %v608
      %v2218 = vmul.f32 %v2207, %v610
      %v2219 = vmul.f32 %v2207, %v611
      %v2220 = vmul.f32 %v2207, %v613
      %v2221 = vmul.f32 %v2207, %v614
      %v2222 = vmul.f32 %v2207, %v616
      %v2223 = vmul.f32 %v2207, %v617
      %v2224 = vadd.f32 %v2188, %v2208
      %v2225 = vadd.f32 %v2189, %v2209
      %v2226 = vadd.f32 %v2190, %v2210
      %v2227 = vadd.f32 %v2191, %v2211
      %v2228 = vadd.f32 %v2192, %v2212
      %v2229 = vadd.f32 %v2193, %v2213
      %v2230 = vadd.f32 %v2194, %v2214
      %v2231 = vadd.f32 %v2195, %v2215
      %v2232 = vadd.f32 %v2196, %v2216
      %v2233 = vadd.f32 %v2197, %v2217
      %v2234 = vadd.f32 %v2198, %v2218
      %v2235 = vadd.f32 %v2199, %v2219
      %v2236 = vadd.f32 %v2200, %v2220
      %v2237 = vadd.f32 %v2201, %v2221
      %v2238 = vadd.f32 %v2202, %v2222
      %v2239 = vadd.f32 %v2203, %v2223
      %v2240 = vlaneseq
      %v2241 = vshrl.u32 %v2240, 7
      %v2242 = vsub.s32 7, %v2241
      %v2243 = vrot.slane %v632, %v2242
      %v2244 = vmul.f32 %v2243, %v595
      %v2245 = vmul.f32 %v2243, %v596
      %v2246 = vmul.f32 %v2243, %v597
      %v2247 = vmul.f32 %v2243, %v598
      %v2248 = vmul.f32 %v2243, %v599
      %v2249 = vmul.f32 %v2243, %v600
      %v2250 = vmul.f32 %v2243, %v601
      %v2251 = vmul.f32 %v2243, %v602
      %v2252 = vmul.f32 %v2243, %v603
      %v2253 = vmul.f32 %v2243, %v604
      %v2254 = vmul.f32 %v2243, %v605
      %v2255 = vmul.f32 %v2243, %v606
      %v2256 = vmul.f32 %v2243, %v607
      %v2257 = vmul.f32 %v2243, %v608
      %v2258 = vmul.f32 %v2243, %v609
      %v2259 = vmul.f32 %v2243, %v610
      %v2260 = vmul.f32 %v2243, %v611
      %v2261 = vmul.f32 %v2243, %v612
      %v2262 = vmul.f32 %v2243, %v613
      %v2263 = vmul.f32 %v2243, %v614
      %v2264 = vmul.f32 %v2243, %v615
      %v2265 = vmul.f32 %v2243, %v616
      %v2266 = vmul.f32 %v2243, %v617
      %v2267 = vmul.f32 %v2243, %v618
      %v2292 = vrot.slane %v2244, 1
      %v2293 = vrot.slane %v2245, 1
      %v2294 = vsel %vm726, %v2292, %v2293
      %v2295 = vrot.slane %v2246, 1
      %v2296 = vsel %vm726, %v2293, %v2295
      %v2297 = vrot.slane %v2247, 1
      %v2298 = vrot.slane %v2248, 1
      %v2299 = vsel %vm726, %v2297, %v2298
      %v2300 = vrot.slane %v2249, 1
      %v2301 = vsel %vm726, %v2298, %v2300
      %v2302 = vrot.slane %v2250, 1
      %v2303 = vrot.slane %v2251, 1
      %v2304 = vsel %vm726, %v2302, %v2303
      %v2305 = vrot.slane %v2252, 1
      %v2306 = vsel %vm726, %v2303, %v2305
      %v2307 = vrot.slane %v2253, 1
      %v2308 = vrot.slane %v2254, 1
      %v2309 = vsel %vm726, %v2307, %v2308
      %v2310 = vrot.slane %v2255, 1
      %v2311 = vsel %vm726, %v2308, %v2310
      %v2312 = vrot.slane %v2256, 1
      %v2313 = vrot.slane %v2257, 1
      %v2314 = vsel %vm726, %v2312, %v2313
      %v2315 = vrot.slane %v2258, 1
      %v2316 = vsel %vm726, %v2313, %v2315
      %v2317 = vrot.slane %v2259, 1
      %v2318 = vrot.slane %v2260, 1
      %v2319 = vsel %vm726, %v2317, %v2318
      %v2320 = vrot.slane %v2261, 1
      %v2321 = vsel %vm726, %v2318, %v2320
      %v2322 = vrot.slane %v2262, 1
      %v2323 = vrot.slane %v2263, 1
      %v2324 = vsel %vm726, %v2322, %v2323
      %v2325 = vrot.slane %v2264, 1
      %v2326 = vsel %vm726, %v2323, %v2325
      %v2327 = vrot.slane %v2265, 1
      %v2328 = vrot.slane %v2266, 1
      %v2329 = vsel %vm726, %v2327, %v2328
      %v2330 = vrot.slane %v2267, 1
      %v2331 = vsel %vm726, %v2328, %v2330
      %v2348 = vadd.f32 %v2224, %v2294
      %v2349 = vadd.f32 %v2225, %v2296
      %v2350 = vadd.f32 %v2226, %v2299
      %v2351 = vadd.f32 %v2227, %v2301
      %v2352 = vadd.f32 %v2228, %v2304
      %v2353 = vadd.f32 %v2229, %v2306
      %v2354 = vadd.f32 %v2230, %v2309
      %v2355 = vadd.f32 %v2231, %v2311
      %v2356 = vadd.f32 %v2232, %v2314
      %v2357 = vadd.f32 %v2233, %v2316
      %v2358 = vadd.f32 %v2234, %v2319
      %v2359 = vadd.f32 %v2235, %v2321
      %v2360 = vadd.f32 %v2236, %v2324
      %v2361 = vadd.f32 %v2237, %v2326
      %v2362 = vadd.f32 %v2238, %v2329
      %v2363 = vadd.f32 %v2239, %v2331
      %v2364 = vlaneseq
      %v2365 = vshrl.u32 %v2364, 7
      %v2366 = vsub.s32 0, %v2365
      %v2367 = vrot.slane %v633, %v2366
      %v2368 = vmul.f32 %v2367, %v595
      %v2369 = vmul.f32 %v2367, %v596
      %v2370 = vmul.f32 %v2367, %v597
      %v2371 = vmul.f32 %v2367, %v598
      %v2372 = vmul.f32 %v2367, %v599
      %v2373 = vmul.f32 %v2367, %v600
      %v2374 = vmul.f32 %v2367, %v601
      %v2375 = vmul.f32 %v2367, %v602
      %v2376 = vmul.f32 %v2367, %v603
      %v2377 = vmul.f32 %v2367, %v604
      %v2378 = vmul.f32 %v2367, %v605
      %v2379 = vmul.f32 %v2367, %v606
      %v2380 = vmul.f32 %v2367, %v607
      %v2381 = vmul.f32 %v2367, %v608
      %v2382 = vmul.f32 %v2367, %v609
      %v2383 = vmul.f32 %v2367, %v610
      %v2384 = vmul.f32 %v2367, %v611
      %v2385 = vmul.f32 %v2367, %v612
      %v2386 = vmul.f32 %v2367, %v613
      %v2387 = vmul.f32 %v2367, %v614
      %v2388 = vmul.f32 %v2367, %v615
      %v2389 = vmul.f32 %v2367, %v616
      %v2390 = vmul.f32 %v2367, %v617
      %v2391 = vmul.f32 %v2367, %v618
      %v2416 = vrot.slane %v2368, 2
      %v2417 = vrot.slane %v2369, 2
      %v2418 = vsel %vm851, %v2416, %v2417
      %v2419 = vrot.slane %v2370, 2
      %v2420 = vsel %vm851, %v2417, %v2419
      %v2421 = vrot.slane %v2371, 2
      %v2422 = vrot.slane %v2372, 2
      %v2423 = vsel %vm851, %v2421, %v2422
      %v2424 = vrot.slane %v2373, 2
      %v2425 = vsel %vm851, %v2422, %v2424
      %v2426 = vrot.slane %v2374, 2
      %v2427 = vrot.slane %v2375, 2
      %v2428 = vsel %vm851, %v2426, %v2427
      %v2429 = vrot.slane %v2376, 2
      %v2430 = vsel %vm851, %v2427, %v2429
      %v2431 = vrot.slane %v2377, 2
      %v2432 = vrot.slane %v2378, 2
      %v2433 = vsel %vm851, %v2431, %v2432
      %v2434 = vrot.slane %v2379, 2
      %v2435 = vsel %vm851, %v2432, %v2434
      %v2436 = vrot.slane %v2380, 2
      %v2437 = vrot.slane %v2381, 2
      %v2438 = vsel %vm851, %v2436, %v2437
      %v2439 = vrot.slane %v2382, 2
      %v2440 = vsel %vm851, %v2437, %v2439
      %v2441 = vrot.slane %v2383, 2
      %v2442 = vrot.slane %v2384, 2
      %v2443 = vsel %vm851, %v2441, %v2442
      %v2444 = vrot.slane %v2385, 2
      %v2445 = vsel %vm851, %v2442, %v2444
      %v2446 = vrot.slane %v2386, 2
      %v2447 = vrot.slane %v2387, 2
      %v2448 = vsel %vm851, %v2446, %v2447
      %v2449 = vrot.slane %v2388, 2
      %v2450 = vsel %vm851, %v2447, %v2449
      %v2451 = vrot.slane %v2389, 2
      %v2452 = vrot.slane %v2390, 2
      %v2453 = vsel %vm851, %v2451, %v2452
      %v2454 = vrot.slane %v2391, 2
      %v2455 = vsel %vm851, %v2452, %v2454
      %v2472 = vadd.f32 %v2348, %v2418
      %v2473 = vadd.f32 %v2349, %v2420
      %v2474 = vadd.f32 %v2350, %v2423
      %v2475 = vadd.f32 %v2351, %v2425
      %v2476 = vadd.f32 %v2352, %v2428
      %v2477 = vadd.f32 %v2353, %v2430
      %v2478 = vadd.f32 %v2354, %v2433
      %v2479 = vadd.f32 %v2355, %v2435
      %v2480 = vadd.f32 %v2356, %v2438
      %v2481 = vadd.f32 %v2357, %v2440
      %v2482 = vadd.f32 %v2358, %v2443
      %v2483 = vadd.f32 %v2359, %v2445
      %v2484 = vadd.f32 %v2360, %v2448
      %v2485 = vadd.f32 %v2361, %v2450
      %v2486 = vadd.f32 %v2362, %v2453
      %v2487 = vadd.f32 %v2363, %v2455
      %v2488 = vlaneseq
      %v2489 = vshrl.u32 %v2488, 7
      %v2490 = vsub.s32 1, %v2489
      %v2491 = vrot.slane %v633, %v2490
      %v2492 = vmul.f32 %v2491, %v595
      %v2493 = vmul.f32 %v2491, %v596
      %v2494 = vmul.f32 %v2491, %v597
      %v2495 = vmul.f32 %v2491, %v598
      %v2496 = vmul.f32 %v2491, %v599
      %v2497 = vmul.f32 %v2491, %v600
      %v2498 = vmul.f32 %v2491, %v601
      %v2499 = vmul.f32 %v2491, %v602
      %v2500 = vmul.f32 %v2491, %v603
      %v2501 = vmul.f32 %v2491, %v604
      %v2502 = vmul.f32 %v2491, %v605
      %v2503 = vmul.f32 %v2491, %v606
      %v2504 = vmul.f32 %v2491, %v607
      %v2505 = vmul.f32 %v2491, %v608
      %v2506 = vmul.f32 %v2491, %v609
      %v2507 = vmul.f32 %v2491, %v610
      %v2508 = vmul.f32 %v2491, %v611
      %v2509 = vmul.f32 %v2491, %v612
      %v2510 = vmul.f32 %v2491, %v613
      %v2511 = vmul.f32 %v2491, %v614
      %v2512 = vmul.f32 %v2491, %v615
      %v2513 = vmul.f32 %v2491, %v616
      %v2514 = vmul.f32 %v2491, %v617
      %v2515 = vmul.f32 %v2491, %v618
      %v2540 = vrot.slane %v2492, 3
      %v2541 = vrot.slane %v2493, 3
      %v2542 = vsel %vm976, %v2540, %v2541
      %v2543 = vrot.slane %v2494, 3
      %v2544 = vsel %vm976, %v2541, %v2543
      %v2545 = vrot.slane %v2495, 3
      %v2546 = vrot.slane %v2496, 3
      %v2547 = vsel %vm976, %v2545, %v2546
      %v2548 = vrot.slane %v2497, 3
      %v2549 = vsel %vm976, %v2546, %v2548
      %v2550 = vrot.slane %v2498, 3
      %v2551 = vrot.slane %v2499, 3
      %v2552 = vsel %vm976, %v2550, %v2551
      %v2553 = vrot.slane %v2500, 3
      %v2554 = vsel %vm976, %v2551, %v2553
      %v2555 = vrot.slane %v2501, 3
      %v2556 = vrot.slane %v2502, 3
      %v2557 = vsel %vm976, %v2555, %v2556
      %v2558 = vrot.slane %v2503, 3
      %v2559 = vsel %vm976, %v2556, %v2558
      %v2560 = vrot.slane %v2504, 3
      %v2561 = vrot.slane %v2505, 3
      %v2562 = vsel %vm976, %v2560, %v2561
      %v2563 = vrot.slane %v2506, 3
      %v2564 = vsel %vm976, %v2561, %v2563
      %v2565 = vrot.slane %v2507, 3
      %v2566 = vrot.slane %v2508, 3
      %v2567 = vsel %vm976, %v2565, %v2566
      %v2568 = vrot.slane %v2509, 3
      %v2569 = vsel %vm976, %v2566, %v2568
      %v2570 = vrot.slane %v2510, 3
      %v2571 = vrot.slane %v2511, 3
      %v2572 = vsel %vm976, %v2570, %v2571
      %v2573 = vrot.slane %v2512, 3
      %v2574 = vsel %vm976, %v2571, %v2573
      %v2575 = vrot.slane %v2513, 3
      %v2576 = vrot.slane %v2514, 3
      %v2577 = vsel %vm976, %v2575, %v2576
      %v2578 = vrot.slane %v2515, 3
      %v2579 = vsel %vm976, %v2576, %v2578
      %v2596 = vadd.f32 %v2472, %v2542
      %v2597 = vadd.f32 %v2473, %v2544
      %v2598 = vadd.f32 %v2474, %v2547
      %v2599 = vadd.f32 %v2475, %v2549
      %v2600 = vadd.f32 %v2476, %v2552
      %v2601 = vadd.f32 %v2477, %v2554
      %v2602 = vadd.f32 %v2478, %v2557
      %v2603 = vadd.f32 %v2479, %v2559
      %v2604 = vadd.f32 %v2480, %v2562
      %v2605 = vadd.f32 %v2481, %v2564
      %v2606 = vadd.f32 %v2482, %v2567
      %v2607 = vadd.f32 %v2483, %v2569
      %v2608 = vadd.f32 %v2484, %v2572
      %v2609 = vadd.f32 %v2485, %v2574
      %v2610 = vadd.f32 %v2486, %v2577
      %v2611 = vadd.f32 %v2487, %v2579
      %v2612 = vlaneseq
      %v2613 = vshrl.u32 %v2612, 7
      %v2614 = vsub.s32 2, %v2613
      %v2615 = vrot.slane %v633, %v2614
      %v2616 = vmul.f32 %v2615, %v595
      %v2617 = vmul.f32 %v2615, %v596
      %v2618 = vmul.f32 %v2615, %v597
      %v2619 = vmul.f32 %v2615, %v598
      %v2620 = vmul.f32 %v2615, %v599
      %v2621 = vmul.f32 %v2615, %v600
      %v2622 = vmul.f32 %v2615, %v601
      %v2623 = vmul.f32 %v2615, %v602
      %v2624 = vmul.f32 %v2615, %v603
      %v2625 = vmul.f32 %v2615, %v604
      %v2626 = vmul.f32 %v2615, %v605
      %v2627 = vmul.f32 %v2615, %v606
      %v2628 = vmul.f32 %v2615, %v607
      %v2629 = vmul.f32 %v2615, %v608
      %v2630 = vmul.f32 %v2615, %v609
      %v2631 = vmul.f32 %v2615, %v610
      %v2632 = vmul.f32 %v2615, %v611
      %v2633 = vmul.f32 %v2615, %v612
      %v2634 = vmul.f32 %v2615, %v613
      %v2635 = vmul.f32 %v2615, %v614
      %v2636 = vmul.f32 %v2615, %v615
      %v2637 = vmul.f32 %v2615, %v616
      %v2638 = vmul.f32 %v2615, %v617
      %v2639 = vmul.f32 %v2615, %v618
      %v2664 = vrot.slane %v2616, 4
      %v2665 = vrot.slane %v2617, 4
      %v2666 = vsel %vm1101, %v2664, %v2665
      %v2667 = vrot.slane %v2618, 4
      %v2668 = vsel %vm1101, %v2665, %v2667
      %v2669 = vrot.slane %v2619, 4
      %v2670 = vrot.slane %v2620, 4
      %v2671 = vsel %vm1101, %v2669, %v2670
      %v2672 = vrot.slane %v2621, 4
      %v2673 = vsel %vm1101, %v2670, %v2672
      %v2674 = vrot.slane %v2622, 4
      %v2675 = vrot.slane %v2623, 4
      %v2676 = vsel %vm1101, %v2674, %v2675
      %v2677 = vrot.slane %v2624, 4
      %v2678 = vsel %vm1101, %v2675, %v2677
      %v2679 = vrot.slane %v2625, 4
      %v2680 = vrot.slane %v2626, 4
      %v2681 = vsel %vm1101, %v2679, %v2680
      %v2682 = vrot.slane %v2627, 4
      %v2683 = vsel %vm1101, %v2680, %v2682
      %v2684 = vrot.slane %v2628, 4
      %v2685 = vrot.slane %v2629, 4
      %v2686 = vsel %vm1101, %v2684, %v2685
      %v2687 = vrot.slane %v2630, 4
      %v2688 = vsel %vm1101, %v2685, %v2687
      %v2689 = vrot.slane %v2631, 4
      %v2690 = vrot.slane %v2632, 4
      %v2691 = vsel %vm1101, %v2689, %v2690
      %v2692 = vrot.slane %v2633, 4
      %v2693 = vsel %vm1101, %v2690, %v2692
      %v2694 = vrot.slane %v2634, 4
      %v2695 = vrot.slane %v2635, 4
      %v2696 = vsel %vm1101, %v2694, %v2695
      %v2697 = vrot.slane %v2636, 4
      %v2698 = vsel %vm1101, %v2695, %v2697
      %v2699 = vrot.slane %v2637, 4
      %v2700 = vrot.slane %v2638, 4
      %v2701 = vsel %vm1101, %v2699, %v2700
      %v2702 = vrot.slane %v2639, 4
      %v2703 = vsel %vm1101, %v2700, %v2702
      %v2720 = vadd.f32 %v2596, %v2666
      %v2721 = vadd.f32 %v2597, %v2668
      %v2722 = vadd.f32 %v2598, %v2671
      %v2723 = vadd.f32 %v2599, %v2673
      %v2724 = vadd.f32 %v2600, %v2676
      %v2725 = vadd.f32 %v2601, %v2678
      %v2726 = vadd.f32 %v2602, %v2681
      %v2727 = vadd.f32 %v2603, %v2683
      %v2728 = vadd.f32 %v2604, %v2686
      %v2729 = vadd.f32 %v2605, %v2688
      %v2730 = vadd.f32 %v2606, %v2691
      %v2731 = vadd.f32 %v2607, %v2693
      %v2732 = vadd.f32 %v2608, %v2696
      %v2733 = vadd.f32 %v2609, %v2698
      %v2734 = vadd.f32 %v2610, %v2701
      %v2735 = vadd.f32 %v2611, %v2703
      %v2736 = vlaneseq
      %v2737 = vshrl.u32 %v2736, 7
      %v2738 = vsub.s32 3, %v2737
      %v2739 = vrot.slane %v633, %v2738
      %v2740 = vmul.f32 %v2739, %v595
      %v2741 = vmul.f32 %v2739, %v596
      %v2742 = vmul.f32 %v2739, %v597
      %v2743 = vmul.f32 %v2739, %v598
      %v2744 = vmul.f32 %v2739, %v599
      %v2745 = vmul.f32 %v2739, %v600
      %v2746 = vmul.f32 %v2739, %v601
      %v2747 = vmul.f32 %v2739, %v602
      %v2748 = vmul.f32 %v2739, %v603
      %v2749 = vmul.f32 %v2739, %v604
      %v2750 = vmul.f32 %v2739, %v605
      %v2751 = vmul.f32 %v2739, %v606
      %v2752 = vmul.f32 %v2739, %v607
      %v2753 = vmul.f32 %v2739, %v608
      %v2754 = vmul.f32 %v2739, %v609
      %v2755 = vmul.f32 %v2739, %v610
      %v2756 = vmul.f32 %v2739, %v611
      %v2757 = vmul.f32 %v2739, %v612
      %v2758 = vmul.f32 %v2739, %v613
      %v2759 = vmul.f32 %v2739, %v614
      %v2760 = vmul.f32 %v2739, %v615
      %v2761 = vmul.f32 %v2739, %v616
      %v2762 = vmul.f32 %v2739, %v617
      %v2763 = vmul.f32 %v2739, %v618
      %v2788 = vrot.slane %v2740, 5
      %v2789 = vrot.slane %v2741, 5
      %v2790 = vsel %vm1226, %v2788, %v2789
      %v2791 = vrot.slane %v2742, 5
      %v2792 = vsel %vm1226, %v2789, %v2791
      %v2793 = vrot.slane %v2743, 5
      %v2794 = vrot.slane %v2744, 5
      %v2795 = vsel %vm1226, %v2793, %v2794
      %v2796 = vrot.slane %v2745, 5
      %v2797 = vsel %vm1226, %v2794, %v2796
      %v2798 = vrot.slane %v2746, 5
      %v2799 = vrot.slane %v2747, 5
      %v2800 = vsel %vm1226, %v2798, %v2799
      %v2801 = vrot.slane %v2748, 5
      %v2802 = vsel %vm1226, %v2799, %v2801
      %v2803 = vrot.slane %v2749, 5
      %v2804 = vrot.slane %v2750, 5
      %v2805 = vsel %vm1226, %v2803, %v2804
      %v2806 = vrot.slane %v2751, 5
      %v2807 = vsel %vm1226, %v2804, %v2806
      %v2808 = vrot.slane %v2752, 5
      %v2809 = vrot.slane %v2753, 5
      %v2810 = vsel %vm1226, %v2808, %v2809
      %v2811 = vrot.slane %v2754, 5
      %v2812 = vsel %vm1226, %v2809, %v2811
      %v2813 = vrot.slane %v2755, 5
      %v2814 = vrot.slane %v2756, 5
      %v2815 = vsel %vm1226, %v2813, %v2814
      %v2816 = vrot.slane %v2757, 5
      %v2817 = vsel %vm1226, %v2814, %v2816
      %v2818 = vrot.slane %v2758, 5
      %v2819 = vrot.slane %v2759, 5
      %v2820 = vsel %vm1226, %v2818, %v2819
      %v2821 = vrot.slane %v2760, 5
      %v2822 = vsel %vm1226, %v2819, %v2821
      %v2823 = vrot.slane %v2761, 5
      %v2824 = vrot.slane %v2762, 5
      %v2825 = vsel %vm1226, %v2823, %v2824
      %v2826 = vrot.slane %v2763, 5
      %v2827 = vsel %vm1226, %v2824, %v2826
      %v2844 = vadd.f32 %v2720, %v2790
      %v2845 = vadd.f32 %v2721, %v2792
      %v2846 = vadd.f32 %v2722, %v2795
      %v2847 = vadd.f32 %v2723, %v2797
      %v2848 = vadd.f32 %v2724, %v2800
      %v2849 = vadd.f32 %v2725, %v2802
      %v2850 = vadd.f32 %v2726, %v2805
      %v2851 = vadd.f32 %v2727, %v2807
      %v2852 = vadd.f32 %v2728, %v2810
      %v2853 = vadd.f32 %v2729, %v2812
      %v2854 = vadd.f32 %v2730, %v2815
      %v2855 = vadd.f32 %v2731, %v2817
      %v2856 = vadd.f32 %v2732, %v2820
      %v2857 = vadd.f32 %v2733, %v2822
      %v2858 = vadd.f32 %v2734, %v2825
      %v2859 = vadd.f32 %v2735, %v2827
      %v2860 = vlaneseq
      %v2861 = vshrl.u32 %v2860, 7
      %v2862 = vsub.s32 4, %v2861
      %v2863 = vrot.slane %v633, %v2862
      %v2864 = vmul.f32 %v2863, %v595
      %v2865 = vmul.f32 %v2863, %v596
      %v2866 = vmul.f32 %v2863, %v597
      %v2867 = vmul.f32 %v2863, %v598
      %v2868 = vmul.f32 %v2863, %v599
      %v2869 = vmul.f32 %v2863, %v600
      %v2870 = vmul.f32 %v2863, %v601
      %v2871 = vmul.f32 %v2863, %v602
      %v2872 = vmul.f32 %v2863, %v603
      %v2873 = vmul.f32 %v2863, %v604
      %v2874 = vmul.f32 %v2863, %v605
      %v2875 = vmul.f32 %v2863, %v606
      %v2876 = vmul.f32 %v2863, %v607
      %v2877 = vmul.f32 %v2863, %v608
      %v2878 = vmul.f32 %v2863, %v609
      %v2879 = vmul.f32 %v2863, %v610
      %v2880 = vmul.f32 %v2863, %v611
      %v2881 = vmul.f32 %v2863, %v612
      %v2882 = vmul.f32 %v2863, %v613
      %v2883 = vmul.f32 %v2863, %v614
      %v2884 = vmul.f32 %v2863, %v615
      %v2885 = vmul.f32 %v2863, %v616
      %v2886 = vmul.f32 %v2863, %v617
      %v2887 = vmul.f32 %v2863, %v618
      %v2912 = vrot.slane %v2864, 6
      %v2913 = vrot.slane %v2865, 6
      %v2914 = vsel %vm1351, %v2912, %v2913
      %v2915 = vrot.slane %v2866, 6
      %v2916 = vsel %vm1351, %v2913, %v2915
      %v2917 = vrot.slane %v2867, 6
      %v2918 = vrot.slane %v2868, 6
      %v2919 = vsel %vm1351, %v2917, %v2918
      %v2920 = vrot.slane %v2869, 6
      %v2921 = vsel %vm1351, %v2918, %v2920
      %v2922 = vrot.slane %v2870, 6
      %v2923 = vrot.slane %v2871, 6
      %v2924 = vsel %vm1351, %v2922, %v2923
      %v2925 = vrot.slane %v2872, 6
      %v2926 = vsel %vm1351, %v2923, %v2925
      %v2927 = vrot.slane %v2873, 6
      %v2928 = vrot.slane %v2874, 6
      %v2929 = vsel %vm1351, %v2927, %v2928
      %v2930 = vrot.slane %v2875, 6
      %v2931 = vsel %vm1351, %v2928, %v2930
      %v2932 = vrot.slane %v2876, 6
      %v2933 = vrot.slane %v2877, 6
      %v2934 = vsel %vm1351, %v2932, %v2933
      %v2935 = vrot.slane %v2878, 6
      %v2936 = vsel %vm1351, %v2933, %v2935
      %v2937 = vrot.slane %v2879, 6
      %v2938 = vrot.slane %v2880, 6
      %v2939 = vsel %vm1351, %v2937, %v2938
      %v2940 = vrot.slane %v2881, 6
      %v2941 = vsel %vm1351, %v2938, %v2940
      %v2942 = vrot.slane %v2882, 6
      %v2943 = vrot.slane %v2883, 6
      %v2944 = vsel %vm1351, %v2942, %v2943
      %v2945 = vrot.slane %v2884, 6
      %v2946 = vsel %vm1351, %v2943, %v2945
      %v2947 = vrot.slane %v2885, 6
      %v2948 = vrot.slane %v2886, 6
      %v2949 = vsel %vm1351, %v2947, %v2948
      %v2950 = vrot.slane %v2887, 6
      %v2951 = vsel %vm1351, %v2948, %v2950
      %v2968 = vadd.f32 %v2844, %v2914
      %v2969 = vadd.f32 %v2845, %v2916
      %v2970 = vadd.f32 %v2846, %v2919
      %v2971 = vadd.f32 %v2847, %v2921
      %v2972 = vadd.f32 %v2848, %v2924
      %v2973 = vadd.f32 %v2849, %v2926
      %v2974 = vadd.f32 %v2850, %v2929
      %v2975 = vadd.f32 %v2851, %v2931
      %v2976 = vadd.f32 %v2852, %v2934
      %v2977 = vadd.f32 %v2853, %v2936
      %v2978 = vadd.f32 %v2854, %v2939
      %v2979 = vadd.f32 %v2855, %v2941
      %v2980 = vadd.f32 %v2856, %v2944
      %v2981 = vadd.f32 %v2857, %v2946
      %v2982 = vadd.f32 %v2858, %v2949
      %v2983 = vadd.f32 %v2859, %v2951
      %v2984 = vlaneseq
      %v2985 = vshrl.u32 %v2984, 7
      %v2986 = vsub.s32 5, %v2985
      %v2987 = vrot.slane %v633, %v2986
      %v2988 = vmul.f32 %v2987, %v598
      %v2989 = vmul.f32 %v2987, %v599
      %v2990 = vmul.f32 %v2987, %v601
      %v2991 = vmul.f32 %v2987, %v602
      %v2992 = vmul.f32 %v2987, %v604
      %v2993 = vmul.f32 %v2987, %v605
      %v2994 = vmul.f32 %v2987, %v607
      %v2995 = vmul.f32 %v2987, %v608
      %v2996 = vmul.f32 %v2987, %v610
      %v2997 = vmul.f32 %v2987, %v611
      %v2998 = vmul.f32 %v2987, %v613
      %v2999 = vmul.f32 %v2987, %v614
      %v3000 = vmul.f32 %v2987, %v616
      %v3001 = vmul.f32 %v2987, %v617
      %v3002 = vmul.f32 %v2987, %v619
      %v3003 = vmul.f32 %v2987, %v620
      %v3004 = vadd.f32 %v2968, %v2988
      %v3005 = vadd.f32 %v2969, %v2989
      %v3006 = vadd.f32 %v2970, %v2990
      %v3007 = vadd.f32 %v2971, %v2991
      %v3008 = vadd.f32 %v2972, %v2992
      %v3009 = vadd.f32 %v2973, %v2993
      %v3010 = vadd.f32 %v2974, %v2994
      %v3011 = vadd.f32 %v2975, %v2995
      %v3012 = vadd.f32 %v2976, %v2996
      %v3013 = vadd.f32 %v2977, %v2997
      %v3014 = vadd.f32 %v2978, %v2998
      %v3015 = vadd.f32 %v2979, %v2999
      %v3016 = vadd.f32 %v2980, %v3000
      %v3017 = vadd.f32 %v2981, %v3001
      %v3018 = vadd.f32 %v2982, %v3002
      %v3019 = vadd.f32 %v2983, %v3003
      %v3020 = vlaneseq
      %v3021 = vshrl.u32 %v3020, 7
      %v3022 = vsub.s32 6, %v3021
      %v3023 = vrot.slane %v633, %v3022
      %v3024 = vmul.f32 %v3023, %v598
      %v3025 = vmul.f32 %v3023, %v599
      %v3026 = vmul.f32 %v3023, %v600
      %v3027 = vmul.f32 %v3023, %v601
      %v3028 = vmul.f32 %v3023, %v602
      %v3029 = vmul.f32 %v3023, %v603
      %v3030 = vmul.f32 %v3023, %v604
      %v3031 = vmul.f32 %v3023, %v605
      %v3032 = vmul.f32 %v3023, %v606
      %v3033 = vmul.f32 %v3023, %v607
      %v3034 = vmul.f32 %v3023, %v608
      %v3035 = vmul.f32 %v3023, %v609
      %v3036 = vmul.f32 %v3023, %v610
      %v3037 = vmul.f32 %v3023, %v611
      %v3038 = vmul.f32 %v3023, %v612
      %v3039 = vmul.f32 %v3023, %v613
      %v3040 = vmul.f32 %v3023, %v614
      %v3041 = vmul.f32 %v3023, %v615
      %v3042 = vmul.f32 %v3023, %v616
      %v3043 = vmul.f32 %v3023, %v617
      %v3044 = vmul.f32 %v3023, %v618
      %v3045 = vmul.f32 %v3023, %v619
      %v3046 = vmul.f32 %v3023, %v620
      %v3047 = vmul.f32 %v3023, %v621
      %v3072 = vrot.slane %v3024, 1
      %v3073 = vrot.slane %v3025, 1
      %v3074 = vsel %vm726, %v3072, %v3073
      %v3075 = vrot.slane %v3026, 1
      %v3076 = vsel %vm726, %v3073, %v3075
      %v3077 = vrot.slane %v3027, 1
      %v3078 = vrot.slane %v3028, 1
      %v3079 = vsel %vm726, %v3077, %v3078
      %v3080 = vrot.slane %v3029, 1
      %v3081 = vsel %vm726, %v3078, %v3080
      %v3082 = vrot.slane %v3030, 1
      %v3083 = vrot.slane %v3031, 1
      %v3084 = vsel %vm726, %v3082, %v3083
      %v3085 = vrot.slane %v3032, 1
      %v3086 = vsel %vm726, %v3083, %v3085
      %v3087 = vrot.slane %v3033, 1
      %v3088 = vrot.slane %v3034, 1
      %v3089 = vsel %vm726, %v3087, %v3088
      %v3090 = vrot.slane %v3035, 1
      %v3091 = vsel %vm726, %v3088, %v3090
      %v3092 = vrot.slane %v3036, 1
      %v3093 = vrot.slane %v3037, 1
      %v3094 = vsel %vm726, %v3092, %v3093
      %v3095 = vrot.slane %v3038, 1
      %v3096 = vsel %vm726, %v3093, %v3095
      %v3097 = vrot.slane %v3039, 1
      %v3098 = vrot.slane %v3040, 1
      %v3099 = vsel %vm726, %v3097, %v3098
      %v3100 = vrot.slane %v3041, 1
      %v3101 = vsel %vm726, %v3098, %v3100
      %v3102 = vrot.slane %v3042, 1
      %v3103 = vrot.slane %v3043, 1
      %v3104 = vsel %vm726, %v3102, %v3103
      %v3105 = vrot.slane %v3044, 1
      %v3106 = vsel %vm726, %v3103, %v3105
      %v3107 = vrot.slane %v3045, 1
      %v3108 = vrot.slane %v3046, 1
      %v3109 = vsel %vm726, %v3107, %v3108
      %v3110 = vrot.slane %v3047, 1
      %v3111 = vsel %vm726, %v3108, %v3110
      %v3128 = vadd.f32 %v3004, %v3074
      %v3129 = vadd.f32 %v3005, %v3076
      %v3130 = vadd.f32 %v3006, %v3079
      %v3131 = vadd.f32 %v3007, %v3081
      %v3132 = vadd.f32 %v3008, %v3084
      %v3133 = vadd.f32 %v3009, %v3086
      %v3134 = vadd.f32 %v3010, %v3089
      %v3135 = vadd.f32 %v3011, %v3091
      %v3136 = vadd.f32 %v3012, %v3094
      %v3137 = vadd.f32 %v3013, %v3096
      %v3138 = vadd.f32 %v3014, %v3099
      %v3139 = vadd.f32 %v3015, %v3101
      %v3140 = vadd.f32 %v3016, %v3104
      %v3141 = vadd.f32 %v3017, %v3106
      %v3142 = vadd.f32 %v3018, %v3109
      %v3143 = vadd.f32 %v3019, %v3111
      %v3144 = vlaneseq
      %v3145 = vshrl.u32 %v3144, 7
      %v3146 = vsub.s32 7, %v3145
      %v3147 = vrot.slane %v633, %v3146
      %v3148 = vmul.f32 %v3147, %v598
      %v3149 = vmul.f32 %v3147, %v599
      %v3150 = vmul.f32 %v3147, %v600
      %v3151 = vmul.f32 %v3147, %v601
      %v3152 = vmul.f32 %v3147, %v602
      %v3153 = vmul.f32 %v3147, %v603
      %v3154 = vmul.f32 %v3147, %v604
      %v3155 = vmul.f32 %v3147, %v605
      %v3156 = vmul.f32 %v3147, %v606
      %v3157 = vmul.f32 %v3147, %v607
      %v3158 = vmul.f32 %v3147, %v608
      %v3159 = vmul.f32 %v3147, %v609
      %v3160 = vmul.f32 %v3147, %v610
      %v3161 = vmul.f32 %v3147, %v611
      %v3162 = vmul.f32 %v3147, %v612
      %v3163 = vmul.f32 %v3147, %v613
      %v3164 = vmul.f32 %v3147, %v614
      %v3165 = vmul.f32 %v3147, %v615
      %v3166 = vmul.f32 %v3147, %v616
      %v3167 = vmul.f32 %v3147, %v617
      %v3168 = vmul.f32 %v3147, %v618
      %v3169 = vmul.f32 %v3147, %v619
      %v3170 = vmul.f32 %v3147, %v620
      %v3171 = vmul.f32 %v3147, %v621
      %v3196 = vrot.slane %v3148, 2
      %v3197 = vrot.slane %v3149, 2
      %v3198 = vsel %vm851, %v3196, %v3197
      %v3199 = vrot.slane %v3150, 2
      %v3200 = vsel %vm851, %v3197, %v3199
      %v3201 = vrot.slane %v3151, 2
      %v3202 = vrot.slane %v3152, 2
      %v3203 = vsel %vm851, %v3201, %v3202
      %v3204 = vrot.slane %v3153, 2
      %v3205 = vsel %vm851, %v3202, %v3204
      %v3206 = vrot.slane %v3154, 2
      %v3207 = vrot.slane %v3155, 2
      %v3208 = vsel %vm851, %v3206, %v3207
      %v3209 = vrot.slane %v3156, 2
      %v3210 = vsel %vm851, %v3207, %v3209
      %v3211 = vrot.slane %v3157, 2
      %v3212 = vrot.slane %v3158, 2
      %v3213 = vsel %vm851, %v3211, %v3212
      %v3214 = vrot.slane %v3159, 2
      %v3215 = vsel %vm851, %v3212, %v3214
      %v3216 = vrot.slane %v3160, 2
      %v3217 = vrot.slane %v3161, 2
      %v3218 = vsel %vm851, %v3216, %v3217
      %v3219 = vrot.slane %v3162, 2
      %v3220 = vsel %vm851, %v3217, %v3219
      %v3221 = vrot.slane %v3163, 2
      %v3222 = vrot.slane %v3164, 2
      %v3223 = vsel %vm851, %v3221, %v3222
      %v3224 = vrot.slane %v3165, 2
      %v3225 = vsel %vm851, %v3222, %v3224
      %v3226 = vrot.slane %v3166, 2
      %v3227 = vrot.slane %v3167, 2
      %v3228 = vsel %vm851, %v3226, %v3227
      %v3229 = vrot.slane %v3168, 2
      %v3230 = vsel %vm851, %v3227, %v3229
      %v3231 = vrot.slane %v3169, 2
      %v3232 = vrot.slane %v3170, 2
      %v3233 = vsel %vm851, %v3231, %v3232
      %v3234 = vrot.slane %v3171, 2
      %v3235 = vsel %vm851, %v3232, %v3234
      %v3252 = vadd.f32 %v3128, %v3198
      %v3253 = vadd.f32 %v3129, %v3200
      %v3254 = vadd.f32 %v3130, %v3203
      %v3255 = vadd.f32 %v3131, %v3205
      %v3256 = vadd.f32 %v3132, %v3208
      %v3257 = vadd.f32 %v3133, %v3210
      %v3258 = vadd.f32 %v3134, %v3213
      %v3259 = vadd.f32 %v3135, %v3215
      %v3260 = vadd.f32 %v3136, %v3218
      %v3261 = vadd.f32 %v3137, %v3220
      %v3262 = vadd.f32 %v3138, %v3223
      %v3263 = vadd.f32 %v3139, %v3225
      %v3264 = vadd.f32 %v3140, %v3228
      %v3265 = vadd.f32 %v3141, %v3230
      %v3266 = vadd.f32 %v3142, %v3233
      %v3267 = vadd.f32 %v3143, %v3235
      %v3268 = vlaneseq
      %v3269 = vshrl.u32 %v3268, 7
      %v3270 = vsub.s32 0, %v3269
      %v3271 = vrot.slane %v634, %v3270
      %v3272 = vmul.f32 %v3271, %v598
      %v3273 = vmul.f32 %v3271, %v599
      %v3274 = vmul.f32 %v3271, %v600
      %v3275 = vmul.f32 %v3271, %v601
      %v3276 = vmul.f32 %v3271, %v602
      %v3277 = vmul.f32 %v3271, %v603
      %v3278 = vmul.f32 %v3271, %v604
      %v3279 = vmul.f32 %v3271, %v605
      %v3280 = vmul.f32 %v3271, %v606
      %v3281 = vmul.f32 %v3271, %v607
      %v3282 = vmul.f32 %v3271, %v608
      %v3283 = vmul.f32 %v3271, %v609
      %v3284 = vmul.f32 %v3271, %v610
      %v3285 = vmul.f32 %v3271, %v611
      %v3286 = vmul.f32 %v3271, %v612
      %v3287 = vmul.f32 %v3271, %v613
      %v3288 = vmul.f32 %v3271, %v614
      %v3289 = vmul.f32 %v3271, %v615
      %v3290 = vmul.f32 %v3271, %v616
      %v3291 = vmul.f32 %v3271, %v617
      %v3292 = vmul.f32 %v3271, %v618
      %v3293 = vmul.f32 %v3271, %v619
      %v3294 = vmul.f32 %v3271, %v620
      %v3295 = vmul.f32 %v3271, %v621
      %v3320 = vrot.slane %v3272, 3
      %v3321 = vrot.slane %v3273, 3
      %v3322 = vsel %vm976, %v3320, %v3321
      %v3323 = vrot.slane %v3274, 3
      %v3324 = vsel %vm976, %v3321, %v3323
      %v3325 = vrot.slane %v3275, 3
      %v3326 = vrot.slane %v3276, 3
      %v3327 = vsel %vm976, %v3325, %v3326
      %v3328 = vrot.slane %v3277, 3
      %v3329 = vsel %vm976, %v3326, %v3328
      %v3330 = vrot.slane %v3278, 3
      %v3331 = vrot.slane %v3279, 3
      %v3332 = vsel %vm976, %v3330, %v3331
      %v3333 = vrot.slane %v3280, 3
      %v3334 = vsel %vm976, %v3331, %v3333
      %v3335 = vrot.slane %v3281, 3
      %v3336 = vrot.slane %v3282, 3
      %v3337 = vsel %vm976, %v3335, %v3336
      %v3338 = vrot.slane %v3283, 3
      %v3339 = vsel %vm976, %v3336, %v3338
      %v3340 = vrot.slane %v3284, 3
      %v3341 = vrot.slane %v3285, 3
      %v3342 = vsel %vm976, %v3340, %v3341
      %v3343 = vrot.slane %v3286, 3
      %v3344 = vsel %vm976, %v3341, %v3343
      %v3345 = vrot.slane %v3287, 3
      %v3346 = vrot.slane %v3288, 3
      %v3347 = vsel %vm976, %v3345, %v3346
      %v3348 = vrot.slane %v3289, 3
      %v3349 = vsel %vm976, %v3346, %v3348
      %v3350 = vrot.slane %v3290, 3
      %v3351 = vrot.slane %v3291, 3
      %v3352 = vsel %vm976, %v3350, %v3351
      %v3353 = vrot.slane %v3292, 3
      %v3354 = vsel %vm976, %v3351, %v3353
      %v3355 = vrot.slane %v3293, 3
      %v3356 = vrot.slane %v3294, 3
      %v3357 = vsel %vm976, %v3355, %v3356
      %v3358 = vrot.slane %v3295, 3
      %v3359 = vsel %vm976, %v3356, %v3358
      %v3376 = vadd.f32 %v3252, %v3322
      %v3377 = vadd.f32 %v3253, %v3324
      %v3378 = vadd.f32 %v3254, %v3327
      %v3379 = vadd.f32 %v3255, %v3329
      %v3380 = vadd.f32 %v3256, %v3332
      %v3381 = vadd.f32 %v3257, %v3334
      %v3382 = vadd.f32 %v3258, %v3337
      %v3383 = vadd.f32 %v3259, %v3339
      %v3384 = vadd.f32 %v3260, %v3342
      %v3385 = vadd.f32 %v3261, %v3344
      %v3386 = vadd.f32 %v3262, %v3347
      %v3387 = vadd.f32 %v3263, %v3349
      %v3388 = vadd.f32 %v3264, %v3352
      %v3389 = vadd.f32 %v3265, %v3354
      %v3390 = vadd.f32 %v3266, %v3357
      %v3391 = vadd.f32 %v3267, %v3359
      %v3392 = vlaneseq
      %v3393 = vshrl.u32 %v3392, 7
      %v3394 = vsub.s32 1, %v3393
      %v3395 = vrot.slane %v634, %v3394
      %v3396 = vmul.f32 %v3395, %v598
      %v3397 = vmul.f32 %v3395, %v599
      %v3398 = vmul.f32 %v3395, %v600
      %v3399 = vmul.f32 %v3395, %v601
      %v3400 = vmul.f32 %v3395, %v602
      %v3401 = vmul.f32 %v3395, %v603
      %v3402 = vmul.f32 %v3395, %v604
      %v3403 = vmul.f32 %v3395, %v605
      %v3404 = vmul.f32 %v3395, %v606
      %v3405 = vmul.f32 %v3395, %v607
      %v3406 = vmul.f32 %v3395, %v608
      %v3407 = vmul.f32 %v3395, %v609
      %v3408 = vmul.f32 %v3395, %v610
      %v3409 = vmul.f32 %v3395, %v611
      %v3410 = vmul.f32 %v3395, %v612
      %v3411 = vmul.f32 %v3395, %v613
      %v3412 = vmul.f32 %v3395, %v614
      %v3413 = vmul.f32 %v3395, %v615
      %v3414 = vmul.f32 %v3395, %v616
      %v3415 = vmul.f32 %v3395, %v617
      %v3416 = vmul.f32 %v3395, %v618
      %v3417 = vmul.f32 %v3395, %v619
      %v3418 = vmul.f32 %v3395, %v620
      %v3419 = vmul.f32 %v3395, %v621
      %v3444 = vrot.slane %v3396, 4
      %v3445 = vrot.slane %v3397, 4
      %v3446 = vsel %vm1101, %v3444, %v3445
      %v3447 = vrot.slane %v3398, 4
      %v3448 = vsel %vm1101, %v3445, %v3447
      %v3449 = vrot.slane %v3399, 4
      %v3450 = vrot.slane %v3400, 4
      %v3451 = vsel %vm1101, %v3449, %v3450
      %v3452 = vrot.slane %v3401, 4
      %v3453 = vsel %vm1101, %v3450, %v3452
      %v3454 = vrot.slane %v3402, 4
      %v3455 = vrot.slane %v3403, 4
      %v3456 = vsel %vm1101, %v3454, %v3455
      %v3457 = vrot.slane %v3404, 4
      %v3458 = vsel %vm1101, %v3455, %v3457
      %v3459 = vrot.slane %v3405, 4
      %v3460 = vrot.slane %v3406, 4
      %v3461 = vsel %vm1101, %v3459, %v3460
      %v3462 = vrot.slane %v3407, 4
      %v3463 = vsel %vm1101, %v3460, %v3462
      %v3464 = vrot.slane %v3408, 4
      %v3465 = vrot.slane %v3409, 4
      %v3466 = vsel %vm1101, %v3464, %v3465
      %v3467 = vrot.slane %v3410, 4
      %v3468 = vsel %vm1101, %v3465, %v3467
      %v3469 = vrot.slane %v3411, 4
      %v3470 = vrot.slane %v3412, 4
      %v3471 = vsel %vm1101, %v3469, %v3470
      %v3472 = vrot.slane %v3413, 4
      %v3473 = vsel %vm1101, %v3470, %v3472
      %v3474 = vrot.slane %v3414, 4
      %v3475 = vrot.slane %v3415, 4
      %v3476 = vsel %vm1101, %v3474, %v3475
      %v3477 = vrot.slane %v3416, 4
      %v3478 = vsel %vm1101, %v3475, %v3477
      %v3479 = vrot.slane %v3417, 4
      %v3480 = vrot.slane %v3418, 4
      %v3481 = vsel %vm1101, %v3479, %v3480
      %v3482 = vrot.slane %v3419, 4
      %v3483 = vsel %vm1101, %v3480, %v3482
      %v3500 = vadd.f32 %v3376, %v3446
      %v3501 = vadd.f32 %v3377, %v3448
      %v3502 = vadd.f32 %v3378, %v3451
      %v3503 = vadd.f32 %v3379, %v3453
      %v3504 = vadd.f32 %v3380, %v3456
      %v3505 = vadd.f32 %v3381, %v3458
      %v3506 = vadd.f32 %v3382, %v3461
      %v3507 = vadd.f32 %v3383, %v3463
      %v3508 = vadd.f32 %v3384, %v3466
      %v3509 = vadd.f32 %v3385, %v3468
      %v3510 = vadd.f32 %v3386, %v3471
      %v3511 = vadd.f32 %v3387, %v3473
      %v3512 = vadd.f32 %v3388, %v3476
      %v3513 = vadd.f32 %v3389, %v3478
      %v3514 = vadd.f32 %v3390, %v3481
      %v3515 = vadd.f32 %v3391, %v3483
      %v3516 = vlaneseq
      %v3517 = vshrl.u32 %v3516, 7
      %v3518 = vsub.s32 2, %v3517
      %v3519 = vrot.slane %v634, %v3518
      %v3520 = vmul.f32 %v3519, %v598
      %v3521 = vmul.f32 %v3519, %v599
      %v3522 = vmul.f32 %v3519, %v600
      %v3523 = vmul.f32 %v3519, %v601
      %v3524 = vmul.f32 %v3519, %v602
      %v3525 = vmul.f32 %v3519, %v603
      %v3526 = vmul.f32 %v3519, %v604
      %v3527 = vmul.f32 %v3519, %v605
      %v3528 = vmul.f32 %v3519, %v606
      %v3529 = vmul.f32 %v3519, %v607
      %v3530 = vmul.f32 %v3519, %v608
      %v3531 = vmul.f32 %v3519, %v609
      %v3532 = vmul.f32 %v3519, %v610
      %v3533 = vmul.f32 %v3519, %v611
      %v3534 = vmul.f32 %v3519, %v612
      %v3535 = vmul.f32 %v3519, %v613
      %v3536 = vmul.f32 %v3519, %v614
      %v3537 = vmul.f32 %v3519, %v615
      %v3538 = vmul.f32 %v3519, %v616
      %v3539 = vmul.f32 %v3519, %v617
      %v3540 = vmul.f32 %v3519, %v618
      %v3541 = vmul.f32 %v3519, %v619
      %v3542 = vmul.f32 %v3519, %v620
      %v3543 = vmul.f32 %v3519, %v621
      %v3568 = vrot.slane %v3520, 5
      %v3569 = vrot.slane %v3521, 5
      %v3570 = vsel %vm1226, %v3568, %v3569
      %v3571 = vrot.slane %v3522, 5
      %v3572 = vsel %vm1226, %v3569, %v3571
      %v3573 = vrot.slane %v3523, 5
      %v3574 = vrot.slane %v3524, 5
      %v3575 = vsel %vm1226, %v3573, %v3574
      %v3576 = vrot.slane %v3525, 5
      %v3577 = vsel %vm1226, %v3574, %v3576
      %v3578 = vrot.slane %v3526, 5
      %v3579 = vrot.slane %v3527, 5
      %v3580 = vsel %vm1226, %v3578, %v3579
      %v3581 = vrot.slane %v3528, 5
      %v3582 = vsel %vm1226, %v3579, %v3581
      %v3583 = vrot.slane %v3529, 5
      %v3584 = vrot.slane %v3530, 5
      %v3585 = vsel %vm1226, %v3583, %v3584
      %v3586 = vrot.slane %v3531, 5
      %v3587 = vsel %vm1226, %v3584, %v3586
      %v3588 = vrot.slane %v3532, 5
      %v3589 = vrot.slane %v3533, 5
      %v3590 = vsel %vm1226, %v3588, %v3589
      %v3591 = vrot.slane %v3534, 5
      %v3592 = vsel %vm1226, %v3589, %v3591
      %v3593 = vrot.slane %v3535, 5
      %v3594 = vrot.slane %v3536, 5
      %v3595 = vsel %vm1226, %v3593, %v3594
      %v3596 = vrot.slane %v3537, 5
      %v3597 = vsel %vm1226, %v3594, %v3596
      %v3598 = vrot.slane %v3538, 5
      %v3599 = vrot.slane %v3539, 5
      %v3600 = vsel %vm1226, %v3598, %v3599
      %v3601 = vrot.slane %v3540, 5
      %v3602 = vsel %vm1226, %v3599, %v3601
      %v3603 = vrot.slane %v3541, 5
      %v3604 = vrot.slane %v3542, 5
      %v3605 = vsel %vm1226, %v3603, %v3604
      %v3606 = vrot.slane %v3543, 5
      %v3607 = vsel %vm1226, %v3604, %v3606
      %v3624 = vadd.f32 %v3500, %v3570
      %v3625 = vadd.f32 %v3501, %v3572
      %v3626 = vadd.f32 %v3502, %v3575
      %v3627 = vadd.f32 %v3503, %v3577
      %v3628 = vadd.f32 %v3504, %v3580
      %v3629 = vadd.f32 %v3505, %v3582
      %v3630 = vadd.f32 %v3506, %v3585
      %v3631 = vadd.f32 %v3507, %v3587
      %v3632 = vadd.f32 %v3508, %v3590
      %v3633 = vadd.f32 %v3509, %v3592
      %v3634 = vadd.f32 %v3510, %v3595
      %v3635 = vadd.f32 %v3511, %v3597
      %v3636 = vadd.f32 %v3512, %v3600
      %v3637 = vadd.f32 %v3513, %v3602
      %v3638 = vadd.f32 %v3514, %v3605
      %v3639 = vadd.f32 %v3515, %v3607
      %v3640 = vlaneseq
      %v3641 = vshrl.u32 %v3640, 7
      %v3642 = vsub.s32 3, %v3641
      %v3643 = vrot.slane %v634, %v3642
      %v3644 = vmul.f32 %v3643, %v598
      %v3645 = vmul.f32 %v3643, %v599
      %v3646 = vmul.f32 %v3643, %v600
      %v3647 = vmul.f32 %v3643, %v601
      %v3648 = vmul.f32 %v3643, %v602
      %v3649 = vmul.f32 %v3643, %v603
      %v3650 = vmul.f32 %v3643, %v604
      %v3651 = vmul.f32 %v3643, %v605
      %v3652 = vmul.f32 %v3643, %v606
      %v3653 = vmul.f32 %v3643, %v607
      %v3654 = vmul.f32 %v3643, %v608
      %v3655 = vmul.f32 %v3643, %v609
      %v3656 = vmul.f32 %v3643, %v610
      %v3657 = vmul.f32 %v3643, %v611
      %v3658 = vmul.f32 %v3643, %v612
      %v3659 = vmul.f32 %v3643, %v613
      %v3660 = vmul.f32 %v3643, %v614
      %v3661 = vmul.f32 %v3643, %v615
      %v3662 = vmul.f32 %v3643, %v616
      %v3663 = vmul.f32 %v3643, %v617
      %v3664 = vmul.f32 %v3643, %v618
      %v3665 = vmul.f32 %v3643, %v619
      %v3666 = vmul.f32 %v3643, %v620
      %v3667 = vmul.f32 %v3643, %v621
      %v3692 = vrot.slane %v3644, 6
      %v3693 = vrot.slane %v3645, 6
      %v3694 = vsel %vm1351, %v3692, %v3693
      %v3695 = vrot.slane %v3646, 6
      %v3696 = vsel %vm1351, %v3693, %v3695
      %v3697 = vrot.slane %v3647, 6
      %v3698 = vrot.slane %v3648, 6
      %v3699 = vsel %vm1351, %v3697, %v3698
      %v3700 = vrot.slane %v3649, 6
      %v3701 = vsel %vm1351, %v3698, %v3700
      %v3702 = vrot.slane %v3650, 6
      %v3703 = vrot.slane %v3651, 6
      %v3704 = vsel %vm1351, %v3702, %v3703
      %v3705 = vrot.slane %v3652, 6
      %v3706 = vsel %vm1351, %v3703, %v3705
      %v3707 = vrot.slane %v3653, 6
      %v3708 = vrot.slane %v3654, 6
      %v3709 = vsel %vm1351, %v3707, %v3708
      %v3710 = vrot.slane %v3655, 6
      %v3711 = vsel %vm1351, %v3708, %v3710
      %v3712 = vrot.slane %v3656, 6
      %v3713 = vrot.slane %v3657, 6
      %v3714 = vsel %vm1351, %v3712, %v3713
      %v3715 = vrot.slane %v3658, 6
      %v3716 = vsel %vm1351, %v3713, %v3715
      %v3717 = vrot.slane %v3659, 6
      %v3718 = vrot.slane %v3660, 6
      %v3719 = vsel %vm1351, %v3717, %v3718
      %v3720 = vrot.slane %v3661, 6
      %v3721 = vsel %vm1351, %v3718, %v3720
      %v3722 = vrot.slane %v3662, 6
      %v3723 = vrot.slane %v3663, 6
      %v3724 = vsel %vm1351, %v3722, %v3723
      %v3725 = vrot.slane %v3664, 6
      %v3726 = vsel %vm1351, %v3723, %v3725
      %v3727 = vrot.slane %v3665, 6
      %v3728 = vrot.slane %v3666, 6
      %v3729 = vsel %vm1351, %v3727, %v3728
      %v3730 = vrot.slane %v3667, 6
      %v3731 = vsel %vm1351, %v3728, %v3730
      %v3748 = vadd.f32 %v3624, %v3694
      %v3749 = vadd.f32 %v3625, %v3696
      %v3750 = vadd.f32 %v3626, %v3699
      %v3751 = vadd.f32 %v3627, %v3701
      %v3752 = vadd.f32 %v3628, %v3704
      %v3753 = vadd.f32 %v3629, %v3706
      %v3754 = vadd.f32 %v3630, %v3709
      %v3755 = vadd.f32 %v3631, %v3711
      %v3756 = vadd.f32 %v3632, %v3714
      %v3757 = vadd.f32 %v3633, %v3716
      %v3758 = vadd.f32 %v3634, %v3719
      %v3759 = vadd.f32 %v3635, %v3721
      %v3760 = vadd.f32 %v3636, %v3724
      %v3761 = vadd.f32 %v3637, %v3726
      %v3762 = vadd.f32 %v3638, %v3729
      %v3763 = vadd.f32 %v3639, %v3731
      %v3764 = vlaneseq
      %v3765 = vshrl.u32 %v3764, 7
      %v3766 = vsub.s32 4, %v3765
      %v3767 = vrot.slane %v634, %v3766
      %v3768 = vmul.f32 %v3767, %v601
      %v3769 = vmul.f32 %v3767, %v602
      %v3770 = vmul.f32 %v3767, %v604
      %v3771 = vmul.f32 %v3767, %v605
      %v3772 = vmul.f32 %v3767, %v607
      %v3773 = vmul.f32 %v3767, %v608
      %v3774 = vmul.f32 %v3767, %v610
      %v3775 = vmul.f32 %v3767, %v611
      %v3776 = vmul.f32 %v3767, %v613
      %v3777 = vmul.f32 %v3767, %v614
      %v3778 = vmul.f32 %v3767, %v616
      %v3779 = vmul.f32 %v3767, %v617
      %v3780 = vmul.f32 %v3767, %v619
      %v3781 = vmul.f32 %v3767, %v620
      %v3782 = vmul.f32 %v3767, %v622
      %v3783 = vmul.f32 %v3767, %v623
      %v3784 = vadd.f32 %v3748, %v3768
      %v3785 = vadd.f32 %v3749, %v3769
      %v3786 = vadd.f32 %v3750, %v3770
      %v3787 = vadd.f32 %v3751, %v3771
      %v3788 = vadd.f32 %v3752, %v3772
      %v3789 = vadd.f32 %v3753, %v3773
      %v3790 = vadd.f32 %v3754, %v3774
      %v3791 = vadd.f32 %v3755, %v3775
      %v3792 = vadd.f32 %v3756, %v3776
      %v3793 = vadd.f32 %v3757, %v3777
      %v3794 = vadd.f32 %v3758, %v3778
      %v3795 = vadd.f32 %v3759, %v3779
      %v3796 = vadd.f32 %v3760, %v3780
      %v3797 = vadd.f32 %v3761, %v3781
      %v3798 = vadd.f32 %v3762, %v3782
      %v3799 = vadd.f32 %v3763, %v3783
      %v3800 = vlaneseq
      %v3801 = vshrl.u32 %v3800, 7
      %v3802 = vsub.s32 5, %v3801
      %v3803 = vrot.slane %v634, %v3802
      %v3804 = vmul.f32 %v3803, %v601
      %v3805 = vmul.f32 %v3803, %v602
      %v3806 = vmul.f32 %v3803, %v603
      %v3807 = vmul.f32 %v3803, %v604
      %v3808 = vmul.f32 %v3803, %v605
      %v3809 = vmul.f32 %v3803, %v606
      %v3810 = vmul.f32 %v3803, %v607
      %v3811 = vmul.f32 %v3803, %v608
      %v3812 = vmul.f32 %v3803, %v609
      %v3813 = vmul.f32 %v3803, %v610
      %v3814 = vmul.f32 %v3803, %v611
      %v3815 = vmul.f32 %v3803, %v612
      %v3816 = vmul.f32 %v3803, %v613
      %v3817 = vmul.f32 %v3803, %v614
      %v3818 = vmul.f32 %v3803, %v615
      %v3819 = vmul.f32 %v3803, %v616
      %v3820 = vmul.f32 %v3803, %v617
      %v3821 = vmul.f32 %v3803, %v618
      %v3822 = vmul.f32 %v3803, %v619
      %v3823 = vmul.f32 %v3803, %v620
      %v3824 = vmul.f32 %v3803, %v621
      %v3825 = vmul.f32 %v3803, %v622
      %v3826 = vmul.f32 %v3803, %v623
      %v3827 = vmul.f32 %v3803, %v624
      %v3852 = vrot.slane %v3804, 1
      %v3853 = vrot.slane %v3805, 1
      %v3854 = vsel %vm726, %v3852, %v3853
      %v3855 = vrot.slane %v3806, 1
      %v3856 = vsel %vm726, %v3853, %v3855
      %v3857 = vrot.slane %v3807, 1
      %v3858 = vrot.slane %v3808, 1
      %v3859 = vsel %vm726, %v3857, %v3858
      %v3860 = vrot.slane %v3809, 1
      %v3861 = vsel %vm726, %v3858, %v3860
      %v3862 = vrot.slane %v3810, 1
      %v3863 = vrot.slane %v3811, 1
      %v3864 = vsel %vm726, %v3862, %v3863
      %v3865 = vrot.slane %v3812, 1
      %v3866 = vsel %vm726, %v3863, %v3865
      %v3867 = vrot.slane %v3813, 1
      %v3868 = vrot.slane %v3814, 1
      %v3869 = vsel %vm726, %v3867, %v3868
      %v3870 = vrot.slane %v3815, 1
      %v3871 = vsel %vm726, %v3868, %v3870
      %v3872 = vrot.slane %v3816, 1
      %v3873 = vrot.slane %v3817, 1
      %v3874 = vsel %vm726, %v3872, %v3873
      %v3875 = vrot.slane %v3818, 1
      %v3876 = vsel %vm726, %v3873, %v3875
      %v3877 = vrot.slane %v3819, 1
      %v3878 = vrot.slane %v3820, 1
      %v3879 = vsel %vm726, %v3877, %v3878
      %v3880 = vrot.slane %v3821, 1
      %v3881 = vsel %vm726, %v3878, %v3880
      %v3882 = vrot.slane %v3822, 1
      %v3883 = vrot.slane %v3823, 1
      %v3884 = vsel %vm726, %v3882, %v3883
      %v3885 = vrot.slane %v3824, 1
      %v3886 = vsel %vm726, %v3883, %v3885
      %v3887 = vrot.slane %v3825, 1
      %v3888 = vrot.slane %v3826, 1
      %v3889 = vsel %vm726, %v3887, %v3888
      %v3890 = vrot.slane %v3827, 1
      %v3891 = vsel %vm726, %v3888, %v3890
      %v3908 = vadd.f32 %v3784, %v3854
      %v3909 = vadd.f32 %v3785, %v3856
      %v3910 = vadd.f32 %v3786, %v3859
      %v3911 = vadd.f32 %v3787, %v3861
      %v3912 = vadd.f32 %v3788, %v3864
      %v3913 = vadd.f32 %v3789, %v3866
      %v3914 = vadd.f32 %v3790, %v3869
      %v3915 = vadd.f32 %v3791, %v3871
      %v3916 = vadd.f32 %v3792, %v3874
      %v3917 = vadd.f32 %v3793, %v3876
      %v3918 = vadd.f32 %v3794, %v3879
      %v3919 = vadd.f32 %v3795, %v3881
      %v3920 = vadd.f32 %v3796, %v3884
      %v3921 = vadd.f32 %v3797, %v3886
      %v3922 = vadd.f32 %v3798, %v3889
      %v3923 = vadd.f32 %v3799, %v3891
      %v3924 = vlaneseq
      %v3925 = vshrl.u32 %v3924, 7
      %v3926 = vsub.s32 6, %v3925
      %v3927 = vrot.slane %v634, %v3926
      %v3928 = vmul.f32 %v3927, %v601
      %v3929 = vmul.f32 %v3927, %v602
      %v3930 = vmul.f32 %v3927, %v603
      %v3931 = vmul.f32 %v3927, %v604
      %v3932 = vmul.f32 %v3927, %v605
      %v3933 = vmul.f32 %v3927, %v606
      %v3934 = vmul.f32 %v3927, %v607
      %v3935 = vmul.f32 %v3927, %v608
      %v3936 = vmul.f32 %v3927, %v609
      %v3937 = vmul.f32 %v3927, %v610
      %v3938 = vmul.f32 %v3927, %v611
      %v3939 = vmul.f32 %v3927, %v612
      %v3940 = vmul.f32 %v3927, %v613
      %v3941 = vmul.f32 %v3927, %v614
      %v3942 = vmul.f32 %v3927, %v615
      %v3943 = vmul.f32 %v3927, %v616
      %v3944 = vmul.f32 %v3927, %v617
      %v3945 = vmul.f32 %v3927, %v618
      %v3946 = vmul.f32 %v3927, %v619
      %v3947 = vmul.f32 %v3927, %v620
      %v3948 = vmul.f32 %v3927, %v621
      %v3949 = vmul.f32 %v3927, %v622
      %v3950 = vmul.f32 %v3927, %v623
      %v3951 = vmul.f32 %v3927, %v624
      %v3976 = vrot.slane %v3928, 2
      %v3977 = vrot.slane %v3929, 2
      %v3978 = vsel %vm851, %v3976, %v3977
      %v3979 = vrot.slane %v3930, 2
      %v3980 = vsel %vm851, %v3977, %v3979
      %v3981 = vrot.slane %v3931, 2
      %v3982 = vrot.slane %v3932, 2
      %v3983 = vsel %vm851, %v3981, %v3982
      %v3984 = vrot.slane %v3933, 2
      %v3985 = vsel %vm851, %v3982, %v3984
      %v3986 = vrot.slane %v3934, 2
      %v3987 = vrot.slane %v3935, 2
      %v3988 = vsel %vm851, %v3986, %v3987
      %v3989 = vrot.slane %v3936, 2
      %v3990 = vsel %vm851, %v3987, %v3989
      %v3991 = vrot.slane %v3937, 2
      %v3992 = vrot.slane %v3938, 2
      %v3993 = vsel %vm851, %v3991, %v3992
      %v3994 = vrot.slane %v3939, 2
      %v3995 = vsel %vm851, %v3992, %v3994
      %v3996 = vrot.slane %v3940, 2
      %v3997 = vrot.slane %v3941, 2
      %v3998 = vsel %vm851, %v3996, %v3997
      %v3999 = vrot.slane %v3942, 2
      %v4000 = vsel %vm851, %v3997, %v3999
      %v4001 = vrot.slane %v3943, 2
      %v4002 = vrot.slane %v3944, 2
      %v4003 = vsel %vm851, %v4001, %v4002
      %v4004 = vrot.slane %v3945, 2
      %v4005 = vsel %vm851, %v4002, %v4004
      %v4006 = vrot.slane %v3946, 2
      %v4007 = vrot.slane %v3947, 2
      %v4008 = vsel %vm851, %v4006, %v4007
      %v4009 = vrot.slane %v3948, 2
      %v4010 = vsel %vm851, %v4007, %v4009
      %v4011 = vrot.slane %v3949, 2
      %v4012 = vrot.slane %v3950, 2
      %v4013 = vsel %vm851, %v4011, %v4012
      %v4014 = vrot.slane %v3951, 2
      %v4015 = vsel %vm851, %v4012, %v4014
      %v4032 = vadd.f32 %v3908, %v3978
      %v4033 = vadd.f32 %v3909, %v3980
      %v4034 = vadd.f32 %v3910, %v3983
      %v4035 = vadd.f32 %v3911, %v3985
      %v4036 = vadd.f32 %v3912, %v3988
      %v4037 = vadd.f32 %v3913, %v3990
      %v4038 = vadd.f32 %v3914, %v3993
      %v4039 = vadd.f32 %v3915, %v3995
      %v4040 = vadd.f32 %v3916, %v3998
      %v4041 = vadd.f32 %v3917, %v4000
      %v4042 = vadd.f32 %v3918, %v4003
      %v4043 = vadd.f32 %v3919, %v4005
      %v4044 = vadd.f32 %v3920, %v4008
      %v4045 = vadd.f32 %v3921, %v4010
      %v4046 = vadd.f32 %v3922, %v4013
      %v4047 = vadd.f32 %v3923, %v4015
      %v4048 = vlaneseq
      %v4049 = vshrl.u32 %v4048, 7
      %v4050 = vsub.s32 7, %v4049
      %v4051 = vrot.slane %v634, %v4050
      %v4052 = vmul.f32 %v4051, %v601
      %v4053 = vmul.f32 %v4051, %v602
      %v4054 = vmul.f32 %v4051, %v603
      %v4055 = vmul.f32 %v4051, %v604
      %v4056 = vmul.f32 %v4051, %v605
      %v4057 = vmul.f32 %v4051, %v606
      %v4058 = vmul.f32 %v4051, %v607
      %v4059 = vmul.f32 %v4051, %v608
      %v4060 = vmul.f32 %v4051, %v609
      %v4061 = vmul.f32 %v4051, %v610
      %v4062 = vmul.f32 %v4051, %v611
      %v4063 = vmul.f32 %v4051, %v612
      %v4064 = vmul.f32 %v4051, %v613
      %v4065 = vmul.f32 %v4051, %v614
      %v4066 = vmul.f32 %v4051, %v615
      %v4067 = vmul.f32 %v4051, %v616
      %v4068 = vmul.f32 %v4051, %v617
      %v4069 = vmul.f32 %v4051, %v618
      %v4070 = vmul.f32 %v4051, %v619
      %v4071 = vmul.f32 %v4051, %v620
      %v4072 = vmul.f32 %v4051, %v621
      %v4073 = vmul.f32 %v4051, %v622
      %v4074 = vmul.f32 %v4051, %v623
      %v4075 = vmul.f32 %v4051, %v624
      %v4100 = vrot.slane %v4052, 3
      %v4101 = vrot.slane %v4053, 3
      %v4102 = vsel %vm976, %v4100, %v4101
      %v4103 = vrot.slane %v4054, 3
      %v4104 = vsel %vm976, %v4101, %v4103
      %v4105 = vrot.slane %v4055, 3
      %v4106 = vrot.slane %v4056, 3
      %v4107 = vsel %vm976, %v4105, %v4106
      %v4108 = vrot.slane %v4057, 3
      %v4109 = vsel %vm976, %v4106, %v4108
      %v4110 = vrot.slane %v4058, 3
      %v4111 = vrot.slane %v4059, 3
      %v4112 = vsel %vm976, %v4110, %v4111
      %v4113 = vrot.slane %v4060, 3
      %v4114 = vsel %vm976, %v4111, %v4113
      %v4115 = vrot.slane %v4061, 3
      %v4116 = vrot.slane %v4062, 3
      %v4117 = vsel %vm976, %v4115, %v4116
      %v4118 = vrot.slane %v4063, 3
      %v4119 = vsel %vm976, %v4116, %v4118
      %v4120 = vrot.slane %v4064, 3
      %v4121 = vrot.slane %v4065, 3
      %v4122 = vsel %vm976, %v4120, %v4121
      %v4123 = vrot.slane %v4066, 3
      %v4124 = vsel %vm976, %v4121, %v4123
      %v4125 = vrot.slane %v4067, 3
      %v4126 = vrot.slane %v4068, 3
      %v4127 = vsel %vm976, %v4125, %v4126
      %v4128 = vrot.slane %v4069, 3
      %v4129 = vsel %vm976, %v4126, %v4128
      %v4130 = vrot.slane %v4070, 3
      %v4131 = vrot.slane %v4071, 3
      %v4132 = vsel %vm976, %v4130, %v4131
      %v4133 = vrot.slane %v4072, 3
      %v4134 = vsel %vm976, %v4131, %v4133
      %v4135 = vrot.slane %v4073, 3
      %v4136 = vrot.slane %v4074, 3
      %v4137 = vsel %vm976, %v4135, %v4136
      %v4138 = vrot.slane %v4075, 3
      %v4139 = vsel %vm976, %v4136, %v4138
      %v4156 = vadd.f32 %v4032, %v4102
      %v4157 = vadd.f32 %v4033, %v4104
      %v4158 = vadd.f32 %v4034, %v4107
      %v4159 = vadd.f32 %v4035, %v4109
      %v4160 = vadd.f32 %v4036, %v4112
      %v4161 = vadd.f32 %v4037, %v4114
      %v4162 = vadd.f32 %v4038, %v4117
      %v4163 = vadd.f32 %v4039, %v4119
      %v4164 = vadd.f32 %v4040, %v4122
      %v4165 = vadd.f32 %v4041, %v4124
      %v4166 = vadd.f32 %v4042, %v4127
      %v4167 = vadd.f32 %v4043, %v4129
      %v4168 = vadd.f32 %v4044, %v4132
      %v4169 = vadd.f32 %v4045, %v4134
      %v4170 = vadd.f32 %v4046, %v4137
      %v4171 = vadd.f32 %v4047, %v4139
      %v4172 = vlaneseq
      %v4173 = vshrl.u32 %v4172, 7
      %v4174 = vsub.s32 0, %v4173
      %v4175 = vrot.slane %v635, %v4174
      %v4176 = vmul.f32 %v4175, %v601
      %v4177 = vmul.f32 %v4175, %v602
      %v4178 = vmul.f32 %v4175, %v603
      %v4179 = vmul.f32 %v4175, %v604
      %v4180 = vmul.f32 %v4175, %v605
      %v4181 = vmul.f32 %v4175, %v606
      %v4182 = vmul.f32 %v4175, %v607
      %v4183 = vmul.f32 %v4175, %v608
      %v4184 = vmul.f32 %v4175, %v609
      %v4185 = vmul.f32 %v4175, %v610
      %v4186 = vmul.f32 %v4175, %v611
      %v4187 = vmul.f32 %v4175, %v612
      %v4188 = vmul.f32 %v4175, %v613
      %v4189 = vmul.f32 %v4175, %v614
      %v4190 = vmul.f32 %v4175, %v615
      %v4191 = vmul.f32 %v4175, %v616
      %v4192 = vmul.f32 %v4175, %v617
      %v4193 = vmul.f32 %v4175, %v618
      %v4194 = vmul.f32 %v4175, %v619
      %v4195 = vmul.f32 %v4175, %v620
      %v4196 = vmul.f32 %v4175, %v621
      %v4197 = vmul.f32 %v4175, %v622
      %v4198 = vmul.f32 %v4175, %v623
      %v4199 = vmul.f32 %v4175, %v624
      %v4224 = vrot.slane %v4176, 4
      %v4225 = vrot.slane %v4177, 4
      %v4226 = vsel %vm1101, %v4224, %v4225
      %v4227 = vrot.slane %v4178, 4
      %v4228 = vsel %vm1101, %v4225, %v4227
      %v4229 = vrot.slane %v4179, 4
      %v4230 = vrot.slane %v4180, 4
      %v4231 = vsel %vm1101, %v4229, %v4230
      %v4232 = vrot.slane %v4181, 4
      %v4233 = vsel %vm1101, %v4230, %v4232
      %v4234 = vrot.slane %v4182, 4
      %v4235 = vrot.slane %v4183, 4
      %v4236 = vsel %vm1101, %v4234, %v4235
      %v4237 = vrot.slane %v4184, 4
      %v4238 = vsel %vm1101, %v4235, %v4237
      %v4239 = vrot.slane %v4185, 4
      %v4240 = vrot.slane %v4186, 4
      %v4241 = vsel %vm1101, %v4239, %v4240
      %v4242 = vrot.slane %v4187, 4
      %v4243 = vsel %vm1101, %v4240, %v4242
      %v4244 = vrot.slane %v4188, 4
      %v4245 = vrot.slane %v4189, 4
      %v4246 = vsel %vm1101, %v4244, %v4245
      %v4247 = vrot.slane %v4190, 4
      %v4248 = vsel %vm1101, %v4245, %v4247
      %v4249 = vrot.slane %v4191, 4
      %v4250 = vrot.slane %v4192, 4
      %v4251 = vsel %vm1101, %v4249, %v4250
      %v4252 = vrot.slane %v4193, 4
      %v4253 = vsel %vm1101, %v4250, %v4252
      %v4254 = vrot.slane %v4194, 4
      %v4255 = vrot.slane %v4195, 4
      %v4256 = vsel %vm1101, %v4254, %v4255
      %v4257 = vrot.slane %v4196, 4
      %v4258 = vsel %vm1101, %v4255, %v4257
      %v4259 = vrot.slane %v4197, 4
      %v4260 = vrot.slane %v4198, 4
      %v4261 = vsel %vm1101, %v4259, %v4260
      %v4262 = vrot.slane %v4199, 4
      %v4263 = vsel %vm1101, %v4260, %v4262
      %v4280 = vadd.f32 %v4156, %v4226
      %v4281 = vadd.f32 %v4157, %v4228
      %v4282 = vadd.f32 %v4158, %v4231
      %v4283 = vadd.f32 %v4159, %v4233
      %v4284 = vadd.f32 %v4160, %v4236
      %v4285 = vadd.f32 %v4161, %v4238
      %v4286 = vadd.f32 %v4162, %v4241
      %v4287 = vadd.f32 %v4163, %v4243
      %v4288 = vadd.f32 %v4164, %v4246
      %v4289 = vadd.f32 %v4165, %v4248
      %v4290 = vadd.f32 %v4166, %v4251
      %v4291 = vadd.f32 %v4167, %v4253
      %v4292 = vadd.f32 %v4168, %v4256
      %v4293 = vadd.f32 %v4169, %v4258
      %v4294 = vadd.f32 %v4170, %v4261
      %v4295 = vadd.f32 %v4171, %v4263
      %v4296 = vlaneseq
      %v4297 = vshrl.u32 %v4296, 7
      %v4298 = vsub.s32 1, %v4297
      %v4299 = vrot.slane %v635, %v4298
      %v4300 = vmul.f32 %v4299, %v601
      %v4301 = vmul.f32 %v4299, %v602
      %v4302 = vmul.f32 %v4299, %v603
      %v4303 = vmul.f32 %v4299, %v604
      %v4304 = vmul.f32 %v4299, %v605
      %v4305 = vmul.f32 %v4299, %v606
      %v4306 = vmul.f32 %v4299, %v607
      %v4307 = vmul.f32 %v4299, %v608
      %v4308 = vmul.f32 %v4299, %v609
      %v4309 = vmul.f32 %v4299, %v610
      %v4310 = vmul.f32 %v4299, %v611
      %v4311 = vmul.f32 %v4299, %v612
      %v4312 = vmul.f32 %v4299, %v613
      %v4313 = vmul.f32 %v4299, %v614
      %v4314 = vmul.f32 %v4299, %v615
      %v4315 = vmul.f32 %v4299, %v616
      %v4316 = vmul.f32 %v4299, %v617
      %v4317 = vmul.f32 %v4299, %v618
      %v4318 = vmul.f32 %v4299, %v619
      %v4319 = vmul.f32 %v4299, %v620
      %v4320 = vmul.f32 %v4299, %v621
      %v4321 = vmul.f32 %v4299, %v622
      %v4322 = vmul.f32 %v4299, %v623
      %v4323 = vmul.f32 %v4299, %v624
      %v4348 = vrot.slane %v4300, 5
      %v4349 = vrot.slane %v4301, 5
      %v4350 = vsel %vm1226, %v4348, %v4349
      %v4351 = vrot.slane %v4302, 5
      %v4352 = vsel %vm1226, %v4349, %v4351
      %v4353 = vrot.slane %v4303, 5
      %v4354 = vrot.slane %v4304, 5
      %v4355 = vsel %vm1226, %v4353, %v4354
      %v4356 = vrot.slane %v4305, 5
      %v4357 = vsel %vm1226, %v4354, %v4356
      %v4358 = vrot.slane %v4306, 5
      %v4359 = vrot.slane %v4307, 5
      %v4360 = vsel %vm1226, %v4358, %v4359
      %v4361 = vrot.slane %v4308, 5
      %v4362 = vsel %vm1226, %v4359, %v4361
      %v4363 = vrot.slane %v4309, 5
      %v4364 = vrot.slane %v4310, 5
      %v4365 = vsel %vm1226, %v4363, %v4364
      %v4366 = vrot.slane %v4311, 5
      %v4367 = vsel %vm1226, %v4364, %v4366
      %v4368 = vrot.slane %v4312, 5
      %v4369 = vrot.slane %v4313, 5
      %v4370 = vsel %vm1226, %v4368, %v4369
      %v4371 = vrot.slane %v4314, 5
      %v4372 = vsel %vm1226, %v4369, %v4371
      %v4373 = vrot.slane %v4315, 5
      %v4374 = vrot.slane %v4316, 5
      %v4375 = vsel %vm1226, %v4373, %v4374
      %v4376 = vrot.slane %v4317, 5
      %v4377 = vsel %vm1226, %v4374, %v4376
      %v4378 = vrot.slane %v4318, 5
      %v4379 = vrot.slane %v4319, 5
      %v4380 = vsel %vm1226, %v4378, %v4379
      %v4381 = vrot.slane %v4320, 5
      %v4382 = vsel %vm1226, %v4379, %v4381
      %v4383 = vrot.slane %v4321, 5
      %v4384 = vrot.slane %v4322, 5
      %v4385 = vsel %vm1226, %v4383, %v4384
      %v4386 = vrot.slane %v4323, 5
      %v4387 = vsel %vm1226, %v4384, %v4386
      %v4404 = vadd.f32 %v4280, %v4350
      %v4405 = vadd.f32 %v4281, %v4352
      %v4406 = vadd.f32 %v4282, %v4355
      %v4407 = vadd.f32 %v4283, %v4357
      %v4408 = vadd.f32 %v4284, %v4360
      %v4409 = vadd.f32 %v4285, %v4362
      %v4410 = vadd.f32 %v4286, %v4365
      %v4411 = vadd.f32 %v4287, %v4367
      %v4412 = vadd.f32 %v4288, %v4370
      %v4413 = vadd.f32 %v4289, %v4372
      %v4414 = vadd.f32 %v4290, %v4375
      %v4415 = vadd.f32 %v4291, %v4377
      %v4416 = vadd.f32 %v4292, %v4380
      %v4417 = vadd.f32 %v4293, %v4382
      %v4418 = vadd.f32 %v4294, %v4385
      %v4419 = vadd.f32 %v4295, %v4387
      %v4420 = vlaneseq
      %v4421 = vshrl.u32 %v4420, 7
      %v4422 = vsub.s32 2, %v4421
      %v4423 = vrot.slane %v635, %v4422
      %v4424 = vmul.f32 %v4423, %v601
      %v4425 = vmul.f32 %v4423, %v602
      %v4426 = vmul.f32 %v4423, %v603
      %v4427 = vmul.f32 %v4423, %v604
      %v4428 = vmul.f32 %v4423, %v605
      %v4429 = vmul.f32 %v4423, %v606
      %v4430 = vmul.f32 %v4423, %v607
      %v4431 = vmul.f32 %v4423, %v608
      %v4432 = vmul.f32 %v4423, %v609
      %v4433 = vmul.f32 %v4423, %v610
      %v4434 = vmul.f32 %v4423, %v611
      %v4435 = vmul.f32 %v4423, %v612
      %v4436 = vmul.f32 %v4423, %v613
      %v4437 = vmul.f32 %v4423, %v614
      %v4438 = vmul.f32 %v4423, %v615
      %v4439 = vmul.f32 %v4423, %v616
      %v4440 = vmul.f32 %v4423, %v617
      %v4441 = vmul.f32 %v4423, %v618
      %v4442 = vmul.f32 %v4423, %v619
      %v4443 = vmul.f32 %v4423, %v620
      %v4444 = vmul.f32 %v4423, %v621
      %v4445 = vmul.f32 %v4423, %v622
      %v4446 = vmul.f32 %v4423, %v623
      %v4447 = vmul.f32 %v4423, %v624
      %v4472 = vrot.slane %v4424, 6
      %v4473 = vrot.slane %v4425, 6
      %v4474 = vsel %vm1351, %v4472, %v4473
      %v4475 = vrot.slane %v4426, 6
      %v4476 = vsel %vm1351, %v4473, %v4475
      %v4477 = vrot.slane %v4427, 6
      %v4478 = vrot.slane %v4428, 6
      %v4479 = vsel %vm1351, %v4477, %v4478
      %v4480 = vrot.slane %v4429, 6
      %v4481 = vsel %vm1351, %v4478, %v4480
      %v4482 = vrot.slane %v4430, 6
      %v4483 = vrot.slane %v4431, 6
      %v4484 = vsel %vm1351, %v4482, %v4483
      %v4485 = vrot.slane %v4432, 6
      %v4486 = vsel %vm1351, %v4483, %v4485
      %v4487 = vrot.slane %v4433, 6
      %v4488 = vrot.slane %v4434, 6
      %v4489 = vsel %vm1351, %v4487, %v4488
      %v4490 = vrot.slane %v4435, 6
      %v4491 = vsel %vm1351, %v4488, %v4490
      %v4492 = vrot.slane %v4436, 6
      %v4493 = vrot.slane %v4437, 6
      %v4494 = vsel %vm1351, %v4492, %v4493
      %v4495 = vrot.slane %v4438, 6
      %v4496 = vsel %vm1351, %v4493, %v4495
      %v4497 = vrot.slane %v4439, 6
      %v4498 = vrot.slane %v4440, 6
      %v4499 = vsel %vm1351, %v4497, %v4498
      %v4500 = vrot.slane %v4441, 6
      %v4501 = vsel %vm1351, %v4498, %v4500
      %v4502 = vrot.slane %v4442, 6
      %v4503 = vrot.slane %v4443, 6
      %v4504 = vsel %vm1351, %v4502, %v4503
      %v4505 = vrot.slane %v4444, 6
      %v4506 = vsel %vm1351, %v4503, %v4505
      %v4507 = vrot.slane %v4445, 6
      %v4508 = vrot.slane %v4446, 6
      %v4509 = vsel %vm1351, %v4507, %v4508
      %v4510 = vrot.slane %v4447, 6
      %v4511 = vsel %vm1351, %v4508, %v4510
      %v4528 = vadd.f32 %v4404, %v4474
      %v4529 = vadd.f32 %v4405, %v4476
      %v4530 = vadd.f32 %v4406, %v4479
      %v4531 = vadd.f32 %v4407, %v4481
      %v4532 = vadd.f32 %v4408, %v4484
      %v4533 = vadd.f32 %v4409, %v4486
      %v4534 = vadd.f32 %v4410, %v4489
      %v4535 = vadd.f32 %v4411, %v4491
      %v4536 = vadd.f32 %v4412, %v4494
      %v4537 = vadd.f32 %v4413, %v4496
      %v4538 = vadd.f32 %v4414, %v4499
      %v4539 = vadd.f32 %v4415, %v4501
      %v4540 = vadd.f32 %v4416, %v4504
      %v4541 = vadd.f32 %v4417, %v4506
      %v4542 = vadd.f32 %v4418, %v4509
      %v4543 = vadd.f32 %v4419, %v4511
      %v4544 = vlaneseq
      %v4545 = vshrl.u32 %v4544, 7
      %v4546 = vsub.s32 3, %v4545
      %v4547 = vrot.slane %v635, %v4546
      %v4548 = vmul.f32 %v4547, %v604
      %v4549 = vmul.f32 %v4547, %v605
      %v4550 = vmul.f32 %v4547, %v607
      %v4551 = vmul.f32 %v4547, %v608
      %v4552 = vmul.f32 %v4547, %v610
      %v4553 = vmul.f32 %v4547, %v611
      %v4554 = vmul.f32 %v4547, %v613
      %v4555 = vmul.f32 %v4547, %v614
      %v4556 = vmul.f32 %v4547, %v616
      %v4557 = vmul.f32 %v4547, %v617
      %v4558 = vmul.f32 %v4547, %v619
      %v4559 = vmul.f32 %v4547, %v620
      %v4560 = vmul.f32 %v4547, %v622
      %v4561 = vmul.f32 %v4547, %v623
      %v4562 = vmul.f32 %v4547, %v625
      %v4563 = vmul.f32 %v4547, %v626
      %v4564 = vadd.f32 %v4528, %v4548
      %v4565 = vadd.f32 %v4529, %v4549
      %v4566 = vadd.f32 %v4530, %v4550
      %v4567 = vadd.f32 %v4531, %v4551
      %v4568 = vadd.f32 %v4532, %v4552
      %v4569 = vadd.f32 %v4533, %v4553
      %v4570 = vadd.f32 %v4534, %v4554
      %v4571 = vadd.f32 %v4535, %v4555
      %v4572 = vadd.f32 %v4536, %v4556
      %v4573 = vadd.f32 %v4537, %v4557
      %v4574 = vadd.f32 %v4538, %v4558
      %v4575 = vadd.f32 %v4539, %v4559
      %v4576 = vadd.f32 %v4540, %v4560
      %v4577 = vadd.f32 %v4541, %v4561
      %v4578 = vadd.f32 %v4542, %v4562
      %v4579 = vadd.f32 %v4543, %v4563
      %v4580 = vlaneseq
      %v4581 = vshrl.u32 %v4580, 7
      %v4582 = vsub.s32 4, %v4581
      %v4583 = vrot.slane %v635, %v4582
      %v4584 = vmul.f32 %v4583, %v604
      %v4585 = vmul.f32 %v4583, %v605
      %v4586 = vmul.f32 %v4583, %v606
      %v4587 = vmul.f32 %v4583, %v607
      %v4588 = vmul.f32 %v4583, %v608
      %v4589 = vmul.f32 %v4583, %v609
      %v4590 = vmul.f32 %v4583, %v610
      %v4591 = vmul.f32 %v4583, %v611
      %v4592 = vmul.f32 %v4583, %v612
      %v4593 = vmul.f32 %v4583, %v613
      %v4594 = vmul.f32 %v4583, %v614
      %v4595 = vmul.f32 %v4583, %v615
      %v4596 = vmul.f32 %v4583, %v616
      %v4597 = vmul.f32 %v4583, %v617
      %v4598 = vmul.f32 %v4583, %v618
      %v4599 = vmul.f32 %v4583, %v619
      %v4600 = vmul.f32 %v4583, %v620
      %v4601 = vmul.f32 %v4583, %v621
      %v4602 = vmul.f32 %v4583, %v622
      %v4603 = vmul.f32 %v4583, %v623
      %v4604 = vmul.f32 %v4583, %v624
      %v4605 = vmul.f32 %v4583, %v625
      %v4606 = vmul.f32 %v4583, %v626
      %v4607 = vmul.f32 %v4583, %v627
      %v4632 = vrot.slane %v4584, 1
      %v4633 = vrot.slane %v4585, 1
      %v4634 = vsel %vm726, %v4632, %v4633
      %v4635 = vrot.slane %v4586, 1
      %v4636 = vsel %vm726, %v4633, %v4635
      %v4637 = vrot.slane %v4587, 1
      %v4638 = vrot.slane %v4588, 1
      %v4639 = vsel %vm726, %v4637, %v4638
      %v4640 = vrot.slane %v4589, 1
      %v4641 = vsel %vm726, %v4638, %v4640
      %v4642 = vrot.slane %v4590, 1
      %v4643 = vrot.slane %v4591, 1
      %v4644 = vsel %vm726, %v4642, %v4643
      %v4645 = vrot.slane %v4592, 1
      %v4646 = vsel %vm726, %v4643, %v4645
      %v4647 = vrot.slane %v4593, 1
      %v4648 = vrot.slane %v4594, 1
      %v4649 = vsel %vm726, %v4647, %v4648
      %v4650 = vrot.slane %v4595, 1
      %v4651 = vsel %vm726, %v4648, %v4650
      %v4652 = vrot.slane %v4596, 1
      %v4653 = vrot.slane %v4597, 1
      %v4654 = vsel %vm726, %v4652, %v4653
      %v4655 = vrot.slane %v4598, 1
      %v4656 = vsel %vm726, %v4653, %v4655
      %v4657 = vrot.slane %v4599, 1
      %v4658 = vrot.slane %v4600, 1
      %v4659 = vsel %vm726, %v4657, %v4658
      %v4660 = vrot.slane %v4601, 1
      %v4661 = vsel %vm726, %v4658, %v4660
      %v4662 = vrot.slane %v4602, 1
      %v4663 = vrot.slane %v4603, 1
      %v4664 = vsel %vm726, %v4662, %v4663
      %v4665 = vrot.slane %v4604, 1
      %v4666 = vsel %vm726, %v4663, %v4665
      %v4667 = vrot.slane %v4605, 1
      %v4668 = vrot.slane %v4606, 1
      %v4669 = vsel %vm726, %v4667, %v4668
      %v4670 = vrot.slane %v4607, 1
      %v4671 = vsel %vm726, %v4668, %v4670
      %v4688 = vadd.f32 %v4564, %v4634
      %v4689 = vadd.f32 %v4565, %v4636
      %v4690 = vadd.f32 %v4566, %v4639
      %v4691 = vadd.f32 %v4567, %v4641
      %v4692 = vadd.f32 %v4568, %v4644
      %v4693 = vadd.f32 %v4569, %v4646
      %v4694 = vadd.f32 %v4570, %v4649
      %v4695 = vadd.f32 %v4571, %v4651
      %v4696 = vadd.f32 %v4572, %v4654
      %v4697 = vadd.f32 %v4573, %v4656
      %v4698 = vadd.f32 %v4574, %v4659
      %v4699 = vadd.f32 %v4575, %v4661
      %v4700 = vadd.f32 %v4576, %v4664
      %v4701 = vadd.f32 %v4577, %v4666
      %v4702 = vadd.f32 %v4578, %v4669
      %v4703 = vadd.f32 %v4579, %v4671
      %v4704 = vlaneseq
      %v4705 = vshrl.u32 %v4704, 7
      %v4706 = vsub.s32 5, %v4705
      %v4707 = vrot.slane %v635, %v4706
      %v4708 = vmul.f32 %v4707, %v604
      %v4709 = vmul.f32 %v4707, %v605
      %v4710 = vmul.f32 %v4707, %v606
      %v4711 = vmul.f32 %v4707, %v607
      %v4712 = vmul.f32 %v4707, %v608
      %v4713 = vmul.f32 %v4707, %v609
      %v4714 = vmul.f32 %v4707, %v610
      %v4715 = vmul.f32 %v4707, %v611
      %v4716 = vmul.f32 %v4707, %v612
      %v4717 = vmul.f32 %v4707, %v613
      %v4718 = vmul.f32 %v4707, %v614
      %v4719 = vmul.f32 %v4707, %v615
      %v4720 = vmul.f32 %v4707, %v616
      %v4721 = vmul.f32 %v4707, %v617
      %v4722 = vmul.f32 %v4707, %v618
      %v4723 = vmul.f32 %v4707, %v619
      %v4724 = vmul.f32 %v4707, %v620
      %v4725 = vmul.f32 %v4707, %v621
      %v4726 = vmul.f32 %v4707, %v622
      %v4727 = vmul.f32 %v4707, %v623
      %v4728 = vmul.f32 %v4707, %v624
      %v4729 = vmul.f32 %v4707, %v625
      %v4730 = vmul.f32 %v4707, %v626
      %v4731 = vmul.f32 %v4707, %v627
      %v4756 = vrot.slane %v4708, 2
      %v4757 = vrot.slane %v4709, 2
      %v4758 = vsel %vm851, %v4756, %v4757
      %v4759 = vrot.slane %v4710, 2
      %v4760 = vsel %vm851, %v4757, %v4759
      %v4761 = vrot.slane %v4711, 2
      %v4762 = vrot.slane %v4712, 2
      %v4763 = vsel %vm851, %v4761, %v4762
      %v4764 = vrot.slane %v4713, 2
      %v4765 = vsel %vm851, %v4762, %v4764
      %v4766 = vrot.slane %v4714, 2
      %v4767 = vrot.slane %v4715, 2
      %v4768 = vsel %vm851, %v4766, %v4767
      %v4769 = vrot.slane %v4716, 2
      %v4770 = vsel %vm851, %v4767, %v4769
      %v4771 = vrot.slane %v4717, 2
      %v4772 = vrot.slane %v4718, 2
      %v4773 = vsel %vm851, %v4771, %v4772
      %v4774 = vrot.slane %v4719, 2
      %v4775 = vsel %vm851, %v4772, %v4774
      %v4776 = vrot.slane %v4720, 2
      %v4777 = vrot.slane %v4721, 2
      %v4778 = vsel %vm851, %v4776, %v4777
      %v4779 = vrot.slane %v4722, 2
      %v4780 = vsel %vm851, %v4777, %v4779
      %v4781 = vrot.slane %v4723, 2
      %v4782 = vrot.slane %v4724, 2
      %v4783 = vsel %vm851, %v4781, %v4782
      %v4784 = vrot.slane %v4725, 2
      %v4785 = vsel %vm851, %v4782, %v4784
      %v4786 = vrot.slane %v4726, 2
      %v4787 = vrot.slane %v4727, 2
      %v4788 = vsel %vm851, %v4786, %v4787
      %v4789 = vrot.slane %v4728, 2
      %v4790 = vsel %vm851, %v4787, %v4789
      %v4791 = vrot.slane %v4729, 2
      %v4792 = vrot.slane %v4730, 2
      %v4793 = vsel %vm851, %v4791, %v4792
      %v4794 = vrot.slane %v4731, 2
      %v4795 = vsel %vm851, %v4792, %v4794
      %v4812 = vadd.f32 %v4688, %v4758
      %v4813 = vadd.f32 %v4689, %v4760
      %v4814 = vadd.f32 %v4690, %v4763
      %v4815 = vadd.f32 %v4691, %v4765
      %v4816 = vadd.f32 %v4692, %v4768
      %v4817 = vadd.f32 %v4693, %v4770
      %v4818 = vadd.f32 %v4694, %v4773
      %v4819 = vadd.f32 %v4695, %v4775
      %v4820 = vadd.f32 %v4696, %v4778
      %v4821 = vadd.f32 %v4697, %v4780
      %v4822 = vadd.f32 %v4698, %v4783
      %v4823 = vadd.f32 %v4699, %v4785
      %v4824 = vadd.f32 %v4700, %v4788
      %v4825 = vadd.f32 %v4701, %v4790
      %v4826 = vadd.f32 %v4702, %v4793
      %v4827 = vadd.f32 %v4703, %v4795
      %v4828 = vlaneseq
      %v4829 = vshrl.u32 %v4828, 7
      %v4830 = vsub.s32 6, %v4829
      %v4831 = vrot.slane %v635, %v4830
      %v4832 = vmul.f32 %v4831, %v604
      %v4833 = vmul.f32 %v4831, %v605
      %v4834 = vmul.f32 %v4831, %v606
      %v4835 = vmul.f32 %v4831, %v607
      %v4836 = vmul.f32 %v4831, %v608
      %v4837 = vmul.f32 %v4831, %v609
      %v4838 = vmul.f32 %v4831, %v610
      %v4839 = vmul.f32 %v4831, %v611
      %v4840 = vmul.f32 %v4831, %v612
      %v4841 = vmul.f32 %v4831, %v613
      %v4842 = vmul.f32 %v4831, %v614
      %v4843 = vmul.f32 %v4831, %v615
      %v4844 = vmul.f32 %v4831, %v616
      %v4845 = vmul.f32 %v4831, %v617
      %v4846 = vmul.f32 %v4831, %v618
      %v4847 = vmul.f32 %v4831, %v619
      %v4848 = vmul.f32 %v4831, %v620
      %v4849 = vmul.f32 %v4831, %v621
      %v4850 = vmul.f32 %v4831, %v622
      %v4851 = vmul.f32 %v4831, %v623
      %v4852 = vmul.f32 %v4831, %v624
      %v4853 = vmul.f32 %v4831, %v625
      %v4854 = vmul.f32 %v4831, %v626
      %v4855 = vmul.f32 %v4831, %v627
      %v4880 = vrot.slane %v4832, 3
      %v4881 = vrot.slane %v4833, 3
      %v4882 = vsel %vm976, %v4880, %v4881
      %v4883 = vrot.slane %v4834, 3
      %v4884 = vsel %vm976, %v4881, %v4883
      %v4885 = vrot.slane %v4835, 3
      %v4886 = vrot.slane %v4836, 3
      %v4887 = vsel %vm976, %v4885, %v4886
      %v4888 = vrot.slane %v4837, 3
      %v4889 = vsel %vm976, %v4886, %v4888
      %v4890 = vrot.slane %v4838, 3
      %v4891 = vrot.slane %v4839, 3
      %v4892 = vsel %vm976, %v4890, %v4891
      %v4893 = vrot.slane %v4840, 3
      %v4894 = vsel %vm976, %v4891, %v4893
      %v4895 = vrot.slane %v4841, 3
      %v4896 = vrot.slane %v4842, 3
      %v4897 = vsel %vm976, %v4895, %v4896
      %v4898 = vrot.slane %v4843, 3
      %v4899 = vsel %vm976, %v4896, %v4898
      %v4900 = vrot.slane %v4844, 3
      %v4901 = vrot.slane %v4845, 3
      %v4902 = vsel %vm976, %v4900, %v4901
      %v4903 = vrot.slane %v4846, 3
      %v4904 = vsel %vm976, %v4901, %v4903
      %v4905 = vrot.slane %v4847, 3
      %v4906 = vrot.slane %v4848, 3
      %v4907 = vsel %vm976, %v4905, %v4906
      %v4908 = vrot.slane %v4849, 3
      %v4909 = vsel %vm976, %v4906, %v4908
      %v4910 = vrot.slane %v4850, 3
      %v4911 = vrot.slane %v4851, 3
      %v4912 = vsel %vm976, %v4910, %v4911
      %v4913 = vrot.slane %v4852, 3
      %v4914 = vsel %vm976, %v4911, %v4913
      %v4915 = vrot.slane %v4853, 3
      %v4916 = vrot.slane %v4854, 3
      %v4917 = vsel %vm976, %v4915, %v4916
      %v4918 = vrot.slane %v4855, 3
      %v4919 = vsel %vm976, %v4916, %v4918
      %v4936 = vadd.f32 %v4812, %v4882
      %v4937 = vadd.f32 %v4813, %v4884
      %v4938 = vadd.f32 %v4814, %v4887
      %v4939 = vadd.f32 %v4815, %v4889
      %v4940 = vadd.f32 %v4816, %v4892
      %v4941 = vadd.f32 %v4817, %v4894
      %v4942 = vadd.f32 %v4818, %v4897
      %v4943 = vadd.f32 %v4819, %v4899
      %v4944 = vadd.f32 %v4820, %v4902
      %v4945 = vadd.f32 %v4821, %v4904
      %v4946 = vadd.f32 %v4822, %v4907
      %v4947 = vadd.f32 %v4823, %v4909
      %v4948 = vadd.f32 %v4824, %v4912
      %v4949 = vadd.f32 %v4825, %v4914
      %v4950 = vadd.f32 %v4826, %v4917
      %v4951 = vadd.f32 %v4827, %v4919
      %v4952 = vlaneseq
      %v4953 = vshrl.u32 %v4952, 7
      %v4954 = vsub.s32 7, %v4953
      %v4955 = vrot.slane %v635, %v4954
      %v4956 = vmul.f32 %v4955, %v604
      %v4957 = vmul.f32 %v4955, %v605
      %v4958 = vmul.f32 %v4955, %v606
      %v4959 = vmul.f32 %v4955, %v607
      %v4960 = vmul.f32 %v4955, %v608
      %v4961 = vmul.f32 %v4955, %v609
      %v4962 = vmul.f32 %v4955, %v610
      %v4963 = vmul.f32 %v4955, %v611
      %v4964 = vmul.f32 %v4955, %v612
      %v4965 = vmul.f32 %v4955, %v613
      %v4966 = vmul.f32 %v4955, %v614
      %v4967 = vmul.f32 %v4955, %v615
      %v4968 = vmul.f32 %v4955, %v616
      %v4969 = vmul.f32 %v4955, %v617
      %v4970 = vmul.f32 %v4955, %v618
      %v4971 = vmul.f32 %v4955, %v619
      %v4972 = vmul.f32 %v4955, %v620
      %v4973 = vmul.f32 %v4955, %v621
      %v4974 = vmul.f32 %v4955, %v622
      %v4975 = vmul.f32 %v4955, %v623
      %v4976 = vmul.f32 %v4955, %v624
      %v4977 = vmul.f32 %v4955, %v625
      %v4978 = vmul.f32 %v4955, %v626
      %v4979 = vmul.f32 %v4955, %v627
      %v5004 = vrot.slane %v4956, 4
      %v5005 = vrot.slane %v4957, 4
      %v5006 = vsel %vm1101, %v5004, %v5005
      %v5007 = vrot.slane %v4958, 4
      %v5008 = vsel %vm1101, %v5005, %v5007
      %v5009 = vrot.slane %v4959, 4
      %v5010 = vrot.slane %v4960, 4
      %v5011 = vsel %vm1101, %v5009, %v5010
      %v5012 = vrot.slane %v4961, 4
      %v5013 = vsel %vm1101, %v5010, %v5012
      %v5014 = vrot.slane %v4962, 4
      %v5015 = vrot.slane %v4963, 4
      %v5016 = vsel %vm1101, %v5014, %v5015
      %v5017 = vrot.slane %v4964, 4
      %v5018 = vsel %vm1101, %v5015, %v5017
      %v5019 = vrot.slane %v4965, 4
      %v5020 = vrot.slane %v4966, 4
      %v5021 = vsel %vm1101, %v5019, %v5020
      %v5022 = vrot.slane %v4967, 4
      %v5023 = vsel %vm1101, %v5020, %v5022
      %v5024 = vrot.slane %v4968, 4
      %v5025 = vrot.slane %v4969, 4
      %v5026 = vsel %vm1101, %v5024, %v5025
      %v5027 = vrot.slane %v4970, 4
      %v5028 = vsel %vm1101, %v5025, %v5027
      %v5029 = vrot.slane %v4971, 4
      %v5030 = vrot.slane %v4972, 4
      %v5031 = vsel %vm1101, %v5029, %v5030
      %v5032 = vrot.slane %v4973, 4
      %v5033 = vsel %vm1101, %v5030, %v5032
      %v5034 = vrot.slane %v4974, 4
      %v5035 = vrot.slane %v4975, 4
      %v5036 = vsel %vm1101, %v5034, %v5035
      %v5037 = vrot.slane %v4976, 4
      %v5038 = vsel %vm1101, %v5035, %v5037
      %v5039 = vrot.slane %v4977, 4
      %v5040 = vrot.slane %v4978, 4
      %v5041 = vsel %vm1101, %v5039, %v5040
      %v5042 = vrot.slane %v4979, 4
      %v5043 = vsel %vm1101, %v5040, %v5042
      %v5060 = vadd.f32 %v4936, %v5006
      %v5061 = vadd.f32 %v4937, %v5008
      %v5062 = vadd.f32 %v4938, %v5011
      %v5063 = vadd.f32 %v4939, %v5013
      %v5064 = vadd.f32 %v4940, %v5016
      %v5065 = vadd.f32 %v4941, %v5018
      %v5066 = vadd.f32 %v4942, %v5021
      %v5067 = vadd.f32 %v4943, %v5023
      %v5068 = vadd.f32 %v4944, %v5026
      %v5069 = vadd.f32 %v4945, %v5028
      %v5070 = vadd.f32 %v4946, %v5031
      %v5071 = vadd.f32 %v4947, %v5033
      %v5072 = vadd.f32 %v4948, %v5036
      %v5073 = vadd.f32 %v4949, %v5038
      %v5074 = vadd.f32 %v4950, %v5041
      %v5075 = vadd.f32 %v4951, %v5043
      %v5076 = vlaneseq
      %v5077 = vshrl.u32 %v5076, 7
      %v5078 = vsub.s32 0, %v5077
      %v5079 = vrot.slane %v636, %v5078
      %v5080 = vmul.f32 %v5079, %v604
      %v5081 = vmul.f32 %v5079, %v605
      %v5082 = vmul.f32 %v5079, %v606
      %v5083 = vmul.f32 %v5079, %v607
      %v5084 = vmul.f32 %v5079, %v608
      %v5085 = vmul.f32 %v5079, %v609
      %v5086 = vmul.f32 %v5079, %v610
      %v5087 = vmul.f32 %v5079, %v611
      %v5088 = vmul.f32 %v5079, %v612
      %v5089 = vmul.f32 %v5079, %v613
      %v5090 = vmul.f32 %v5079, %v614
      %v5091 = vmul.f32 %v5079, %v615
      %v5092 = vmul.f32 %v5079, %v616
      %v5093 = vmul.f32 %v5079, %v617
      %v5094 = vmul.f32 %v5079, %v618
      %v5095 = vmul.f32 %v5079, %v619
      %v5096 = vmul.f32 %v5079, %v620
      %v5097 = vmul.f32 %v5079, %v621
      %v5098 = vmul.f32 %v5079, %v622
      %v5099 = vmul.f32 %v5079, %v623
      %v5100 = vmul.f32 %v5079, %v624
      %v5101 = vmul.f32 %v5079, %v625
      %v5102 = vmul.f32 %v5079, %v626
      %v5103 = vmul.f32 %v5079, %v627
      %v5128 = vrot.slane %v5080, 5
      %v5129 = vrot.slane %v5081, 5
      %v5130 = vsel %vm1226, %v5128, %v5129
      %v5131 = vrot.slane %v5082, 5
      %v5132 = vsel %vm1226, %v5129, %v5131
      %v5133 = vrot.slane %v5083, 5
      %v5134 = vrot.slane %v5084, 5
      %v5135 = vsel %vm1226, %v5133, %v5134
      %v5136 = vrot.slane %v5085, 5
      %v5137 = vsel %vm1226, %v5134, %v5136
      %v5138 = vrot.slane %v5086, 5
      %v5139 = vrot.slane %v5087, 5
      %v5140 = vsel %vm1226, %v5138, %v5139
      %v5141 = vrot.slane %v5088, 5
      %v5142 = vsel %vm1226, %v5139, %v5141
      %v5143 = vrot.slane %v5089, 5
      %v5144 = vrot.slane %v5090, 5
      %v5145 = vsel %vm1226, %v5143, %v5144
      %v5146 = vrot.slane %v5091, 5
      %v5147 = vsel %vm1226, %v5144, %v5146
      %v5148 = vrot.slane %v5092, 5
      %v5149 = vrot.slane %v5093, 5
      %v5150 = vsel %vm1226, %v5148, %v5149
      %v5151 = vrot.slane %v5094, 5
      %v5152 = vsel %vm1226, %v5149, %v5151
      %v5153 = vrot.slane %v5095, 5
      %v5154 = vrot.slane %v5096, 5
      %v5155 = vsel %vm1226, %v5153, %v5154
      %v5156 = vrot.slane %v5097, 5
      %v5157 = vsel %vm1226, %v5154, %v5156
      %v5158 = vrot.slane %v5098, 5
      %v5159 = vrot.slane %v5099, 5
      %v5160 = vsel %vm1226, %v5158, %v5159
      %v5161 = vrot.slane %v5100, 5
      %v5162 = vsel %vm1226, %v5159, %v5161
      %v5163 = vrot.slane %v5101, 5
      %v5164 = vrot.slane %v5102, 5
      %v5165 = vsel %vm1226, %v5163, %v5164
      %v5166 = vrot.slane %v5103, 5
      %v5167 = vsel %vm1226, %v5164, %v5166
      %v5184 = vadd.f32 %v5060, %v5130
      %v5185 = vadd.f32 %v5061, %v5132
      %v5186 = vadd.f32 %v5062, %v5135
      %v5187 = vadd.f32 %v5063, %v5137
      %v5188 = vadd.f32 %v5064, %v5140
      %v5189 = vadd.f32 %v5065, %v5142
      %v5190 = vadd.f32 %v5066, %v5145
      %v5191 = vadd.f32 %v5067, %v5147
      %v5192 = vadd.f32 %v5068, %v5150
      %v5193 = vadd.f32 %v5069, %v5152
      %v5194 = vadd.f32 %v5070, %v5155
      %v5195 = vadd.f32 %v5071, %v5157
      %v5196 = vadd.f32 %v5072, %v5160
      %v5197 = vadd.f32 %v5073, %v5162
      %v5198 = vadd.f32 %v5074, %v5165
      %v5199 = vadd.f32 %v5075, %v5167
      %v5200 = vlaneseq
      %v5201 = vshrl.u32 %v5200, 7
      %v5202 = vsub.s32 1, %v5201
      %v5203 = vrot.slane %v636, %v5202
      %v5204 = vmul.f32 %v5203, %v604
      %v5205 = vmul.f32 %v5203, %v605
      %v5206 = vmul.f32 %v5203, %v606
      %v5207 = vmul.f32 %v5203, %v607
      %v5208 = vmul.f32 %v5203, %v608
      %v5209 = vmul.f32 %v5203, %v609
      %v5210 = vmul.f32 %v5203, %v610
      %v5211 = vmul.f32 %v5203, %v611
      %v5212 = vmul.f32 %v5203, %v612
      %v5213 = vmul.f32 %v5203, %v613
      %v5214 = vmul.f32 %v5203, %v614
      %v5215 = vmul.f32 %v5203, %v615
      %v5216 = vmul.f32 %v5203, %v616
      %v5217 = vmul.f32 %v5203, %v617
      %v5218 = vmul.f32 %v5203, %v618
      %v5219 = vmul.f32 %v5203, %v619
      %v5220 = vmul.f32 %v5203, %v620
      %v5221 = vmul.f32 %v5203, %v621
      %v5222 = vmul.f32 %v5203, %v622
      %v5223 = vmul.f32 %v5203, %v623
      %v5224 = vmul.f32 %v5203, %v624
      %v5225 = vmul.f32 %v5203, %v625
      %v5226 = vmul.f32 %v5203, %v626
      %v5227 = vmul.f32 %v5203, %v627
      %v5252 = vrot.slane %v5204, 6
      %v5253 = vrot.slane %v5205, 6
      %v5254 = vsel %vm1351, %v5252, %v5253
      %v5255 = vrot.slane %v5206, 6
      %v5256 = vsel %vm1351, %v5253, %v5255
      %v5257 = vrot.slane %v5207, 6
      %v5258 = vrot.slane %v5208, 6
      %v5259 = vsel %vm1351, %v5257, %v5258
      %v5260 = vrot.slane %v5209, 6
      %v5261 = vsel %vm1351, %v5258, %v5260
      %v5262 = vrot.slane %v5210, 6
      %v5263 = vrot.slane %v5211, 6
      %v5264 = vsel %vm1351, %v5262, %v5263
      %v5265 = vrot.slane %v5212, 6
      %v5266 = vsel %vm1351, %v5263, %v5265
      %v5267 = vrot.slane %v5213, 6
      %v5268 = vrot.slane %v5214, 6
      %v5269 = vsel %vm1351, %v5267, %v5268
      %v5270 = vrot.slane %v5215, 6
      %v5271 = vsel %vm1351, %v5268, %v5270
      %v5272 = vrot.slane %v5216, 6
      %v5273 = vrot.slane %v5217, 6
      %v5274 = vsel %vm1351, %v5272, %v5273
      %v5275 = vrot.slane %v5218, 6
      %v5276 = vsel %vm1351, %v5273, %v5275
      %v5277 = vrot.slane %v5219, 6
      %v5278 = vrot.slane %v5220, 6
      %v5279 = vsel %vm1351, %v5277, %v5278
      %v5280 = vrot.slane %v5221, 6
      %v5281 = vsel %vm1351, %v5278, %v5280
      %v5282 = vrot.slane %v5222, 6
      %v5283 = vrot.slane %v5223, 6
      %v5284 = vsel %vm1351, %v5282, %v5283
      %v5285 = vrot.slane %v5224, 6
      %v5286 = vsel %vm1351, %v5283, %v5285
      %v5287 = vrot.slane %v5225, 6
      %v5288 = vrot.slane %v5226, 6
      %v5289 = vsel %vm1351, %v5287, %v5288
      %v5290 = vrot.slane %v5227, 6
      %v5291 = vsel %vm1351, %v5288, %v5290
      %v5308 = vadd.f32 %v5184, %v5254
      %v5309 = vadd.f32 %v5185, %v5256
      %v5310 = vadd.f32 %v5186, %v5259
      %v5311 = vadd.f32 %v5187, %v5261
      %v5312 = vadd.f32 %v5188, %v5264
      %v5313 = vadd.f32 %v5189, %v5266
      %v5314 = vadd.f32 %v5190, %v5269
      %v5315 = vadd.f32 %v5191, %v5271
      %v5316 = vadd.f32 %v5192, %v5274
      %v5317 = vadd.f32 %v5193, %v5276
      %v5318 = vadd.f32 %v5194, %v5279
      %v5319 = vadd.f32 %v5195, %v5281
      %v5320 = vadd.f32 %v5196, %v5284
      %v5321 = vadd.f32 %v5197, %v5286
      %v5322 = vadd.f32 %v5198, %v5289
      %v5323 = vadd.f32 %v5199, %v5291
      %v5324 = vlaneseq
      %v5325 = vshrl.u32 %v5324, 7
      %v5326 = vsub.s32 2, %v5325
      %v5327 = vrot.slane %v636, %v5326
      %v5328 = vmul.f32 %v5327, %v607
      %v5329 = vmul.f32 %v5327, %v608
      %v5330 = vmul.f32 %v5327, %v610
      %v5331 = vmul.f32 %v5327, %v611
      %v5332 = vmul.f32 %v5327, %v613
      %v5333 = vmul.f32 %v5327, %v614
      %v5334 = vmul.f32 %v5327, %v616
      %v5335 = vmul.f32 %v5327, %v617
      %v5336 = vmul.f32 %v5327, %v619
      %v5337 = vmul.f32 %v5327, %v620
      %v5338 = vmul.f32 %v5327, %v622
      %v5339 = vmul.f32 %v5327, %v623
      %v5340 = vmul.f32 %v5327, %v625
      %v5341 = vmul.f32 %v5327, %v626
      %v5342 = vmul.f32 %v5327, %v628
      %v5343 = vmul.f32 %v5327, %v629
      %v5344 = vadd.f32 %v5308, %v5328
      %v5345 = vadd.f32 %v5309, %v5329
      %v5346 = vadd.f32 %v5310, %v5330
      %v5347 = vadd.f32 %v5311, %v5331
      %v5348 = vadd.f32 %v5312, %v5332
      %v5349 = vadd.f32 %v5313, %v5333
      %v5350 = vadd.f32 %v5314, %v5334
      %v5351 = vadd.f32 %v5315, %v5335
      %v5352 = vadd.f32 %v5316, %v5336
      %v5353 = vadd.f32 %v5317, %v5337
      %v5354 = vadd.f32 %v5318, %v5338
      %v5355 = vadd.f32 %v5319, %v5339
      %v5356 = vadd.f32 %v5320, %v5340
      %v5357 = vadd.f32 %v5321, %v5341
      %v5358 = vadd.f32 %v5322, %v5342
      %v5359 = vadd.f32 %v5323, %v5343
      %v5360 = vlaneseq
      %v5361 = vshrl.u32 %v5360, 7
      %v5362 = vsub.s32 3, %v5361
      %v5363 = vrot.slane %v636, %v5362
      %v5364 = vmul.f32 %v5363, %v607
      %v5365 = vmul.f32 %v5363, %v608
      %v5366 = vmul.f32 %v5363, %v609
      %v5367 = vmul.f32 %v5363, %v610
      %v5368 = vmul.f32 %v5363, %v611
      %v5369 = vmul.f32 %v5363, %v612
      %v5370 = vmul.f32 %v5363, %v613
      %v5371 = vmul.f32 %v5363, %v614
      %v5372 = vmul.f32 %v5363, %v615
      %v5373 = vmul.f32 %v5363, %v616
      %v5374 = vmul.f32 %v5363, %v617
      %v5375 = vmul.f32 %v5363, %v618
      %v5376 = vmul.f32 %v5363, %v619
      %v5377 = vmul.f32 %v5363, %v620
      %v5378 = vmul.f32 %v5363, %v621
      %v5379 = vmul.f32 %v5363, %v622
      %v5380 = vmul.f32 %v5363, %v623
      %v5381 = vmul.f32 %v5363, %v624
      %v5382 = vmul.f32 %v5363, %v625
      %v5383 = vmul.f32 %v5363, %v626
      %v5384 = vmul.f32 %v5363, %v627
      %v5385 = vmul.f32 %v5363, %v628
      %v5386 = vmul.f32 %v5363, %v629
      %v5387 = vmul.f32 %v5363, %v630
      %v5412 = vrot.slane %v5364, 1
      %v5413 = vrot.slane %v5365, 1
      %v5414 = vsel %vm726, %v5412, %v5413
      %v5415 = vrot.slane %v5366, 1
      %v5416 = vsel %vm726, %v5413, %v5415
      %v5417 = vrot.slane %v5367, 1
      %v5418 = vrot.slane %v5368, 1
      %v5419 = vsel %vm726, %v5417, %v5418
      %v5420 = vrot.slane %v5369, 1
      %v5421 = vsel %vm726, %v5418, %v5420
      %v5422 = vrot.slane %v5370, 1
      %v5423 = vrot.slane %v5371, 1
      %v5424 = vsel %vm726, %v5422, %v5423
      %v5425 = vrot.slane %v5372, 1
      %v5426 = vsel %vm726, %v5423, %v5425
      %v5427 = vrot.slane %v5373, 1
      %v5428 = vrot.slane %v5374, 1
      %v5429 = vsel %vm726, %v5427, %v5428
      %v5430 = vrot.slane %v5375, 1
      %v5431 = vsel %vm726, %v5428, %v5430
      %v5432 = vrot.slane %v5376, 1
      %v5433 = vrot.slane %v5377, 1
      %v5434 = vsel %vm726, %v5432, %v5433
      %v5435 = vrot.slane %v5378, 1
      %v5436 = vsel %vm726, %v5433, %v5435
      %v5437 = vrot.slane %v5379, 1
      %v5438 = vrot.slane %v5380, 1
      %v5439 = vsel %vm726, %v5437, %v5438
      %v5440 = vrot.slane %v5381, 1
      %v5441 = vsel %vm726, %v5438, %v5440
      %v5442 = vrot.slane %v5382, 1
      %v5443 = vrot.slane %v5383, 1
      %v5444 = vsel %vm726, %v5442, %v5443
      %v5445 = vrot.slane %v5384, 1
      %v5446 = vsel %vm726, %v5443, %v5445
      %v5447 = vrot.slane %v5385, 1
      %v5448 = vrot.slane %v5386, 1
      %v5449 = vsel %vm726, %v5447, %v5448
      %v5450 = vrot.slane %v5387, 1
      %v5451 = vsel %vm726, %v5448, %v5450
      %v5468 = vadd.f32 %v5344, %v5414
      %v5469 = vadd.f32 %v5345, %v5416
      %v5470 = vadd.f32 %v5346, %v5419
      %v5471 = vadd.f32 %v5347, %v5421
      %v5472 = vadd.f32 %v5348, %v5424
      %v5473 = vadd.f32 %v5349, %v5426
      %v5474 = vadd.f32 %v5350, %v5429
      %v5475 = vadd.f32 %v5351, %v5431
      %v5476 = vadd.f32 %v5352, %v5434
      %v5477 = vadd.f32 %v5353, %v5436
      %v5478 = vadd.f32 %v5354, %v5439
      %v5479 = vadd.f32 %v5355, %v5441
      %v5480 = vadd.f32 %v5356, %v5444
      %v5481 = vadd.f32 %v5357, %v5446
      %v5482 = vadd.f32 %v5358, %v5449
      %v5483 = vadd.f32 %v5359, %v5451
      %v5484 = vlaneseq
      %v5485 = vshrl.u32 %v5484, 7
      %v5486 = vsub.s32 4, %v5485
      %v5487 = vrot.slane %v636, %v5486
      %v5488 = vmul.f32 %v5487, %v607
      %v5489 = vmul.f32 %v5487, %v608
      %v5490 = vmul.f32 %v5487, %v609
      %v5491 = vmul.f32 %v5487, %v610
      %v5492 = vmul.f32 %v5487, %v611
      %v5493 = vmul.f32 %v5487, %v612
      %v5494 = vmul.f32 %v5487, %v613
      %v5495 = vmul.f32 %v5487, %v614
      %v5496 = vmul.f32 %v5487, %v615
      %v5497 = vmul.f32 %v5487, %v616
      %v5498 = vmul.f32 %v5487, %v617
      %v5499 = vmul.f32 %v5487, %v618
      %v5500 = vmul.f32 %v5487, %v619
      %v5501 = vmul.f32 %v5487, %v620
      %v5502 = vmul.f32 %v5487, %v621
      %v5503 = vmul.f32 %v5487, %v622
      %v5504 = vmul.f32 %v5487, %v623
      %v5505 = vmul.f32 %v5487, %v624
      %v5506 = vmul.f32 %v5487, %v625
      %v5507 = vmul.f32 %v5487, %v626
      %v5508 = vmul.f32 %v5487, %v627
      %v5509 = vmul.f32 %v5487, %v628
      %v5510 = vmul.f32 %v5487, %v629
      %v5511 = vmul.f32 %v5487, %v630
      %v5536 = vrot.slane %v5488, 2
      %v5537 = vrot.slane %v5489, 2
      %v5538 = vsel %vm851, %v5536, %v5537
      %v5539 = vrot.slane %v5490, 2
      %v5540 = vsel %vm851, %v5537, %v5539
      %v5541 = vrot.slane %v5491, 2
      %v5542 = vrot.slane %v5492, 2
      %v5543 = vsel %vm851, %v5541, %v5542
      %v5544 = vrot.slane %v5493, 2
      %v5545 = vsel %vm851, %v5542, %v5544
      %v5546 = vrot.slane %v5494, 2
      %v5547 = vrot.slane %v5495, 2
      %v5548 = vsel %vm851, %v5546, %v5547
      %v5549 = vrot.slane %v5496, 2
      %v5550 = vsel %vm851, %v5547, %v5549
      %v5551 = vrot.slane %v5497, 2
      %v5552 = vrot.slane %v5498, 2
      %v5553 = vsel %vm851, %v5551, %v5552
      %v5554 = vrot.slane %v5499, 2
      %v5555 = vsel %vm851, %v5552, %v5554
      %v5556 = vrot.slane %v5500, 2
      %v5557 = vrot.slane %v5501, 2
      %v5558 = vsel %vm851, %v5556, %v5557
      %v5559 = vrot.slane %v5502, 2
      %v5560 = vsel %vm851, %v5557, %v5559
      %v5561 = vrot.slane %v5503, 2
      %v5562 = vrot.slane %v5504, 2
      %v5563 = vsel %vm851, %v5561, %v5562
      %v5564 = vrot.slane %v5505, 2
      %v5565 = vsel %vm851, %v5562, %v5564
      %v5566 = vrot.slane %v5506, 2
      %v5567 = vrot.slane %v5507, 2
      %v5568 = vsel %vm851, %v5566, %v5567
      %v5569 = vrot.slane %v5508, 2
      %v5570 = vsel %vm851, %v5567, %v5569
      %v5571 = vrot.slane %v5509, 2
      %v5572 = vrot.slane %v5510, 2
      %v5573 = vsel %vm851, %v5571, %v5572
      %v5574 = vrot.slane %v5511, 2
      %v5575 = vsel %vm851, %v5572, %v5574
      %v5592 = vadd.f32 %v5468, %v5538
      %v5593 = vadd.f32 %v5469, %v5540
      %v5594 = vadd.f32 %v5470, %v5543
      %v5595 = vadd.f32 %v5471, %v5545
      %v5596 = vadd.f32 %v5472, %v5548
      %v5597 = vadd.f32 %v5473, %v5550
      %v5598 = vadd.f32 %v5474, %v5553
      %v5599 = vadd.f32 %v5475, %v5555
      %v5600 = vadd.f32 %v5476, %v5558
      %v5601 = vadd.f32 %v5477, %v5560
      %v5602 = vadd.f32 %v5478, %v5563
      %v5603 = vadd.f32 %v5479, %v5565
      %v5604 = vadd.f32 %v5480, %v5568
      %v5605 = vadd.f32 %v5481, %v5570
      %v5606 = vadd.f32 %v5482, %v5573
      %v5607 = vadd.f32 %v5483, %v5575
      %v5608 = vlaneseq
      %v5609 = vshrl.u32 %v5608, 7
      %v5610 = vsub.s32 5, %v5609
      %v5611 = vrot.slane %v636, %v5610
      %v5612 = vmul.f32 %v5611, %v607
      %v5613 = vmul.f32 %v5611, %v608
      %v5614 = vmul.f32 %v5611, %v609
      %v5615 = vmul.f32 %v5611, %v610
      %v5616 = vmul.f32 %v5611, %v611
      %v5617 = vmul.f32 %v5611, %v612
      %v5618 = vmul.f32 %v5611, %v613
      %v5619 = vmul.f32 %v5611, %v614
      %v5620 = vmul.f32 %v5611, %v615
      %v5621 = vmul.f32 %v5611, %v616
      %v5622 = vmul.f32 %v5611, %v617
      %v5623 = vmul.f32 %v5611, %v618
      %v5624 = vmul.f32 %v5611, %v619
      %v5625 = vmul.f32 %v5611, %v620
      %v5626 = vmul.f32 %v5611, %v621
      %v5627 = vmul.f32 %v5611, %v622
      %v5628 = vmul.f32 %v5611, %v623
      %v5629 = vmul.f32 %v5611, %v624
      %v5630 = vmul.f32 %v5611, %v625
      %v5631 = vmul.f32 %v5611, %v626
      %v5632 = vmul.f32 %v5611, %v627
      %v5633 = vmul.f32 %v5611, %v628
      %v5634 = vmul.f32 %v5611, %v629
      %v5635 = vmul.f32 %v5611, %v630
      %v5660 = vrot.slane %v5612, 3
      %v5661 = vrot.slane %v5613, 3
      %v5662 = vsel %vm976, %v5660, %v5661
      %v5663 = vrot.slane %v5614, 3
      %v5664 = vsel %vm976, %v5661, %v5663
      %v5665 = vrot.slane %v5615, 3
      %v5666 = vrot.slane %v5616, 3
      %v5667 = vsel %vm976, %v5665, %v5666
      %v5668 = vrot.slane %v5617, 3
      %v5669 = vsel %vm976, %v5666, %v5668
      %v5670 = vrot.slane %v5618, 3
      %v5671 = vrot.slane %v5619, 3
      %v5672 = vsel %vm976, %v5670, %v5671
      %v5673 = vrot.slane %v5620, 3
      %v5674 = vsel %vm976, %v5671, %v5673
      %v5675 = vrot.slane %v5621, 3
      %v5676 = vrot.slane %v5622, 3
      %v5677 = vsel %vm976, %v5675, %v5676
      %v5678 = vrot.slane %v5623, 3
      %v5679 = vsel %vm976, %v5676, %v5678
      %v5680 = vrot.slane %v5624, 3
      %v5681 = vrot.slane %v5625, 3
      %v5682 = vsel %vm976, %v5680, %v5681
      %v5683 = vrot.slane %v5626, 3
      %v5684 = vsel %vm976, %v5681, %v5683
      %v5685 = vrot.slane %v5627, 3
      %v5686 = vrot.slane %v5628, 3
      %v5687 = vsel %vm976, %v5685, %v5686
      %v5688 = vrot.slane %v5629, 3
      %v5689 = vsel %vm976, %v5686, %v5688
      %v5690 = vrot.slane %v5630, 3
      %v5691 = vrot.slane %v5631, 3
      %v5692 = vsel %vm976, %v5690, %v5691
      %v5693 = vrot.slane %v5632, 3
      %v5694 = vsel %vm976, %v5691, %v5693
      %v5695 = vrot.slane %v5633, 3
      %v5696 = vrot.slane %v5634, 3
      %v5697 = vsel %vm976, %v5695, %v5696
      %v5698 = vrot.slane %v5635, 3
      %v5699 = vsel %vm976, %v5696, %v5698
      %v5716 = vadd.f32 %v5592, %v5662
      %v5717 = vadd.f32 %v5593, %v5664
      %v5718 = vadd.f32 %v5594, %v5667
      %v5719 = vadd.f32 %v5595, %v5669
      %v5720 = vadd.f32 %v5596, %v5672
      %v5721 = vadd.f32 %v5597, %v5674
      %v5722 = vadd.f32 %v5598, %v5677
      %v5723 = vadd.f32 %v5599, %v5679
      %v5724 = vadd.f32 %v5600, %v5682
      %v5725 = vadd.f32 %v5601, %v5684
      %v5726 = vadd.f32 %v5602, %v5687
      %v5727 = vadd.f32 %v5603, %v5689
      %v5728 = vadd.f32 %v5604, %v5692
      %v5729 = vadd.f32 %v5605, %v5694
      %v5730 = vadd.f32 %v5606, %v5697
      %v5731 = vadd.f32 %v5607, %v5699
      %v5732 = vlaneseq
      %v5733 = vshrl.u32 %v5732, 7
      %v5734 = vsub.s32 6, %v5733
      %v5735 = vrot.slane %v636, %v5734
      %v5736 = vmul.f32 %v5735, %v607
      %v5737 = vmul.f32 %v5735, %v608
      %v5738 = vmul.f32 %v5735, %v609
      %v5739 = vmul.f32 %v5735, %v610
      %v5740 = vmul.f32 %v5735, %v611
      %v5741 = vmul.f32 %v5735, %v612
      %v5742 = vmul.f32 %v5735, %v613
      %v5743 = vmul.f32 %v5735, %v614
      %v5744 = vmul.f32 %v5735, %v615
      %v5745 = vmul.f32 %v5735, %v616
      %v5746 = vmul.f32 %v5735, %v617
      %v5747 = vmul.f32 %v5735, %v618
      %v5748 = vmul.f32 %v5735, %v619
      %v5749 = vmul.f32 %v5735, %v620
      %v5750 = vmul.f32 %v5735, %v621
      %v5751 = vmul.f32 %v5735, %v622
      %v5752 = vmul.f32 %v5735, %v623
      %v5753 = vmul.f32 %v5735, %v624
      %v5754 = vmul.f32 %v5735, %v625
      %v5755 = vmul.f32 %v5735, %v626
      %v5756 = vmul.f32 %v5735, %v627
      %v5757 = vmul.f32 %v5735, %v628
      %v5758 = vmul.f32 %v5735, %v629
      %v5759 = vmul.f32 %v5735, %v630
      %v5784 = vrot.slane %v5736, 4
      %v5785 = vrot.slane %v5737, 4
      %v5786 = vsel %vm1101, %v5784, %v5785
      %v5787 = vrot.slane %v5738, 4
      %v5788 = vsel %vm1101, %v5785, %v5787
      %v5789 = vrot.slane %v5739, 4
      %v5790 = vrot.slane %v5740, 4
      %v5791 = vsel %vm1101, %v5789, %v5790
      %v5792 = vrot.slane %v5741, 4
      %v5793 = vsel %vm1101, %v5790, %v5792
      %v5794 = vrot.slane %v5742, 4
      %v5795 = vrot.slane %v5743, 4
      %v5796 = vsel %vm1101, %v5794, %v5795
      %v5797 = vrot.slane %v5744, 4
      %v5798 = vsel %vm1101, %v5795, %v5797
      %v5799 = vrot.slane %v5745, 4
      %v5800 = vrot.slane %v5746, 4
      %v5801 = vsel %vm1101, %v5799, %v5800
      %v5802 = vrot.slane %v5747, 4
      %v5803 = vsel %vm1101, %v5800, %v5802
      %v5804 = vrot.slane %v5748, 4
      %v5805 = vrot.slane %v5749, 4
      %v5806 = vsel %vm1101, %v5804, %v5805
      %v5807 = vrot.slane %v5750, 4
      %v5808 = vsel %vm1101, %v5805, %v5807
      %v5809 = vrot.slane %v5751, 4
      %v5810 = vrot.slane %v5752, 4
      %v5811 = vsel %vm1101, %v5809, %v5810
      %v5812 = vrot.slane %v5753, 4
      %v5813 = vsel %vm1101, %v5810, %v5812
      %v5814 = vrot.slane %v5754, 4
      %v5815 = vrot.slane %v5755, 4
      %v5816 = vsel %vm1101, %v5814, %v5815
      %v5817 = vrot.slane %v5756, 4
      %v5818 = vsel %vm1101, %v5815, %v5817
      %v5819 = vrot.slane %v5757, 4
      %v5820 = vrot.slane %v5758, 4
      %v5821 = vsel %vm1101, %v5819, %v5820
      %v5822 = vrot.slane %v5759, 4
      %v5823 = vsel %vm1101, %v5820, %v5822
      %v5840 = vadd.f32 %v5716, %v5786
      %v5841 = vadd.f32 %v5717, %v5788
      %v5842 = vadd.f32 %v5718, %v5791
      %v5843 = vadd.f32 %v5719, %v5793
      %v5844 = vadd.f32 %v5720, %v5796
      %v5845 = vadd.f32 %v5721, %v5798
      %v5846 = vadd.f32 %v5722, %v5801
      %v5847 = vadd.f32 %v5723, %v5803
      %v5848 = vadd.f32 %v5724, %v5806
      %v5849 = vadd.f32 %v5725, %v5808
      %v5850 = vadd.f32 %v5726, %v5811
      %v5851 = vadd.f32 %v5727, %v5813
      %v5852 = vadd.f32 %v5728, %v5816
      %v5853 = vadd.f32 %v5729, %v5818
      %v5854 = vadd.f32 %v5730, %v5821
      %v5855 = vadd.f32 %v5731, %v5823
      %v5856 = vlaneseq
      %v5857 = vshrl.u32 %v5856, 7
      %v5858 = vsub.s32 7, %v5857
      %v5859 = vrot.slane %v636, %v5858
      %v5860 = vmul.f32 %v5859, %v607
      %v5861 = vmul.f32 %v5859, %v608
      %v5862 = vmul.f32 %v5859, %v609
      %v5863 = vmul.f32 %v5859, %v610
      %v5864 = vmul.f32 %v5859, %v611
      %v5865 = vmul.f32 %v5859, %v612
      %v5866 = vmul.f32 %v5859, %v613
      %v5867 = vmul.f32 %v5859, %v614
      %v5868 = vmul.f32 %v5859, %v615
      %v5869 = vmul.f32 %v5859, %v616
      %v5870 = vmul.f32 %v5859, %v617
      %v5871 = vmul.f32 %v5859, %v618
      %v5872 = vmul.f32 %v5859, %v619
      %v5873 = vmul.f32 %v5859, %v620
      %v5874 = vmul.f32 %v5859, %v621
      %v5875 = vmul.f32 %v5859, %v622
      %v5876 = vmul.f32 %v5859, %v623
      %v5877 = vmul.f32 %v5859, %v624
      %v5878 = vmul.f32 %v5859, %v625
      %v5879 = vmul.f32 %v5859, %v626
      %v5880 = vmul.f32 %v5859, %v627
      %v5881 = vmul.f32 %v5859, %v628
      %v5882 = vmul.f32 %v5859, %v629
      %v5883 = vmul.f32 %v5859, %v630
      %v5908 = vrot.slane %v5860, 5
      %v5909 = vrot.slane %v5861, 5
      %v5910 = vsel %vm1226, %v5908, %v5909
      %v5911 = vrot.slane %v5862, 5
      %v5912 = vsel %vm1226, %v5909, %v5911
      %v5913 = vrot.slane %v5863, 5
      %v5914 = vrot.slane %v5864, 5
      %v5915 = vsel %vm1226, %v5913, %v5914
      %v5916 = vrot.slane %v5865, 5
      %v5917 = vsel %vm1226, %v5914, %v5916
      %v5918 = vrot.slane %v5866, 5
      %v5919 = vrot.slane %v5867, 5
      %v5920 = vsel %vm1226, %v5918, %v5919
      %v5921 = vrot.slane %v5868, 5
      %v5922 = vsel %vm1226, %v5919, %v5921
      %v5923 = vrot.slane %v5869, 5
      %v5924 = vrot.slane %v5870, 5
      %v5925 = vsel %vm1226, %v5923, %v5924
      %v5926 = vrot.slane %v5871, 5
      %v5927 = vsel %vm1226, %v5924, %v5926
      %v5928 = vrot.slane %v5872, 5
      %v5929 = vrot.slane %v5873, 5
      %v5930 = vsel %vm1226, %v5928, %v5929
      %v5931 = vrot.slane %v5874, 5
      %v5932 = vsel %vm1226, %v5929, %v5931
      %v5933 = vrot.slane %v5875, 5
      %v5934 = vrot.slane %v5876, 5
      %v5935 = vsel %vm1226, %v5933, %v5934
      %v5936 = vrot.slane %v5877, 5
      %v5937 = vsel %vm1226, %v5934, %v5936
      %v5938 = vrot.slane %v5878, 5
      %v5939 = vrot.slane %v5879, 5
      %v5940 = vsel %vm1226, %v5938, %v5939
      %v5941 = vrot.slane %v5880, 5
      %v5942 = vsel %vm1226, %v5939, %v5941
      %v5943 = vrot.slane %v5881, 5
      %v5944 = vrot.slane %v5882, 5
      %v5945 = vsel %vm1226, %v5943, %v5944
      %v5946 = vrot.slane %v5883, 5
      %v5947 = vsel %vm1226, %v5944, %v5946
      %v5964 = vadd.f32 %v5840, %v5910
      %v5965 = vadd.f32 %v5841, %v5912
      %v5966 = vadd.f32 %v5842, %v5915
      %v5967 = vadd.f32 %v5843, %v5917
      %v5968 = vadd.f32 %v5844, %v5920
      %v5969 = vadd.f32 %v5845, %v5922
      %v5970 = vadd.f32 %v5846, %v5925
      %v5971 = vadd.f32 %v5847, %v5927
      %v5972 = vadd.f32 %v5848, %v5930
      %v5973 = vadd.f32 %v5849, %v5932
      %v5974 = vadd.f32 %v5850, %v5935
      %v5975 = vadd.f32 %v5851, %v5937
      %v5976 = vadd.f32 %v5852, %v5940
      %v5977 = vadd.f32 %v5853, %v5942
      %v5978 = vadd.f32 %v5854, %v5945
      %v5979 = vadd.f32 %v5855, %v5947
      %v5980 = vlaneseq
      %v5981 = vshrl.u32 %v5980, 7
      %v5982 = vsub.s32 0, %v5981
      %v5983 = vrot.slane %v637, %v5982
      %v5984 = vmul.f32 %v5983, %v607
      %v5985 = vmul.f32 %v5983, %v608
      %v5986 = vmul.f32 %v5983, %v609
      %v5987 = vmul.f32 %v5983, %v610
      %v5988 = vmul.f32 %v5983, %v611
      %v5989 = vmul.f32 %v5983, %v612
      %v5990 = vmul.f32 %v5983, %v613
      %v5991 = vmul.f32 %v5983, %v614
      %v5992 = vmul.f32 %v5983, %v615
      %v5993 = vmul.f32 %v5983, %v616
      %v5994 = vmul.f32 %v5983, %v617
      %v5995 = vmul.f32 %v5983, %v618
      %v5996 = vmul.f32 %v5983, %v619
      %v5997 = vmul.f32 %v5983, %v620
      %v5998 = vmul.f32 %v5983, %v621
      %v5999 = vmul.f32 %v5983, %v622
      %v6000 = vmul.f32 %v5983, %v623
      %v6001 = vmul.f32 %v5983, %v624
      %v6002 = vmul.f32 %v5983, %v625
      %v6003 = vmul.f32 %v5983, %v626
      %v6004 = vmul.f32 %v5983, %v627
      %v6005 = vmul.f32 %v5983, %v628
      %v6006 = vmul.f32 %v5983, %v629
      %v6007 = vmul.f32 %v5983, %v630
      %v6032 = vrot.slane %v5984, 6
      %v6033 = vrot.slane %v5985, 6
      %v6034 = vsel %vm1351, %v6032, %v6033
      %v6035 = vrot.slane %v5986, 6
      %v6036 = vsel %vm1351, %v6033, %v6035
      %v6037 = vrot.slane %v5987, 6
      %v6038 = vrot.slane %v5988, 6
      %v6039 = vsel %vm1351, %v6037, %v6038
      %v6040 = vrot.slane %v5989, 6
      %v6041 = vsel %vm1351, %v6038, %v6040
      %v6042 = vrot.slane %v5990, 6
      %v6043 = vrot.slane %v5991, 6
      %v6044 = vsel %vm1351, %v6042, %v6043
      %v6045 = vrot.slane %v5992, 6
      %v6046 = vsel %vm1351, %v6043, %v6045
      %v6047 = vrot.slane %v5993, 6
      %v6048 = vrot.slane %v5994, 6
      %v6049 = vsel %vm1351, %v6047, %v6048
      %v6050 = vrot.slane %v5995, 6
      %v6051 = vsel %vm1351, %v6048, %v6050
      %v6052 = vrot.slane %v5996, 6
      %v6053 = vrot.slane %v5997, 6
      %v6054 = vsel %vm1351, %v6052, %v6053
      %v6055 = vrot.slane %v5998, 6
      %v6056 = vsel %vm1351, %v6053, %v6055
      %v6057 = vrot.slane %v5999, 6
      %v6058 = vrot.slane %v6000, 6
      %v6059 = vsel %vm1351, %v6057, %v6058
      %v6060 = vrot.slane %v6001, 6
      %v6061 = vsel %vm1351, %v6058, %v6060
      %v6062 = vrot.slane %v6002, 6
      %v6063 = vrot.slane %v6003, 6
      %v6064 = vsel %vm1351, %v6062, %v6063
      %v6065 = vrot.slane %v6004, 6
      %v6066 = vsel %vm1351, %v6063, %v6065
      %v6067 = vrot.slane %v6005, 6
      %v6068 = vrot.slane %v6006, 6
      %v6069 = vsel %vm1351, %v6067, %v6068
      %v6070 = vrot.slane %v6007, 6
      %v6071 = vsel %vm1351, %v6068, %v6070
      %v6088 = vadd.f32 %v5964, %v6034
      %v6089 = vadd.f32 %v5965, %v6036
      %v6090 = vadd.f32 %v5966, %v6039
      %v6091 = vadd.f32 %v5967, %v6041
      %v6092 = vadd.f32 %v5968, %v6044
      %v6093 = vadd.f32 %v5969, %v6046
      %v6094 = vadd.f32 %v5970, %v6049
      %v6095 = vadd.f32 %v5971, %v6051
      %v6096 = vadd.f32 %v5972, %v6054
      %v6097 = vadd.f32 %v5973, %v6056
      %v6098 = vadd.f32 %v5974, %v6059
      %v6099 = vadd.f32 %v5975, %v6061
      %v6100 = vadd.f32 %v5976, %v6064
      %v6101 = vadd.f32 %v5977, %v6066
      %v6102 = vadd.f32 %v5978, %v6069
      %v6103 = vadd.f32 %v5979, %v6071
      %v6104 = vpack.c.bf16 %v6089, %v6088
      %v6105 = vpack.c.bf16 %v6091, %v6090
      %v6106 = vpack.c.bf16 %v6093, %v6092
      %v6107 = vpack.c.bf16 %v6095, %v6094
      %v6108 = vpack.c.bf16 %v6097, %v6096
      %v6109 = vpack.c.bf16 %v6099, %v6098
      %v6110 = vpack.c.bf16 %v6101, %v6100
      %v6111 = vpack.c.bf16 %v6103, %v6102
      %v6112 = vld [vmem:[%s4] sm:$0x3]
      %v6113 = vld [vmem:[%s5] sm:$0x1]
      %v6115 = vlaneseq
      %v6116 = vshrl.u32 %v6115, 7
      %v6117 = vsub.s32 0, %v6116
      %v6118 = vrot.slane %v6113, %v6117
      %v6121 = vsel %vm517, %v6104, 0
      %v6124 = vsel %vm517, %v6105, 0
      %v6127 = vsel %vm517, %v6106, 0
      %v6130 = vsel %vm517, %v6107, 0
      %v6133 = vsel %vm517, %v6108, 0
      %v6136 = vsel %vm517, %v6109, 0
      %v6139 = vsel %vm517, %v6110, 0
      %v6142 = vsel %vm517, %v6111, 0
      %v6145 = vsel %vm1351, %v6112, 0
      %6147 = vmatprep.subr.bf16.mxu0 0
      %6148 = vmatpush1.bf16.msra.mxu0 %v6145
      %6149 = vmatprep.subr.bf16.mxu0 0
      %6150 = vmatpush1.bf16.msra.mxu0 0
      %6151 = vmatprep.subr.bf16.mxu0 0
      %6152 = vmatpush1.bf16.msra.mxu0 0
      %6153 = vmatprep.subr.bf16.mxu0 0
      %6154 = vmatpush1.bf16.msra.mxu0 0
      %6155 = vmatprep.subr.bf16.mxu0 0
      %6156 = vmatpush1.bf16.msra.mxu0 0
      %6157 = vmatprep.subr.bf16.mxu0 0
      %6158 = vmatpush1.bf16.msra.mxu0 0
      %6159 = vmatprep.subr.bf16.mxu0 0
      %6160 = vmatpush1.bf16.msra.mxu0 0
      %6161 = vmatprep.subr.bf16.mxu0 0
      %6162 = vmatpush1.bf16.msra.mxu0 0
      %6163 = vmatprep.subr.bf16.mxu0 0
      %6164 = vmatpush1.bf16.msra.mxu0 0
      %6165 = vmatprep.subr.bf16.mxu0 0
      %6166 = vmatpush1.bf16.msra.mxu0 0
      %6167 = vmatprep.subr.bf16.mxu0 0
      %6168 = vmatpush1.bf16.msra.mxu0 0
      %6169 = vmatprep.subr.bf16.mxu0 0
      %6170 = vmatpush1.bf16.msra.mxu0 0
      %6171 = vmatprep.subr.bf16.mxu0 0
      %6172 = vmatpush1.bf16.msra.mxu0 0
      %6173 = vmatprep.subr.bf16.mxu0 0
      %6174 = vmatpush1.bf16.msra.mxu0 0
      %6175 = vmatprep.subr.bf16.mxu0 0
      %6176 = vmatpush1.bf16.msra.mxu0 0
      %6177 = vmatprep.subr.bf16.mxu0 0
      %6178 = vmatpush1.bf16.msra.mxu0 0
      %6179 = vmatprep.mubr.bf16.mxu0 0
      %6180 = vmatmul.mubr.bf16.gmra.mrb[0].mxu0 %v6121
      %v6181 = vpop.f32.mrb[0].mxu0
      %v6182 = vadd.f32 %v6118, %v6181
      %v6183 = vpop.f32.mrb[0].mxu0
      %v6184 = vpop.f32.mrb[0].mxu0
      %v6185 = vadd.f32 %v6118, %v6184
      %v6186 = vpop.f32.mrb[0].mxu0
      %6187 = vmatprep.mubr.bf16.mxu0 0
      %6188 = vmatmul.mubr.bf16.gmra.mrb[0].mxu0 %v6124
      %v6189 = vpop.f32.mrb[0].mxu0
      %v6190 = vadd.f32 %v6118, %v6189
      %v6191 = vpop.f32.mrb[0].mxu0
      %v6192 = vpop.f32.mrb[0].mxu0
      %v6193 = vadd.f32 %v6118, %v6192
      %v6194 = vpop.f32.mrb[0].mxu0
      %6195 = vmatprep.mubr.bf16.mxu0 0
      %6196 = vmatmul.mubr.bf16.gmra.mrb[0].mxu0 %v6127
      %v6197 = vpop.f32.mrb[0].mxu0
      %v6198 = vadd.f32 %v6118, %v6197
      %v6199 = vpop.f32.mrb[0].mxu0
      %v6200 = vpop.f32.mrb[0].mxu0
      %v6201 = vadd.f32 %v6118, %v6200
      %v6202 = vpop.f32.mrb[0].mxu0
      %6203 = vmatprep.mubr.bf16.mxu0 0
      %6204 = vmatmul.mubr.bf16.gmra.mrb[0].mxu0 %v6130
      %v6205 = vpop.f32.mrb[0].mxu0
      %v6206 = vadd.f32 %v6118, %v6205
      %v6207 = vpop.f32.mrb[0].mxu0
      %v6208 = vpop.f32.mrb[0].mxu0
      %v6209 = vadd.f32 %v6118, %v6208
      %v6210 = vpop.f32.mrb[0].mxu0
      %6211 = vmatprep.mubr.bf16.mxu0 0
      %6212 = vmatmul.mubr.bf16.gmra.mrb[0].mxu0 %v6133
      %v6213 = vpop.f32.mrb[0].mxu0
      %v6214 = vadd.f32 %v6118, %v6213
      %v6215 = vpop.f32.mrb[0].mxu0
      %v6216 = vpop.f32.mrb[0].mxu0
      %v6217 = vadd.f32 %v6118, %v6216
      %v6218 = vpop.f32.mrb[0].mxu0
      %6219 = vmatprep.mubr.bf16.mxu0 0
      %6220 = vmatmul.mubr.bf16.gmra.mrb[0].mxu0 %v6136
      %v6221 = vpop.f32.mrb[0].mxu0
      %v6222 = vadd.f32 %v6118, %v6221
      %v6223 = vpop.f32.mrb[0].mxu0
      %v6224 = vpop.f32.mrb[0].mxu0
      %v6225 = vadd.f32 %v6118, %v6224
      %v6226 = vpop.f32.mrb[0].mxu0
      %6227 = vmatprep.mubr.bf16.mxu0 0
      %6228 = vmatmul.mubr.bf16.gmra.mrb[0].mxu0 %v6139
      %v6229 = vpop.f32.mrb[0].mxu0
      %v6230 = vadd.f32 %v6118, %v6229
      %v6231 = vpop.f32.mrb[0].mxu0
      %v6232 = vpop.f32.mrb[0].mxu0
      %v6233 = vadd.f32 %v6118, %v6232
      %v6234 = vpop.f32.mrb[0].mxu0
      %6235 = vmatprep.mubr.bf16.mxu0 0
      %6236 = vmatmul.mubr.bf16.gmra.mrb[0].mxu0 %v6142
      %v6237 = vpop.f32.mrb[0].mxu0
      %v6238 = vadd.f32 %v6118, %v6237
      %v6239 = vpop.f32.mrb[0].mxu0
      %v6240 = vpop.f32.mrb[0].mxu0
      %v6241 = vadd.f32 %v6118, %v6240
      %v6242 = vpop.f32.mrb[0].mxu0
      %6243 = vdwg.mxu0
      %v6244 = vmul.f32 %v6182, 0.5
      %v6245 = vmul.f32 %v6185, 0.5
      %v6246 = vmul.f32 %v6190, 0.5
      %v6247 = vmul.f32 %v6193, 0.5
      %v6248 = vmul.f32 %v6198, 0.5
      %v6249 = vmul.f32 %v6201, 0.5
      %v6250 = vmul.f32 %v6206, 0.5
      %v6251 = vmul.f32 %v6209, 0.5
      %v6252 = vmul.f32 %v6214, 0.5
      %v6253 = vmul.f32 %v6217, 0.5
      %v6254 = vmul.f32 %v6222, 0.5
      %v6255 = vmul.f32 %v6225, 0.5
      %v6256 = vmul.f32 %v6230, 0.5
      %v6257 = vmul.f32 %v6233, 0.5
      %v6258 = vmul.f32 %v6238, 0.5
      %v6259 = vmul.f32 %v6241, 0.5
      %v6260 = vmul.f32 %v6182, 0.70710677
      %v6261 = vmul.f32 %v6185, 0.70710677
      %v6262 = vmul.f32 %v6190, 0.70710677
      %v6263 = vmul.f32 %v6193, 0.70710677
      %v6264 = vmul.f32 %v6198, 0.70710677
      %v6265 = vmul.f32 %v6201, 0.70710677
      %v6266 = vmul.f32 %v6206, 0.70710677
      %v6267 = vmul.f32 %v6209, 0.70710677
      %v6268 = vmul.f32 %v6214, 0.70710677
      %v6269 = vmul.f32 %v6217, 0.70710677
      %v6270 = vmul.f32 %v6222, 0.70710677
      %v6271 = vmul.f32 %v6225, 0.70710677
      %v6272 = vmul.f32 %v6230, 0.70710677
      %v6273 = vmul.f32 %v6233, 0.70710677
      %v6274 = vmul.f32 %v6238, 0.70710677
      %v6275 = vmul.f32 %v6241, 0.70710677
      %vm6276 = vcmp.ge.f32.partialorder %v6260, 0.0
      %vm6277 = vcmp.ge.f32.partialorder %v6261, 0.0
      %vm6278 = vcmp.ge.f32.partialorder %v6262, 0.0
      %vm6279 = vcmp.ge.f32.partialorder %v6263, 0.0
      %vm6280 = vcmp.ge.f32.partialorder %v6264, 0.0
      %vm6281 = vcmp.ge.f32.partialorder %v6265, 0.0
      %vm6282 = vcmp.ge.f32.partialorder %v6266, 0.0
      %vm6283 = vcmp.ge.f32.partialorder %v6267, 0.0
      %vm6284 = vcmp.ge.f32.partialorder %v6268, 0.0
      %vm6285 = vcmp.ge.f32.partialorder %v6269, 0.0
      %vm6286 = vcmp.ge.f32.partialorder %v6270, 0.0
      %vm6287 = vcmp.ge.f32.partialorder %v6271, 0.0
      %vm6288 = vcmp.ge.f32.partialorder %v6272, 0.0
      %vm6289 = vcmp.ge.f32.partialorder %v6273, 0.0
      %vm6290 = vcmp.ge.f32.partialorder %v6274, 0.0
      %vm6291 = vcmp.ge.f32.partialorder %v6275, 0.0
      %v6292 = vsel %vm6276, 1.0, -1.0
      %v6293 = vsel %vm6277, 1.0, -1.0
      %v6294 = vsel %vm6278, 1.0, -1.0
      %v6295 = vsel %vm6279, 1.0, -1.0
      %v6296 = vsel %vm6280, 1.0, -1.0
      %v6297 = vsel %vm6281, 1.0, -1.0
      %v6298 = vsel %vm6282, 1.0, -1.0
      %v6299 = vsel %vm6283, 1.0, -1.0
      %v6300 = vsel %vm6284, 1.0, -1.0
      %v6301 = vsel %vm6285, 1.0, -1.0
      %v6302 = vsel %vm6286, 1.0, -1.0
      %v6303 = vsel %vm6287, 1.0, -1.0
      %v6304 = vsel %vm6288, 1.0, -1.0
      %v6305 = vsel %vm6289, 1.0, -1.0
      %v6306 = vsel %vm6290, 1.0, -1.0
      %v6307 = vsel %vm6291, 1.0, -1.0
      %v6308 = vand.u32 2147483647, %v6260
      %v6309 = vand.u32 2147483647, %v6261
      %v6310 = vand.u32 2147483647, %v6262
      %v6311 = vand.u32 2147483647, %v6263
      %v6312 = vand.u32 2147483647, %v6264
      %v6313 = vand.u32 2147483647, %v6265
      %v6314 = vand.u32 2147483647, %v6266
      %v6315 = vand.u32 2147483647, %v6267
      %v6316 = vand.u32 2147483647, %v6268
      %v6317 = vand.u32 2147483647, %v6269
      %v6318 = vand.u32 2147483647, %v6270
      %v6319 = vand.u32 2147483647, %v6271
      %v6320 = vand.u32 2147483647, %v6272
      %v6321 = vand.u32 2147483647, %v6273
      %v6322 = vand.u32 2147483647, %v6274
      %v6323 = vand.u32 2147483647, %v6275
      %v6324 = vmul.f32 %v6308, 0.3275911
      %v6325 = vmul.f32 %v6309, 0.3275911
      %v6326 = vmul.f32 %v6310, 0.3275911
      %v6327 = vmul.f32 %v6311, 0.3275911
      %v6328 = vmul.f32 %v6312, 0.3275911
      %v6329 = vmul.f32 %v6313, 0.3275911
      %v6330 = vmul.f32 %v6314, 0.3275911
      %v6331 = vmul.f32 %v6315, 0.3275911
      %v6332 = vmul.f32 %v6316, 0.3275911
      %v6333 = vmul.f32 %v6317, 0.3275911
      %v6334 = vmul.f32 %v6318, 0.3275911
      %v6335 = vmul.f32 %v6319, 0.3275911
      %v6336 = vmul.f32 %v6320, 0.3275911
      %v6337 = vmul.f32 %v6321, 0.3275911
      %v6338 = vmul.f32 %v6322, 0.3275911
      %v6339 = vmul.f32 %v6323, 0.3275911
      %v6340 = vadd.f32 %v6324, 1.0
      %v6341 = vadd.f32 %v6325, 1.0
      %v6342 = vadd.f32 %v6326, 1.0
      %v6343 = vadd.f32 %v6327, 1.0
      %v6344 = vadd.f32 %v6328, 1.0
      %v6345 = vadd.f32 %v6329, 1.0
      %v6346 = vadd.f32 %v6330, 1.0
      %v6347 = vadd.f32 %v6331, 1.0
      %v6348 = vadd.f32 %v6332, 1.0
      %v6349 = vadd.f32 %v6333, 1.0
      %v6350 = vadd.f32 %v6334, 1.0
      %v6351 = vadd.f32 %v6335, 1.0
      %v6352 = vadd.f32 %v6336, 1.0
      %v6353 = vadd.f32 %v6337, 1.0
      %v6354 = vadd.f32 %v6338, 1.0
      %v6355 = vadd.f32 %v6339, 1.0
      %v6356 = vrcp.pop %v6340
      %v6357 = vrcp.pop %v6341
      %v6358 = vrcp.pop %v6342
      %v6359 = vrcp.pop %v6343
      %v6360 = vrcp.pop %v6344
      %v6361 = vrcp.pop %v6345
      %v6362 = vrcp.pop %v6346
      %v6363 = vrcp.pop %v6347
      %v6364 = vrcp.pop %v6348
      %v6365 = vrcp.pop %v6349
      %v6366 = vrcp.pop %v6350
      %v6367 = vrcp.pop %v6351
      %v6368 = vrcp.pop %v6352
      %v6369 = vrcp.pop %v6353
      %v6370 = vrcp.pop %v6354
      %v6371 = vrcp.pop %v6355
      %v6372 = vmul.f32 %v6356, 1.0614054
      %v6373 = vmul.f32 %v6357, 1.0614054
      %v6374 = vmul.f32 %v6358, 1.0614054
      %v6375 = vmul.f32 %v6359, 1.0614054
      %v6376 = vmul.f32 %v6360, 1.0614054
      %v6377 = vmul.f32 %v6361, 1.0614054
      %v6378 = vmul.f32 %v6362, 1.0614054
      %v6379 = vmul.f32 %v6363, 1.0614054
      %v6380 = vmul.f32 %v6364, 1.0614054
      %v6381 = vmul.f32 %v6365, 1.0614054
      %v6382 = vmul.f32 %v6366, 1.0614054
      %v6383 = vmul.f32 %v6367, 1.0614054
      %v6384 = vmul.f32 %v6368, 1.0614054
      %v6385 = vmul.f32 %v6369, 1.0614054
      %v6386 = vmul.f32 %v6370, 1.0614054
      %v6387 = vmul.f32 %v6371, 1.0614054
      %v6388 = vadd.f32 %v6372, -1.4531521
      %v6389 = vadd.f32 %v6373, -1.4531521
      %v6390 = vadd.f32 %v6374, -1.4531521
      %v6391 = vadd.f32 %v6375, -1.4531521
      %v6392 = vadd.f32 %v6376, -1.4531521
      %v6393 = vadd.f32 %v6377, -1.4531521
      %v6394 = vadd.f32 %v6378, -1.4531521
      %v6395 = vadd.f32 %v6379, -1.4531521
      %v6396 = vadd.f32 %v6380, -1.4531521
      %v6397 = vadd.f32 %v6381, -1.4531521
      %v6398 = vadd.f32 %v6382, -1.4531521
      %v6399 = vadd.f32 %v6383, -1.4531521
      %v6400 = vadd.f32 %v6384, -1.4531521
      %v6401 = vadd.f32 %v6385, -1.4531521
      %v6402 = vadd.f32 %v6386, -1.4531521
      %v6403 = vadd.f32 %v6387, -1.4531521
      %v6404 = vmul.f32 %v6388, %v6356
      %v6405 = vmul.f32 %v6389, %v6357
      %v6406 = vmul.f32 %v6390, %v6358
      %v6407 = vmul.f32 %v6391, %v6359
      %v6408 = vmul.f32 %v6392, %v6360
      %v6409 = vmul.f32 %v6393, %v6361
      %v6410 = vmul.f32 %v6394, %v6362
      %v6411 = vmul.f32 %v6395, %v6363
      %v6412 = vmul.f32 %v6396, %v6364
      %v6413 = vmul.f32 %v6397, %v6365
      %v6414 = vmul.f32 %v6398, %v6366
      %v6415 = vmul.f32 %v6399, %v6367
      %v6416 = vmul.f32 %v6400, %v6368
      %v6417 = vmul.f32 %v6401, %v6369
      %v6418 = vmul.f32 %v6402, %v6370
      %v6419 = vmul.f32 %v6403, %v6371
      %v6420 = vadd.f32 %v6404, 1.4214138
      %v6421 = vadd.f32 %v6405, 1.4214138
      %v6422 = vadd.f32 %v6406, 1.4214138
      %v6423 = vadd.f32 %v6407, 1.4214138
      %v6424 = vadd.f32 %v6408, 1.4214138
      %v6425 = vadd.f32 %v6409, 1.4214138
      %v6426 = vadd.f32 %v6410, 1.4214138
      %v6427 = vadd.f32 %v6411, 1.4214138
      %v6428 = vadd.f32 %v6412, 1.4214138
      %v6429 = vadd.f32 %v6413, 1.4214138
      %v6430 = vadd.f32 %v6414, 1.4214138
      %v6431 = vadd.f32 %v6415, 1.4214138
      %v6432 = vadd.f32 %v6416, 1.4214138
      %v6433 = vadd.f32 %v6417, 1.4214138
      %v6434 = vadd.f32 %v6418, 1.4214138
      %v6435 = vadd.f32 %v6419, 1.4214138
      %v6436 = vmul.f32 %v6420, %v6356
      %v6437 = vmul.f32 %v6421, %v6357
      %v6438 = vmul.f32 %v6422, %v6358
      %v6439 = vmul.f32 %v6423, %v6359
      %v6440 = vmul.f32 %v6424, %v6360
      %v6441 = vmul.f32 %v6425, %v6361
      %v6442 = vmul.f32 %v6426, %v6362
      %v6443 = vmul.f32 %v6427, %v6363
      %v6444 = vmul.f32 %v6428, %v6364
      %v6445 = vmul.f32 %v6429, %v6365
      %v6446 = vmul.f32 %v6430, %v6366
      %v6447 = vmul.f32 %v6431, %v6367
      %v6448 = vmul.f32 %v6432, %v6368
      %v6449 = vmul.f32 %v6433, %v6369
      %v6450 = vmul.f32 %v6434, %v6370
      %v6451 = vmul.f32 %v6435, %v6371
      %v6452 = vadd.f32 %v6436, -0.28449672
      %v6453 = vadd.f32 %v6437, -0.28449672
      %v6454 = vadd.f32 %v6438, -0.28449672
      %v6455 = vadd.f32 %v6439, -0.28449672
      %v6456 = vadd.f32 %v6440, -0.28449672
      %v6457 = vadd.f32 %v6441, -0.28449672
      %v6458 = vadd.f32 %v6442, -0.28449672
      %v6459 = vadd.f32 %v6443, -0.28449672
      %v6460 = vadd.f32 %v6444, -0.28449672
      %v6461 = vadd.f32 %v6445, -0.28449672
      %v6462 = vadd.f32 %v6446, -0.28449672
      %v6463 = vadd.f32 %v6447, -0.28449672
      %v6464 = vadd.f32 %v6448, -0.28449672
      %v6465 = vadd.f32 %v6449, -0.28449672
      %v6466 = vadd.f32 %v6450, -0.28449672
      %v6467 = vadd.f32 %v6451, -0.28449672
      %v6468 = vmul.f32 %v6452, %v6356
      %v6469 = vmul.f32 %v6453, %v6357
      %v6470 = vmul.f32 %v6454, %v6358
      %v6471 = vmul.f32 %v6455, %v6359
      %v6472 = vmul.f32 %v6456, %v6360
      %v6473 = vmul.f32 %v6457, %v6361
      %v6474 = vmul.f32 %v6458, %v6362
      %v6475 = vmul.f32 %v6459, %v6363
      %v6476 = vmul.f32 %v6460, %v6364
      %v6477 = vmul.f32 %v6461, %v6365
      %v6478 = vmul.f32 %v6462, %v6366
      %v6479 = vmul.f32 %v6463, %v6367
      %v6480 = vmul.f32 %v6464, %v6368
      %v6481 = vmul.f32 %v6465, %v6369
      %v6482 = vmul.f32 %v6466, %v6370
      %v6483 = vmul.f32 %v6467, %v6371
      %v6484 = vadd.f32 %v6468, 0.2548296
      %v6485 = vadd.f32 %v6469, 0.2548296
      %v6486 = vadd.f32 %v6470, 0.2548296
      %v6487 = vadd.f32 %v6471, 0.2548296
      %v6488 = vadd.f32 %v6472, 0.2548296
      %v6489 = vadd.f32 %v6473, 0.2548296
      %v6490 = vadd.f32 %v6474, 0.2548296
      %v6491 = vadd.f32 %v6475, 0.2548296
      %v6492 = vadd.f32 %v6476, 0.2548296
      %v6493 = vadd.f32 %v6477, 0.2548296
      %v6494 = vadd.f32 %v6478, 0.2548296
      %v6495 = vadd.f32 %v6479, 0.2548296
      %v6496 = vadd.f32 %v6480, 0.2548296
      %v6497 = vadd.f32 %v6481, 0.2548296
      %v6498 = vadd.f32 %v6482, 0.2548296
      %v6499 = vadd.f32 %v6483, 0.2548296
      %v6500 = vmul.f32 %v6484, %v6356
      %v6501 = vmul.f32 %v6485, %v6357
      %v6502 = vmul.f32 %v6486, %v6358
      %v6503 = vmul.f32 %v6487, %v6359
      %v6504 = vmul.f32 %v6488, %v6360
      %v6505 = vmul.f32 %v6489, %v6361
      %v6506 = vmul.f32 %v6490, %v6362
      %v6507 = vmul.f32 %v6491, %v6363
      %v6508 = vmul.f32 %v6492, %v6364
      %v6509 = vmul.f32 %v6493, %v6365
      %v6510 = vmul.f32 %v6494, %v6366
      %v6511 = vmul.f32 %v6495, %v6367
      %v6512 = vmul.f32 %v6496, %v6368
      %v6513 = vmul.f32 %v6497, %v6369
      %v6514 = vmul.f32 %v6498, %v6370
      %v6515 = vmul.f32 %v6499, %v6371
      %v6516 = vsub.f32 0.0, %v6308
      %v6517 = vsub.f32 0.0, %v6309
      %v6518 = vsub.f32 0.0, %v6310
      %v6519 = vsub.f32 0.0, %v6311
      %v6520 = vsub.f32 0.0, %v6312
      %v6521 = vsub.f32 0.0, %v6313
      %v6522 = vsub.f32 0.0, %v6314
      %v6523 = vsub.f32 0.0, %v6315
      %v6524 = vsub.f32 0.0, %v6316
      %v6525 = vsub.f32 0.0, %v6317
      %v6526 = vsub.f32 0.0, %v6318
      %v6527 = vsub.f32 0.0, %v6319
      %v6528 = vsub.f32 0.0, %v6320
      %v6529 = vsub.f32 0.0, %v6321
      %v6530 = vsub.f32 0.0, %v6322
      %v6531 = vsub.f32 0.0, %v6323
      %v6532 = vmul.f32 %v6516, %v6308
      %v6533 = vmul.f32 %v6517, %v6309
      %v6534 = vmul.f32 %v6518, %v6310
      %v6535 = vmul.f32 %v6519, %v6311
      %v6536 = vmul.f32 %v6520, %v6312
      %v6537 = vmul.f32 %v6521, %v6313
      %v6538 = vmul.f32 %v6522, %v6314
      %v6539 = vmul.f32 %v6523, %v6315
      %v6540 = vmul.f32 %v6524, %v6316
      %v6541 = vmul.f32 %v6525, %v6317
      %v6542 = vmul.f32 %v6526, %v6318
      %v6543 = vmul.f32 %v6527, %v6319
      %v6544 = vmul.f32 %v6528, %v6320
      %v6545 = vmul.f32 %v6529, %v6321
      %v6546 = vmul.f32 %v6530, %v6322
      %v6547 = vmul.f32 %v6531, %v6323
      %v6548 = vmul.f32 %v6532, 1.442695
      %v6549 = vpow.pop %v6548
      %v6550 = vmul.f32 %v6533, 1.442695
      %v6551 = vpow.pop %v6550
      %v6552 = vmul.f32 %v6534, 1.442695
      %v6553 = vpow.pop %v6552
      %v6554 = vmul.f32 %v6535, 1.442695
      %v6555 = vpow.pop %v6554
      %v6556 = vmul.f32 %v6536, 1.442695
      %v6557 = vpow.pop %v6556
      %v6558 = vmul.f32 %v6537, 1.442695
      %v6559 = vpow.pop %v6558
      %v6560 = vmul.f32 %v6538, 1.442695
      %v6561 = vpow.pop %v6560
      %v6562 = vmul.f32 %v6539, 1.442695
      %v6563 = vpow.pop %v6562
      %v6564 = vmul.f32 %v6540, 1.442695
      %v6565 = vpow.pop %v6564
      %v6566 = vmul.f32 %v6541, 1.442695
      %v6567 = vpow.pop %v6566
      %v6568 = vmul.f32 %v6542, 1.442695
      %v6569 = vpow.pop %v6568
      %v6570 = vmul.f32 %v6543, 1.442695
      %v6571 = vpow.pop %v6570
      %v6572 = vmul.f32 %v6544, 1.442695
      %v6573 = vpow.pop %v6572
      %v6574 = vmul.f32 %v6545, 1.442695
      %v6575 = vpow.pop %v6574
      %v6576 = vmul.f32 %v6546, 1.442695
      %v6577 = vpow.pop %v6576
      %v6578 = vmul.f32 %v6547, 1.442695
      %v6579 = vpow.pop %v6578
      %v6580 = vmul.f32 %v6500, %v6549
      %v6581 = vmul.f32 %v6501, %v6551
      %v6582 = vmul.f32 %v6502, %v6553
      %v6583 = vmul.f32 %v6503, %v6555
      %v6584 = vmul.f32 %v6504, %v6557
      %v6585 = vmul.f32 %v6505, %v6559
      %v6586 = vmul.f32 %v6506, %v6561
      %v6587 = vmul.f32 %v6507, %v6563
      %v6588 = vmul.f32 %v6508, %v6565
      %v6589 = vmul.f32 %v6509, %v6567
      %v6590 = vmul.f32 %v6510, %v6569
      %v6591 = vmul.f32 %v6511, %v6571
      %v6592 = vmul.f32 %v6512, %v6573
      %v6593 = vmul.f32 %v6513, %v6575
      %v6594 = vmul.f32 %v6514, %v6577
      %v6595 = vmul.f32 %v6515, %v6579
      %v6596 = vsub.f32 1.0, %v6580
      %v6597 = vsub.f32 1.0, %v6581
      %v6598 = vsub.f32 1.0, %v6582
      %v6599 = vsub.f32 1.0, %v6583
      %v6600 = vsub.f32 1.0, %v6584
      %v6601 = vsub.f32 1.0, %v6585
      %v6602 = vsub.f32 1.0, %v6586
      %v6603 = vsub.f32 1.0, %v6587
      %v6604 = vsub.f32 1.0, %v6588
      %v6605 = vsub.f32 1.0, %v6589
      %v6606 = vsub.f32 1.0, %v6590
      %v6607 = vsub.f32 1.0, %v6591
      %v6608 = vsub.f32 1.0, %v6592
      %v6609 = vsub.f32 1.0, %v6593
      %v6610 = vsub.f32 1.0, %v6594
      %v6611 = vsub.f32 1.0, %v6595
      %v6612 = vmul.f32 %v6292, %v6596
      %v6613 = vmul.f32 %v6293, %v6597
      %v6614 = vmul.f32 %v6294, %v6598
      %v6615 = vmul.f32 %v6295, %v6599
      %v6616 = vmul.f32 %v6296, %v6600
      %v6617 = vmul.f32 %v6297, %v6601
      %v6618 = vmul.f32 %v6298, %v6602
      %v6619 = vmul.f32 %v6299, %v6603
      %v6620 = vmul.f32 %v6300, %v6604
      %v6621 = vmul.f32 %v6301, %v6605
      %v6622 = vmul.f32 %v6302, %v6606
      %v6623 = vmul.f32 %v6303, %v6607
      %v6624 = vmul.f32 %v6304, %v6608
      %v6625 = vmul.f32 %v6305, %v6609
      %v6626 = vmul.f32 %v6306, %v6610
      %v6627 = vmul.f32 %v6307, %v6611
      %v6628 = vadd.f32 %v6612, 1.0
      %v6629 = vadd.f32 %v6613, 1.0
      %v6630 = vadd.f32 %v6614, 1.0
      %v6631 = vadd.f32 %v6615, 1.0
      %v6632 = vadd.f32 %v6616, 1.0
      %v6633 = vadd.f32 %v6617, 1.0
      %v6634 = vadd.f32 %v6618, 1.0
      %v6635 = vadd.f32 %v6619, 1.0
      %v6636 = vadd.f32 %v6620, 1.0
      %v6637 = vadd.f32 %v6621, 1.0
      %v6638 = vadd.f32 %v6622, 1.0
      %v6639 = vadd.f32 %v6623, 1.0
      %v6640 = vadd.f32 %v6624, 1.0
      %v6641 = vadd.f32 %v6625, 1.0
      %v6642 = vadd.f32 %v6626, 1.0
      %v6643 = vadd.f32 %v6627, 1.0
      %v6644 = vmul.f32 %v6244, %v6628
      %v6645 = vmul.f32 %v6245, %v6629
      %v6646 = vmul.f32 %v6246, %v6630
      %v6647 = vmul.f32 %v6247, %v6631
      %v6648 = vmul.f32 %v6248, %v6632
      %v6649 = vmul.f32 %v6249, %v6633
      %v6650 = vmul.f32 %v6250, %v6634
      %v6651 = vmul.f32 %v6251, %v6635
      %v6652 = vmul.f32 %v6252, %v6636
      %v6653 = vmul.f32 %v6253, %v6637
      %v6654 = vmul.f32 %v6254, %v6638
      %v6655 = vmul.f32 %v6255, %v6639
      %v6656 = vmul.f32 %v6256, %v6640
      %v6657 = vmul.f32 %v6257, %v6641
      %v6658 = vmul.f32 %v6258, %v6642
      %v6659 = vmul.f32 %v6259, %v6643
      %v6660 = vpack.c.bf16 %v6645, %v6644
      %v6661 = vpack.c.bf16 %v6647, %v6646
      %v6662 = vpack.c.bf16 %v6649, %v6648
      %v6663 = vpack.c.bf16 %v6651, %v6650
      %v6664 = vpack.c.bf16 %v6653, %v6652
      %v6665 = vpack.c.bf16 %v6655, %v6654
      %v6666 = vpack.c.bf16 %v6657, %v6656
      %v6667 = vpack.c.bf16 %v6659, %v6658
      %v6668 = vld [vmem:[%s6] sm:$0xf]
      %v6669 = vld [vmem:[%s6 + $0x4] sm:$0xf]
      %v6670 = vld [vmem:[%s6 + $0x8] sm:$0xf]
      %v6671 = vld [vmem:[%s6 + $0xc] sm:$0xf]
      %v6672 = vld [vmem:[%s7] sm:$0x1]
      %v6674 = vlaneseq
      %v6675 = vshrl.u32 %v6674, 7
      %v6676 = vsub.s32 0, %v6675
      %v6677 = vrot.slane %v6672, %v6676
      %v6683 = vunpack.c.l.b16 %v6668
      %v6684 = vunpack.c.l.b16 %v6669
      %v6685 = vunpack.c.l.b16 %v6670
      %v6686 = vunpack.c.l.b16 %v6671
      %v6687 = vpack.c.b16 %v6684, %v6683
      %v6688 = vpack.c.b16 %v6686, %v6685
      %vm6691 = vcmask 261120
      %v6693 = vsel %vm6691, %v6660, 0
      %v6696 = vsel %vm6691, %v6661, 0
      %v6699 = vsel %vm6691, %v6662, 0
      %v6702 = vsel %vm6691, %v6663, 0
      %v6705 = vsel %vm6691, %v6664, 0
      %v6708 = vsel %vm6691, %v6665, 0
      %v6711 = vsel %vm6691, %v6666, 0
      %v6714 = vsel %vm6691, %v6667, 0
      %6716 = vmatprep.subr.bf16.mxu0 0
      %6717 = vmatpush1.bf16.msra.mxu0 %v6687
      %6718 = vmatprep.subr.bf16.mxu0 0
      %6719 = vmatpush1.bf16.msra.mxu0 %v6688
      %6720 = vmatprep.subr.bf16.mxu0 0
      %6721 = vmatpush1.bf16.msra.mxu0 0
      %6722 = vmatprep.subr.bf16.mxu0 0
      %6723 = vmatpush1.bf16.msra.mxu0 0
      %6724 = vmatprep.subr.bf16.mxu0 0
      %6725 = vmatpush1.bf16.msra.mxu0 0
      %6726 = vmatprep.subr.bf16.mxu0 0
      %6727 = vmatpush1.bf16.msra.mxu0 0
      %6728 = vmatprep.subr.bf16.mxu0 0
      %6729 = vmatpush1.bf16.msra.mxu0 0
      %6730 = vmatprep.subr.bf16.mxu0 0
      %6731 = vmatpush1.bf16.msra.mxu0 0
      %6732 = vmatprep.subr.bf16.mxu0 0
      %6733 = vmatpush1.bf16.msra.mxu0 0
      %6734 = vmatprep.subr.bf16.mxu0 0
      %6735 = vmatpush1.bf16.msra.mxu0 0
      %6736 = vmatprep.subr.bf16.mxu0 0
      %6737 = vmatpush1.bf16.msra.mxu0 0
      %6738 = vmatprep.subr.bf16.mxu0 0
      %6739 = vmatpush1.bf16.msra.mxu0 0
      %6740 = vmatprep.subr.bf16.mxu0 0
      %6741 = vmatpush1.bf16.msra.mxu0 0
      %6742 = vmatprep.subr.bf16.mxu0 0
      %6743 = vmatpush1.bf16.msra.mxu0 0
      %6744 = vmatprep.subr.bf16.mxu0 0
      %6745 = vmatpush1.bf16.msra.mxu0 0
      %6746 = vmatprep.subr.bf16.mxu0 0
      %6747 = vmatpush1.bf16.msra.mxu0 0
      %6748 = vmatprep.mubr.bf16.mxu0 0
      %6749 = vmatmul.mubr.bf16.gmra.mrb[0].mxu0 %v6693
      %v6750 = vpop.f32.mrb[0].mxu0
      %v6751 = vadd.f32 %v6677, %v6750
      %v6752 = vpop.f32.mrb[0].mxu0
      %v6753 = vpop.f32.mrb[0].mxu0
      %v6754 = vadd.f32 %v6677, %v6753
      %v6755 = vpop.f32.mrb[0].mxu0
      %6756 = vmatprep.mubr.bf16.mxu0 0
      %6757 = vmatmul.mubr.bf16.gmra.mrb[0].mxu0 %v6696
      %v6758 = vpop.f32.mrb[0].mxu0
      %v6759 = vadd.f32 %v6677, %v6758
      %v6760 = vpop.f32.mrb[0].mxu0
      %v6761 = vpop.f32.mrb[0].mxu0
      %v6762 = vadd.f32 %v6677, %v6761
      %v6763 = vpop.f32.mrb[0].mxu0
      %6764 = vmatprep.mubr.bf16.mxu0 0
      %6765 = vmatmul.mubr.bf16.gmra.mrb[0].mxu0 %v6699
      %v6766 = vpop.f32.mrb[0].mxu0
      %v6767 = vadd.f32 %v6677, %v6766
      %v6768 = vpop.f32.mrb[0].mxu0
      %v6769 = vpop.f32.mrb[0].mxu0
      %v6770 = vadd.f32 %v6677, %v6769
      %v6771 = vpop.f32.mrb[0].mxu0
      %6772 = vmatprep.mubr.bf16.mxu0 0
      %6773 = vmatmul.mubr.bf16.gmra.mrb[0].mxu0 %v6702
      %v6774 = vpop.f32.mrb[0].mxu0
      %v6775 = vadd.f32 %v6677, %v6774
      %v6776 = vpop.f32.mrb[0].mxu0
      %v6777 = vpop.f32.mrb[0].mxu0
      %v6778 = vadd.f32 %v6677, %v6777
      %v6779 = vpop.f32.mrb[0].mxu0
      %6780 = vmatprep.mubr.bf16.mxu0 0
      %6781 = vmatmul.mubr.bf16.gmra.mrb[0].mxu0 %v6705
      %v6782 = vpop.f32.mrb[0].mxu0
      %v6783 = vadd.f32 %v6677, %v6782
      %v6784 = vpop.f32.mrb[0].mxu0
      %v6785 = vpop.f32.mrb[0].mxu0
      %v6786 = vadd.f32 %v6677, %v6785
      %v6787 = vpop.f32.mrb[0].mxu0
      %6788 = vmatprep.mubr.bf16.mxu0 0
      %6789 = vmatmul.mubr.bf16.gmra.mrb[0].mxu0 %v6708
      %v6790 = vpop.f32.mrb[0].mxu0
      %v6791 = vadd.f32 %v6677, %v6790
      %v6792 = vpop.f32.mrb[0].mxu0
      %v6793 = vpop.f32.mrb[0].mxu0
      %v6794 = vadd.f32 %v6677, %v6793
      %v6795 = vpop.f32.mrb[0].mxu0
      %6796 = vmatprep.mubr.bf16.mxu0 0
      %6797 = vmatmul.mubr.bf16.gmra.mrb[0].mxu0 %v6711
      %v6798 = vpop.f32.mrb[0].mxu0
      %v6799 = vadd.f32 %v6677, %v6798
      %v6800 = vpop.f32.mrb[0].mxu0
      %v6801 = vpop.f32.mrb[0].mxu0
      %v6802 = vadd.f32 %v6677, %v6801
      %v6803 = vpop.f32.mrb[0].mxu0
      %6804 = vmatprep.mubr.bf16.mxu0 0
      %6805 = vmatmul.mubr.bf16.gmra.mrb[0].mxu0 %v6714
      %v6806 = vpop.f32.mrb[0].mxu0
      %v6807 = vadd.f32 %v6677, %v6806
      %v6808 = vpop.f32.mrb[0].mxu0
      %v6809 = vpop.f32.mrb[0].mxu0
      %v6810 = vadd.f32 %v6677, %v6809
      %v6811 = vpop.f32.mrb[0].mxu0
      %6812 = vdwg.mxu0
      %6813 = vst.msk [vmem:[%s468] sm:$0xff] %vm517, %v6751
      %6814 = vst.msk [vmem:[%s468 + $0x8] sm:$0xff] %vm517, %v6754
      %6815 = vst.msk [vmem:[%s468 + $0x10] sm:$0xff] %vm517, %v6759
      %6816 = vst.msk [vmem:[%s468 + $0x18] sm:$0xff] %vm517, %v6762
      %6817 = vst.msk [vmem:[%s468 + $0x20] sm:$0xff] %vm517, %v6767
      %6818 = vst.msk [vmem:[%s468 + $0x28] sm:$0xff] %vm517, %v6770
      %6819 = vst.msk [vmem:[%s468 + $0x30] sm:$0xff] %vm517, %v6775
      %6820 = vst.msk [vmem:[%s468 + $0x38] sm:$0xff] %vm517, %v6778
      %6821 = vst.msk [vmem:[%s468 + $0x40] sm:$0xff] %vm517, %v6783
      %6822 = vst.msk [vmem:[%s468 + $0x48] sm:$0xff] %vm517, %v6786
      %6823 = vst.msk [vmem:[%s468 + $0x50] sm:$0xff] %vm517, %v6791
      %6824 = vst.msk [vmem:[%s468 + $0x58] sm:$0xff] %vm517, %v6794
      %6825 = vst.msk [vmem:[%s468 + $0x60] sm:$0xff] %vm517, %v6799
      %6826 = vst.msk [vmem:[%s468 + $0x68] sm:$0xff] %vm517, %v6802
      %6827 = vst.msk [vmem:[%s468 + $0x70] sm:$0xff] %vm517, %v6807
      %6828 = vst.msk [vmem:[%s468 + $0x78] sm:$0xff] %vm517, %v6810
      %s6829 = smul.u32 8, %s24
      %p6830 = scmp.lt.s32.totalorder %s23, 1
      %s6831 = scalar_select %p6830, %s23, 1
      %p6832 = scmp.lt.s32.totalorder %s6829, 15
      %s6833 = scalar_select %p6832, %s6829, 15
      %s6834 = smul.addr %s6833, 2
      %s6835 = smul.addr %s6831, 32
      %s6836 = sadd.s32 %s6834, %s6835
      %s6837 = smul.addr %s6836, 8
      %s6838 = scalar_lea.vmem %s8, %s6837
      // Predicated region
      $region69: #{tpu_custom_call.1} parent=51 // pred_check
        %p6839 = pneg %p252
      $region70: #{tpu_custom_call.1} parent=51 // pred_check_branch
        %6841 = sbr.rel (%p6839) target = $region72
      $region71: #{tpu_custom_call.1} parent=51 // pred_region
        %s6842 = smul.u32 8, %s24
      $region72: #{tpu_custom_call.1} parent=51 // pred_fallthru
        _
    $region52: #{tpu_custom_call.1} parent=5 // pred_fallthru
      _
    %p6843 = scmp.le.s32.totalorder 2, %s14
    // Predicated region
    $region73: #{tpu_custom_call.1} parent=5 // pred_check
      %p6844 = pneg %p6843
    $region74: #{tpu_custom_call.1} parent=5 // pred_check_branch
      %6846 = sbr.rel (%p6844) target = $region76
    $region75: #{tpu_custom_call.1} parent=5 // pred_region
      %s6847 = ssub.s32 %s14, 2
      // Predicated region
      $region77: #{tpu_custom_call.1} parent=75 // pred_check
        %p6848 = pneg %p258
      $region78: #{tpu_custom_call.1} parent=75 // pred_check_branch
        %6850 = sbr.rel (%p6848) target = $region80
      $region79: #{tpu_custom_call.1} parent=75 // pred_region
        %s6851 = smul.u32 8, %s26
        %p6852 = scmp.lt.s32.totalorder %s25, 1
        %s6853 = scalar_select %p6852, %s25, 1
        %p6854 = scmp.lt.s32.totalorder %s6851, 15
        %s6855 = scalar_select %p6854, %s6851, 15
        %s6856 = smul.addr %s6855, 2
        %s6857 = smul.addr %s6853, 32
        %s6858 = sadd.s32 %s6856, %s6857
        %s6859 = smul.addr %s6858, 8
        %s6860 = scalar_lea.vmem %s8, %s6859
      $region80: #{tpu_custom_call.1} parent=75 // pred_fallthru
        _
    $region76: #{tpu_custom_call.1} parent=5 // pred_fallthru
      _
  $region6: #{tpu_custom_call.1} parent=0 // loop_footer
    %s18 = sadd.s32 1, %s14
  $region7: #{tpu_custom_call.1} parent=0 // loop_footer_branch
    %13 = sbr.rel target = $region3
  $region8: #{tpu_custom_call.1} parent=0 // loop_exit
    _

</llo_original>
